<compile_context>
chip_gen: v5e
topology: v5e:2x2
jax: 0.10.0
libtpu: 0.0.40
codegen_flags: <defaults>
</compile_context>

<pallas_src>
import math
from functools import partial

import jax
import jax.numpy as jnp
import numpy as np
from jax.experimental import pallas as pl
from jax.experimental.pallas import tpu as pltpu

LANE = 128
SUBLANE = 8
TIME_CHUNK = 128          # max time steps resident in VMEM per grid step
LINEAR_ROW_TILE = 256     # row tile for the output Linear+ReLU


def _round_up(x, m):
    return (x + m - 1) // m * m


# ------------------------- parameter padding / packing ----------------------


def _pad_gate_cols(w, H, Hp):
    """[rows, 3H] -> [rows, 3Hp]; gate g lives at columns [g*Hp, g*Hp + H)."""
    out = jnp.zeros((w.shape[0], 3 * Hp), w.dtype)
    for g in range(3):
        out = out.at[:, g * Hp:g * Hp + H].set(w[:, g * H:(g + 1) * H])
    return out


def _scatter_rows(w, segments, rows_padded):
    """[rows_real, C] -> [rows_padded, C]; rows placed per (src, len, dst)."""
    out = jnp.zeros((rows_padded, w.shape[1]), w.dtype)
    for s, n, d in segments:
        out = out.at[d:d + n, :].set(w[s:s + n, :])
    return out


def pack_params(params, in_dim, hid_dim):
    """Pad / stack PyTorch-layout params into (8,128)-aligned, per-direction
    stacked shapes.  Gate order (r, z, n) is preserved; each gate occupies a
    128-lane-aligned slab of the 3*Hp axis.  Matmul weights are stored bf16,
    biases f32."""
    H = hid_dim
    Hp = _round_up(H, LANE)
    d0p = _round_up(in_dim, LANE)
    packed = {"gru": [], "Hp": Hp, "d0p": d0p}
    for l, layer in enumerate(params["gru"]):
        if l == 0:
            din_p = d0p
            segs = [(0, in_dim, 0)]
        else:
            din_p = 2 * Hp
            segs = [(0, H, 0), (H, H, Hp)]   # fwd half / bwd half of prev layer
        wih, whh, bih, bhh = [], [], [], []
        for dname in ("fwd", "bwd"):
            w_ih, w_hh, b_ih, b_hh = layer[dname]
            wih.append(_pad_gate_cols(_scatter_rows(w_ih.T, segs, din_p), H, Hp)
                       .astype(jnp.bfloat16))
            whh.append(_pad_gate_cols(_scatter_rows(w_hh.T, [(0, H, 0)], Hp), H, Hp)
                       .astype(jnp.bfloat16))
            bih.append(_pad_gate_cols(b_ih.reshape(1, -1), H, Hp))
            bhh.append(_pad_gate_cols(b_hh.reshape(1, -1), H, Hp))
        packed["gru"].append(dict(
            wih=jnp.stack(wih),     # [2, Din_p, 3Hp] bf16
            whh=jnp.stack(whh),     # [2, Hp,    3Hp] bf16
            bih=jnp.stack(bih),     # [2, 1,     3Hp] f32
            bhh=jnp.stack(bhh)))    # [2, 1,     3Hp] f32
    w_out, b_out = params["out"]
    n_p = _round_up(in_dim, LANE)
    w_out_p = _scatter_rows(w_out.T, [(0, H, 0), (H, H, Hp)], 2 * Hp)  # [2Hp, in_dim]
    w_out_p = jnp.pad(w_out_p, ((0, 0), (0, n_p - in_dim))).astype(jnp.bfloat16)
    b_out_p = jnp.pad(b_out.reshape(1, -1), ((0, 0), (0, n_p - in_dim)))
    packed["out"] = (w_out_p, b_out_p)
    packed["n_p"] = n_p
    return packed


# ----------------------------- Pallas kernels --------------------------------


def _make_gru_layer_kernel(Tc, Bp, unroll):
    def kernel(x_ref, m_ref, wih_ref, whh_ref, bih_ref, bhh_ref,
               out_ref, gi_scr, out_scr, h_scr):
        """One GRU layer; grid = (direction, time_chunk).

        x_ref   [Tc*Bp, Din]  bf16  this direction's time-chunk (rows = time*batch)
        m_ref   [Tc*Bp, 1]    f32   1.0 at valid steps, 0.0 at padding
        wih_ref [1, Din, 3Hp] bf16, whh_ref [1, Hp, 3Hp] bf16
        bih_ref / bhh_ref [1, 1, 3Hp] f32
        out_ref [Tc*Bp, Hp]   bf16  this direction's lane-half of the output
        gi_scr  [Tc*Bp, 3Hp]  f32   per-chunk hoisted input gates
        out_scr [Tc*Bp, Hp]   f32   per-chunk output staging (aligned stores)
        h_scr   [Bp, Hp]      f32   hidden state, carried across time chunks
        """
        d = pl.program_id(0)                  # 0 = forward, 1 = backward
        c = pl.program_id(1)                  # chunk step (index_map reverses for bwd)
        Hp = h_scr.shape[1]

        @pl.when(c == 0)
        def _():
            h_scr[...] = jnp.zeros_like(h_scr)

        # Hoisted input-to-hidden matmul: one [Tc*Bp, Din] x [Din, 3Hp] bf16 MXU
        # matmul per chunk, f32 accumulation.
        gi_scr[...] = jnp.dot(x_ref[...], wih_ref[0],
                              preferred_element_type=jnp.float32) + bih_ref[0]

        whh = whh_ref[0]                      # [Hp, 3Hp] bf16
        bhh = bhh_ref[0]                      # [1, 3Hp]  f32
        rev = d == 1                          # backward: reversed time within chunk

        def step(i, carry):
            t = jnp.where(rev, Tc - 1 - i, i)
            r0 = pl.multiple_of(t * Bp, Bp)
            gi = gi_scr[pl.ds(r0, Bp), :]     # [Bp, 3Hp] f32
            m_t = m_ref[pl.ds(r0, Bp), :]     # [Bp, 1]
            h_prev = h_scr[...]
            gh = jnp.dot(h_prev.astype(jnp.bfloat16), whh,
                         preferred_element_type=jnp.float32) + bhh
            # lane-aligned gate slabs (each Hp = 128 wide)
            r = jax.nn.sigmoid(gi[:, 0:Hp] + gh[:, 0:Hp])
            z = jax.nn.sigmoid(gi[:, Hp:2 * Hp] + gh[:, Hp:2 * Hp])
            n = jnp.tanh(gi[:, 2 * Hp:3 * Hp] + r * gh[:, 2 * Hp:3 * Hp])
            h_cand = n + z * (h_prev - n)                   # == (1-z)*n + z*h_prev
            h_scr[...] = h_prev + m_t * (h_cand - h_prev)   # carry h through padding
            out_scr[pl.ds(r0, Bp), :] = m_t * h_cand        # pad outputs are 0
            return carry

        jax.lax.fori_loop(0, Tc, step, 0, unroll=unroll)

        # Single lane-dense bulk cast+store for the whole chunk.
        out_ref[...] = out_scr[...].astype(out_ref.dtype)

    return kernel


def _linear_relu_kernel(x_ref, w_ref, b_ref, o_ref):
    y = jnp.dot(x_ref[...], w_ref[...],
                preferred_element_type=jnp.float32) + b_ref[...]
    o_ref[...] = jnp.maximum(y, 0.0)


# ------------------------------- wrappers ------------------------------------


def _gru_layer(x2d, m2d, layer_p, Hp, Tc, Bp):
    """x2d [Tp*Bp, Din] bf16 (time-major, row = t*Bp + b); returns
    [Tp*Bp, 2*Hp] bf16 (fwd hidden in lanes [0:Hp), bwd hidden in [Hp:2Hp))."""
    rows, Din = x2d.shape
    Tp = rows // Bp
    nc = Tp // Tc
    cb = Tc * Bp
    unroll = True if Tc <= 16 else 4   # TODO(synk): sweep unroll 2/4/8 per generation.

    def chunk_idx(d, c):
        # forward (d=0): chunk c; backward (d=1): chunk nc-1-c (time reversal)
        return c + d * (nc - 1 - 2 * c)

    # Explicit scoped-VMEM budget from the block sizes (double-buffered blocks
    # + scratch), clamped to stay well inside every generation's physical VMEM.
    block_bytes = (cb * Din * 2 + cb * 4 + cb * Hp * 2
                   + Din * 3 * Hp * 2 + Hp * 3 * Hp * 2 + 4 * 3 * Hp * 4)
    scratch_bytes = cb * 3 * Hp * 4 + cb * Hp * 4 + Bp * Hp * 4
    vmem_limit = int(min(48 * 1024 * 1024,
                         max(16 * 1024 * 1024,
                             2 * block_bytes + scratch_bytes + (2 << 20))))

    return pl.pallas_call(
        _make_gru_layer_kernel(Tc, Bp, unroll),
        out_shape=jax.ShapeDtypeStruct((rows, 2 * Hp), jnp.bfloat16),
        grid=(2, nc),
        in_specs=[
            pl.BlockSpec((cb, Din), lambda d, c: (chunk_idx(d, c), 0)),       # x chunk
            pl.BlockSpec((cb, 1), lambda d, c: (chunk_idx(d, c), 0)),         # mask chunk
            pl.BlockSpec((1, Din, 3 * Hp), lambda d, c: (d, 0, 0)),           # W_ih[dir]
            pl.BlockSpec((1, Hp, 3 * Hp), lambda d, c: (d, 0, 0)),            # W_hh[dir]
            pl.BlockSpec((1, 1, 3 * Hp), lambda d, c: (d, 0, 0)),             # b_ih[dir]
            pl.BlockSpec((1, 1, 3 * Hp), lambda d, c: (d, 0, 0)),             # b_hh[dir]
        ],
        out_specs=pl.BlockSpec((cb, Hp), lambda d, c: (chunk_idx(d, c), d)),  # dir half
        scratch_shapes=[
            pltpu.VMEM((cb, 3 * Hp), jnp.float32),   # hoisted input gates (per chunk)
            pltpu.VMEM((cb, Hp), jnp.float32),       # output staging (per chunk)
            pltpu.VMEM((Bp, Hp), jnp.float32),       # hidden state (carried over chunks)
        ],
        compiler_params=pltpu.CompilerParams(
            # TODO(synk): on v7x verify "parallel" actually shards the direction
            # axis across the 2 TensorCores; if not, switch to pltpu.CORE_PARALLEL
            # (or pl.core_map over a 2-core mesh).
            dimension_semantics=("parallel", "arbitrary"),
            vmem_limit_bytes=vmem_limit),
    )(x2d, m2d, layer_p["wih"], layer_p["whh"], layer_p["bih"], layer_p["bhh"])


def _linear_relu(flat, w_p, b_p):
    rows, D2 = flat.shape
    Np = w_p.shape[1]
    rb = LINEAR_ROW_TILE
    rows_p = _round_up(rows, rb)
    if rows_p != rows:
        flat = jnp.pad(flat, ((0, rows_p - rows), (0, 0)))
    y = pl.pallas_call(
        _linear_relu_kernel,
        out_shape=jax.ShapeDtypeStruct((rows_p, Np), jnp.float32),
        grid=(rows_p // rb,),
        in_specs=[
            pl.BlockSpec((rb, D2), lambda i: (i, 0)),
            pl.BlockSpec((D2, Np), lambda i: (0, 0)),
            pl.BlockSpec((1, Np), lambda i: (0, 0)),
        ],
        out_specs=pl.BlockSpec((rb, Np), lambda i: (i, 0)),
        compiler_params=pltpu.CompilerParams(
            dimension_semantics=("parallel",)),
    )(flat, w_p, b_p)
    return y[:rows]


def _bigru_core(packed, padded_x, mask, in_dim):
    """Full-length forward: [B, T, in_dim] -> [B, T, in_dim] (truncation to the
    batch-max length happens outside jit)."""
    B, T, _ = padded_x.shape
    Hp, d0p, n_p = packed["Hp"], packed["d0p"], packed["n_p"]
    Bp = _round_up(max(B, SUBLANE), SUBLANE)
    Tc = _round_up(T, 2) if T <= TIME_CHUNK else TIME_CHUNK
    Tp = _round_up(T, Tc)

    # One transpose to time-major; zero-pad time (chunking), batch (sublanes),
    # features (lanes); flatten to a 2-D [Tp*Bp, F] slab and cast to bf16.
    x_tm = jnp.transpose(padded_x.astype(jnp.float32), (1, 0, 2))   # [T, B, F]
    x_tm = jnp.pad(x_tm, ((0, Tp - T), (0, Bp - B), (0, d0p - in_dim)))
    x2d = x_tm.reshape(Tp * Bp, d0p).astype(jnp.bfloat16)

    seq_mask = mask[:, :, 0].astype(jnp.float32)                    # [B, T]
    m_tm = jnp.pad(jnp.transpose(seq_mask, (1, 0)), ((0, Tp - T), (0, Bp - B)))
    m2d = m_tm.reshape(Tp * Bp, 1)

    layer_in = x2d
    for layer_p in packed["gru"]:
        layer_in = _gru_layer(layer_in, m2d, layer_p, Hp, Tc, Bp)
        # TODO(synk): nn.GRU inter-layer dropout applies only in training mode;
        # this implements the eval-mode forward (no dropout).
    # TODO(synk): on single-TC chips (v5e/v6e) interleave the fwd/bwd recurrences
    # in one kernel body (two h scratches, back-to-back h@W_hh matmuls) to hide
    # the M=8 matmul + EUP latency; kept as a direction grid here for the v7x
    # 2-TensorCore split.
    # TODO(synk): optionally fuse the output projection into the last GRU layer
    # to skip one HBM round-trip of the [Tp*Bp, 2Hp] activations on v5e/v6e.

    w_out_p, b_out_p = packed["out"]
    y2d = _linear_relu(layer_in, w_out_p, b_out_p)                  # [Tp*Bp, n_p] f32
    y = jnp.transpose(y2d.reshape(Tp, Bp, n_p), (1, 0, 2))          # [Bp, Tp, n_p]
    return y[:B, :T, :in_dim]


def make_bigru_forward(packed, in_dim):
    """Jitted core; packed params are baked in as trace-time constants."""
    return jax.jit(partial(_bigru_core, packed, in_dim=in_dim))


def bigru_forward(core_fn, padded_x, mask):
    """pad_packed_sequence semantics: output truncated to the batch-max length.
    The host sync for the concrete truncation length happens after the main
    computation has been enqueued, so it overlaps with device execution."""
    y_full = core_fn(padded_x, mask)
    t_max = int(jnp.max(jnp.sum(mask[:, :, 0], axis=1)))
    return y_full[:, :t_max, :]


# --------------------------- params & reference ------------------------------


def init_params(key, in_dim, hid_dim, num_layers):
    k = 1.0 / math.sqrt(hid_dim)
    params = {"gru": []}
    for l in range(num_layers):
        din = in_dim if l == 0 else 2 * hid_dim
        layer = {}
        for dname in ("fwd", "bwd"):
            key, k1, k2, k3, k4 = jax.random.split(key, 5)
            w_ih = jax.random.uniform(k1, (3 * hid_dim, din), jnp.float32, -k, k)
            w_hh = jax.random.uniform(k2, (3 * hid_dim, hid_dim), jnp.float32, -k, k)
            b_ih = jax.random.uniform(k3, (3 * hid_dim,), jnp.float32, -k, k)
            b_hh = jax.random.uniform(k4, (3 * hid_dim,), jnp.float32, -k, k)
            layer[dname] = (w_ih, w_hh, b_ih, b_hh)
        params["gru"].append(layer)
    key, k1, k2 = jax.random.split(key, 3)
    kl = 1.0 / math.sqrt(2 * hid_dim)
    w_out = jax.random.uniform(k1, (in_dim, 2 * hid_dim), jnp.float32, -kl, kl)
    b_out = jax.random.uniform(k2, (in_dim,), jnp.float32, -kl, kl)
    params["out"] = (w_out, b_out)
    return params


def _ref_gru_direction(x, seq_mask, w_ih, w_hh, b_ih, b_hh, reverse):
    B, T, _ = x.shape
    H = w_hh.shape[1]
    if reverse:
        x = x[:, ::-1, :]
        seq_mask = seq_mask[:, ::-1]

    def cell(h, inputs):
        x_t, m_t = inputs
        gi = x_t @ w_ih.T + b_ih
        gh = h @ w_hh.T + b_hh
        r = jax.nn.sigmoid(gi[:, :H] + gh[:, :H])
        z = jax.nn.sigmoid(gi[:, H:2 * H] + gh[:, H:2 * H])
        n = jnp.tanh(gi[:, 2 * H:] + r * gh[:, 2 * H:])
        h_new = (1.0 - z) * n + z * h
        m = m_t[:, None]
        h_new = m * h_new + (1.0 - m) * h
        return h_new, h_new * m

    _, outs = jax.lax.scan(cell, jnp.zeros((B, H), jnp.float32),
                           (jnp.transpose(x, (1, 0, 2)),
                            jnp.transpose(seq_mask, (1, 0))))
    outs = jnp.transpose(outs, (1, 0, 2))
    if reverse:
        outs = outs[:, ::-1, :]
    return outs


def ref_forward(params, padded_x, mask):
    seq_mask = mask[:, :, 0].astype(jnp.float32)
    t_max = int(jnp.max(jnp.sum(seq_mask, axis=1)))
    layer_in = padded_x.astype(jnp.float32)
    for layer in params["gru"]:
        fwd = _ref_gru_direction(layer_in, seq_mask, *layer["fwd"], reverse=False)
        bwd = _ref_gru_direction(layer_in, seq_mask, *layer["bwd"], reverse=True)
        layer_in = jnp.concatenate([fwd, bwd], axis=-1)
    unpacked = layer_in[:, :t_max, :]
    w_out, b_out = params["out"]
    return jnp.maximum(unpacked @ w_out.T + b_out, 0.0)


# --------------------------------- main ---------------------------------------


if __name__ == "__main__":
    in_dim, hid_dim, num_layers, dropout = 16, 32, 2, 0.1
    B, T = 2, 8

    key = jax.random.PRNGKey(0)
    key, kp, kx = jax.random.split(key, 3)
    params = init_params(kp, in_dim, hid_dim, num_layers)
    packed = pack_params(params, in_dim, hid_dim)
    padded_x = jax.random.normal(kx, (B, T, in_dim), jnp.float32)

    lengths = [T, 5]                       # variable-length batch
    mask = jnp.zeros((B, T, T), jnp.float32)
    for b, L in enumerate(lengths):
        mask = mask.at[b, :L, :L].set(1.0)

    core_fn = make_bigru_forward(packed, in_dim)
    out = bigru_forward(core_fn, padded_x, mask)
    out = jax.block_until_ready(out)

    ref = ref_forward(params, padded_x, mask)
    assert out.shape == (B, max(lengths), in_dim), out.shape
    # bf16 MXU operands / bf16 inter-layer activations -> looser tolerance than f32.
    np.testing.assert_allclose(np.asarray(out), np.asarray(ref),
                               atol=5e-2, rtol=5e-2)
    print("KERNEL_OK")
</pallas_src>

<mosaic_0001>
module attributes {stable_mosaic.version = 11 : i64} {
  func.func @_linear_relu_kernel(%arg0: i32, %arg1: memref<256x256xbf16, #tpu.memory_space<vmem>>, %arg2: memref<256x128xbf16, #tpu.memory_space<vmem>>, %arg3: memref<1x128xf32, #tpu.memory_space<vmem>>, %arg4: memref<256x128xf32, #tpu.memory_space<vmem>>) attributes {dimension_semantics = [#tpu.dimension_semantics<parallel>], iteration_bounds = array<i64: 1>, scalar_prefetch = 0 : i64, scratch_operands = 0 : i64, tpu.core_type = #tpu.core_type<tc>, window_params = [{transform_indices = @transform_0, window_bounds = array<i64: 256, 256>}, {pipeline_mode = #tpu.pipeline_mode<synchronous>, transform_indices = @transform_1, window_bounds = array<i64: 256, 128>}, {pipeline_mode = #tpu.pipeline_mode<synchronous>, transform_indices = @transform_2, window_bounds = array<i64: 1, 128>}, {transform_indices = @transform_3, window_bounds = array<i64: 256, 128>}]} {
    %c0 = arith.constant 0 : index
    %c0_0 = arith.constant 0 : index
    %0 = vector.load %arg1[%c0, %c0_0] : memref<256x256xbf16, #tpu.memory_space<vmem>>, vector<256x256xbf16>
    %c0_1 = arith.constant 0 : index
    %c0_2 = arith.constant 0 : index
    %1 = vector.load %arg2[%c0_1, %c0_2] : memref<256x128xbf16, #tpu.memory_space<vmem>>, vector<256x128xbf16>
    %cst = arith.constant dense<0.000000e+00> : vector<256x128xf32>
    %2 = tpu.matmul %0, %1, %cst {dimension_numbers = #tpu.dot_dimension_numbers<[1], [0], [0], [1], [0, 0, 1, 1], [], []>} : vector<256x256xbf16>, vector<256x128xbf16>, vector<256x128xf32> -> vector<256x128xf32>
    %c0_3 = arith.constant 0 : index
    %c0_4 = arith.constant 0 : index
    %3 = vector.load %arg3[%c0_3, %c0_4] : memref<1x128xf32, #tpu.memory_space<vmem>>, vector<1x128xf32>
    %4 = vector.broadcast %3 : vector<1x128xf32> to vector<256x128xf32>
    %5 = arith.addf %2, %4 : vector<256x128xf32>
    %cst_5 = arith.constant 0.000000e+00 : f32
    %6 = vector.broadcast %cst_5 : f32 to vector<256x128xf32>
    %7 = arith.maximumf %5, %6 : vector<256x128xf32>
    %c0_6 = arith.constant 0 : index
    %c0_7 = arith.constant 0 : index
    %8 = vector.load %arg4[%c0_6, %c0_7] : memref<256x128xf32, #tpu.memory_space<vmem>>, vector<256x128xf32>
    tpu.vector_store %arg4[%c0_6, %c0_7], %7 {strides = array<i32>} : memref<256x128xf32, #tpu.memory_space<vmem>>, vector<256x128xf32>,
    return
  }
  func.func @transform_0(%arg0: i32) -> (i32, i32) {
    %c0_i32 = arith.constant 0 : i32
    %c0_i32_0 = arith.constant 0 : i32
    return %arg0, %c0_i32 : i32, i32
  }
  func.func @transform_1(%arg0: i32) -> (i32, i32) {
    %c0_i32 = arith.constant 0 : i32
    %c0_i32_0 = arith.constant 0 : i32
    %c0_i32_1 = arith.constant 0 : i32
    return %c0_i32, %c0_i32_0 : i32, i32
  }
  func.func @transform_2(%arg0: i32) -> (i32, i32) {
    %c0_i32 = arith.constant 0 : i32
    %c0_i32_0 = arith.constant 0 : i32
    %c0_i32_1 = arith.constant 0 : i32
    return %c0_i32, %c0_i32_0 : i32, i32
  }
  func.func @transform_3(%arg0: i32) -> (i32, i32) {
    %c0_i32 = arith.constant 0 : i32
    %c0_i32_0 = arith.constant 0 : i32
    return %arg0, %c0_i32 : i32, i32
  }
}

module attributes {stable_mosaic.version = 11 : i64} {
  func.func @kernel(%arg0: i32, %arg1: i32, %arg2: memref<64x256xbf16, #tpu.memory_space<vmem>>, %arg3: memref<64x1xf32, #tpu.memory_space<vmem>>, %arg4: memref<1x256x384xbf16, #tpu.memory_space<vmem>>, %arg5: memref<1x128x384xbf16, #tpu.memory_space<vmem>>, %arg6: memref<1x1x384xf32, #tpu.memory_space<vmem>>, %arg7: memref<1x1x384xf32, #tpu.memory_space<vmem>>, %arg8: memref<64x128xbf16, #tpu.memory_space<vmem>>, %arg9: memref<64x384xf32, #tpu.memory_space<vmem>>, %arg10: memref<64x128xf32, #tpu.memory_space<vmem>>, %arg11: memref<8x128xf32, #tpu.memory_space<vmem>>) attributes {dimension_semantics = [#tpu.dimension_semantics<parallel>, #tpu.dimension_semantics<arbitrary>], iteration_bounds = array<i64: 2, 1>, scalar_prefetch = 0 : i64, scratch_operands = 3 : i64, tpu.core_type = #tpu.core_type<tc>, window_params = [{transform_indices = @transform_0, window_bounds = array<i64: 64, 256>}, {transform_indices = @transform_1, window_bounds = array<i64: 64, 1>}, {transform_indices = @transform_2, window_bounds = array<i64: 1, 256, 384>}, {transform_indices = @transform_3, window_bounds = array<i64: 1, 128, 384>}, {transform_indices = @transform_4, window_bounds = array<i64: 1, 1, 384>}, {transform_indices = @transform_5, window_bounds = array<i64: 1, 1, 384>}, {transform_indices = @transform_6, window_bounds = array<i64: 64, 128>}]} {
    %c0_i32 = arith.constant 0 : i32
    %0 = arith.cmpi eq, %arg1, %c0_i32 : i32
    %1 = arith.extui %0 : i1 to i32
    %c0_i32_0 = arith.constant 0 : i32
    %2 = arith.cmpi ne, %1, %c0_i32_0 : i32
    scf.if %2 {
      %cst_118 = arith.constant 0.000000e+00 : f32
      %388 = vector.broadcast %cst_118 : f32 to vector<8x128xf32>
      %c0_119 = arith.constant 0 : index
      %c0_120 = arith.constant 0 : index
      %389 = vector.load %arg11[%c0_119, %c0_120] : memref<8x128xf32, #tpu.memory_space<vmem>>, vector<8x128xf32>
      tpu.vector_store %arg11[%c0_119, %c0_120], %388 {strides = array<i32>} : memref<8x128xf32, #tpu.memory_space<vmem>>, vector<8x128xf32>,
    } else {
    }
    %c0 = arith.constant 0 : index
    %c0_1 = arith.constant 0 : index
    %3 = vector.load %arg2[%c0, %c0_1] : memref<64x256xbf16, #tpu.memory_space<vmem>>, vector<64x256xbf16>
    %c0_2 = arith.constant 0 : index
    %c0_3 = arith.constant 0 : index
    %c0_4 = arith.constant 0 : index
    %4 = vector.load %arg4[%c0_2, %c0_3, %c0_4] : memref<1x256x384xbf16, #tpu.memory_space<vmem>>, vector<1x256x384xbf16>
    %5 = vector.shape_cast %4 : vector<1x256x384xbf16> to vector<256x384xbf16>
    %cst = arith.constant dense<0.000000e+00> : vector<64x384xf32>
    %6 = tpu.matmul %3, %5, %cst {dimension_numbers = #tpu.dot_dimension_numbers<[1], [0], [0], [1], [0, 0, 1, 1], [], []>} : vector<64x256xbf16>, vector<256x384xbf16>, vector<64x384xf32> -> vector<64x384xf32>
    %c0_5 = arith.constant 0 : index
    %c0_6 = arith.constant 0 : index
    %c0_7 = arith.constant 0 : index
    %7 = vector.load %arg6[%c0_5, %c0_6, %c0_7] : memref<1x1x384xf32, #tpu.memory_space<vmem>>, vector<1x1x384xf32>
    %8 = vector.shape_cast %7 : vector<1x1x384xf32> to vector<1x384xf32>
    %9 = vector.broadcast %8 : vector<1x384xf32> to vector<64x384xf32>
    %10 = arith.addf %6, %9 : vector<64x384xf32>
    %c0_8 = arith.constant 0 : index
    %c0_9 = arith.constant 0 : index
    %11 = vector.load %arg9[%c0_8, %c0_9] : memref<64x384xf32, #tpu.memory_space<vmem>>, vector<64x384xf32>
    tpu.vector_store %arg9[%c0_8, %c0_9], %10 {strides = array<i32>} : memref<64x384xf32, #tpu.memory_space<vmem>>, vector<64x384xf32>,
    %c0_10 = arith.constant 0 : index
    %c0_11 = arith.constant 0 : index
    %c0_12 = arith.constant 0 : index
    %12 = vector.load %arg5[%c0_10, %c0_11, %c0_12] : memref<1x128x384xbf16, #tpu.memory_space<vmem>>, vector<1x128x384xbf16>
    %13 = vector.shape_cast %12 : vector<1x128x384xbf16> to vector<128x384xbf16>
    %c0_13 = arith.constant 0 : index
    %c0_14 = arith.constant 0 : index
    %c0_15 = arith.constant 0 : index
    %14 = vector.load %arg7[%c0_13, %c0_14, %c0_15] : memref<1x1x384xf32, #tpu.memory_space<vmem>>, vector<1x1x384xf32>
    %15 = vector.shape_cast %14 : vector<1x1x384xf32> to vector<1x384xf32>
    %c1_i32 = arith.constant 1 : i32
    %16 = arith.cmpi eq, %arg0, %c1_i32 : i32
    %c0_i32_16 = arith.constant 0 : i32
    %c7_i32 = arith.constant 7 : i32
    %17 = arith.subi %c7_i32, %c0_i32_16 : i32
    %18 = arith.select %16, %17, %c0_i32_16 : i32
    %c8_i32 = arith.constant 8 : i32
    %19 = arith.muli %18, %c8_i32 : i32
    %20 = tpu.assume_multiple %19, 8 : i32
    %21 = arith.index_cast %20 : i32 to index
    %c0_17 = arith.constant 0 : index
    %22 = vector.load %arg9[%21, %c0_17] : memref<64x384xf32, #tpu.memory_space<vmem>>, vector<8x384xf32>
    %23 = arith.index_cast %20 : i32 to index
    %c0_18 = arith.constant 0 : index
    %24 = vector.load %arg3[%23, %c0_18] : memref<64x1xf32, #tpu.memory_space<vmem>>, vector<8x1xf32>
    %c0_19 = arith.constant 0 : index
    %c0_20 = arith.constant 0 : index
    %25 = vector.load %arg11[%c0_19, %c0_20] : memref<8x128xf32, #tpu.memory_space<vmem>>, vector<8x128xf32>
    %26 = arith.truncf %25 : vector<8x128xf32> to vector<8x128xbf16>
    %cst_21 = arith.constant dense<0.000000e+00> : vector<8x384xf32>
    %27 = tpu.matmul %26, %13, %cst_21 {dimension_numbers = #tpu.dot_dimension_numbers<[1], [0], [0], [1], [0, 0, 1, 1], [], []>} : vector<8x128xbf16>, vector<128x384xbf16>, vector<8x384xf32> -> vector<8x384xf32>
    %28 = vector.broadcast %15 : vector<1x384xf32> to vector<8x384xf32>
    %29 = arith.addf %27, %28 : vector<8x384xf32>
    %30 = vector.extract_strided_slice %22 {offsets = [0, 0], sizes = [8, 128], strides = [1, 1]} : vector<8x384xf32> to vector<8x128xf32>
    %31 = vector.extract_strided_slice %29 {offsets = [0, 0], sizes = [8, 128], strides = [1, 1]} : vector<8x384xf32> to vector<8x128xf32>
    %32 = arith.addf %30, %31 : vector<8x128xf32>
    %33 = arith.negf %32 : vector<8x128xf32>
    %34 = math.exp %33 : vector<8x128xf32>
    %cst_22 = arith.constant 1.000000e+00 : f32
    %35 = vector.broadcast %cst_22 : f32 to vector<8x128xf32>
    %36 = arith.addf %35, %34 : vector<8x128xf32>
    %37 = arith.divf %35, %36 : vector<8x128xf32>
    %38 = vector.extract_strided_slice %22 {offsets = [0, 128], sizes = [8, 128], strides = [1, 1]} : vector<8x384xf32> to vector<8x128xf32>
    %39 = vector.extract_strided_slice %29 {offsets = [0, 128], sizes = [8, 128], strides = [1, 1]} : vector<8x384xf32> to vector<8x128xf32>
    %40 = arith.addf %38, %39 : vector<8x128xf32>
    %41 = arith.negf %40 : vector<8x128xf32>
    %42 = math.exp %41 : vector<8x128xf32>
    %cst_23 = arith.constant 1.000000e+00 : f32
    %43 = vector.broadcast %cst_23 : f32 to vector<8x128xf32>
    %44 = arith.addf %43, %42 : vector<8x128xf32>
    %45 = arith.divf %43, %44 : vector<8x128xf32>
    %46 = vector.extract_strided_slice %22 {offsets = [0, 256], sizes = [8, 128], strides = [1, 1]} : vector<8x384xf32> to vector<8x128xf32>
    %47 = vector.extract_strided_slice %29 {offsets = [0, 256], sizes = [8, 128], strides = [1, 1]} : vector<8x384xf32> to vector<8x128xf32>
    %48 = arith.mulf %37, %47 : vector<8x128xf32>
    %49 = arith.addf %46, %48 : vector<8x128xf32>
    %50 = math.tanh %49 : vector<8x128xf32>
    %51 = arith.subf %25, %50 : vector<8x128xf32>
    %52 = arith.mulf %45, %51 : vector<8x128xf32>
    %53 = arith.addf %50, %52 : vector<8x128xf32>
    %54 = arith.subf %53, %25 : vector<8x128xf32>
    %55 = vector.broadcast %24 : vector<8x1xf32> to vector<8x128xf32>
    %56 = arith.mulf %55, %54 : vector<8x128xf32>
    %57 = arith.addf %25, %56 : vector<8x128xf32>
    %c0_24 = arith.constant 0 : index
    %c0_25 = arith.constant 0 : index
    %58 = vector.load %arg11[%c0_24, %c0_25] : memref<8x128xf32, #tpu.memory_space<vmem>>, vector<8x128xf32>
    tpu.vector_store %arg11[%c0_24, %c0_25], %57 {strides = array<i32>} : memref<8x128xf32, #tpu.memory_space<vmem>>, vector<8x128xf32>,
    %59 = vector.broadcast %24 : vector<8x1xf32> to vector<8x128xf32>
    %60 = arith.mulf %59, %53 : vector<8x128xf32>
    %61 = arith.index_cast %20 : i32 to index
    %c0_26 = arith.constant 0 : index
    %62 = vector.load %arg10[%61, %c0_26] : memref<64x128xf32, #tpu.memory_space<vmem>>, vector<8x128xf32>
    tpu.vector_store %arg10[%61, %c0_26], %60 {strides = array<i32>} : memref<64x128xf32, #tpu.memory_space<vmem>>, vector<8x128xf32>,
    %c1_i32_27 = arith.constant 1 : i32
    %c7_i32_28 = arith.constant 7 : i32
    %63 = arith.subi %c7_i32_28, %c1_i32_27 : i32
    %64 = arith.select %16, %63, %c1_i32_27 : i32
    %c8_i32_29 = arith.constant 8 : i32
    %65 = arith.muli %64, %c8_i32_29 : i32
    %66 = tpu.assume_multiple %65, 8 : i32
    %67 = arith.index_cast %66 : i32 to index
    %c0_30 = arith.constant 0 : index
    %68 = vector.load %arg9[%67, %c0_30] : memref<64x384xf32, #tpu.memory_space<vmem>>, vector<8x384xf32>
    %69 = arith.index_cast %66 : i32 to index
    %c0_31 = arith.constant 0 : index
    %70 = vector.load %arg3[%69, %c0_31] : memref<64x1xf32, #tpu.memory_space<vmem>>, vector<8x1xf32>
    %c0_32 = arith.constant 0 : index
    %c0_33 = arith.constant 0 : index
    %71 = vector.load %arg11[%c0_32, %c0_33] : memref<8x128xf32, #tpu.memory_space<vmem>>, vector<8x128xf32>
    %72 = arith.truncf %71 : vector<8x128xf32> to vector<8x128xbf16>
    %cst_34 = arith.constant dense<0.000000e+00> : vector<8x384xf32>
    %73 = tpu.matmul %72, %13, %cst_34 {dimension_numbers = #tpu.dot_dimension_numbers<[1], [0], [0], [1], [0, 0, 1, 1], [], []>} : vector<8x128xbf16>, vector<128x384xbf16>, vector<8x384xf32> -> vector<8x384xf32>
    %74 = vector.broadcast %15 : vector<1x384xf32> to vector<8x384xf32>
    %75 = arith.addf %73, %74 : vector<8x384xf32>
    %76 = vector.extract_strided_slice %68 {offsets = [0, 0], sizes = [8, 128], strides = [1, 1]} : vector<8x384xf32> to vector<8x128xf32>
    %77 = vector.extract_strided_slice %75 {offsets = [0, 0], sizes = [8, 128], strides = [1, 1]} : vector<8x384xf32> to vector<8x128xf32>
    %78 = arith.addf %76, %77 : vector<8x128xf32>
    %79 = arith.negf %78 : vector<8x128xf32>
    %80 = math.exp %79 : vector<8x128xf32>
    %cst_35 = arith.constant 1.000000e+00 : f32
    %81 = vector.broadcast %cst_35 : f32 to vector<8x128xf32>
    %82 = arith.addf %81, %80 : vector<8x128xf32>
    %83 = arith.divf %81, %82 : vector<8x128xf32>
    %84 = vector.extract_strided_slice %68 {offsets = [0, 128], sizes = [8, 128], strides = [1, 1]} : vector<8x384xf32> to vector<8x128xf32>
    %85 = vector.extract_strided_slice %75 {offsets = [0, 128], sizes = [8, 128], strides = [1, 1]} : vector<8x384xf32> to vector<8x128xf32>
    %86 = arith.addf %84, %85 : vector<8x128xf32>
    %87 = arith.negf %86 : vector<8x128xf32>
    %88 = math.exp %87 : vector<8x128xf32>
    %cst_36 = arith.constant 1.000000e+00 : f32
    %89 = vector.broadcast %cst_36 : f32 to vector<8x128xf32>
    %90 = arith.addf %89, %88 : vector<8x128xf32>
    %91 = arith.divf %89, %90 : vector<8x128xf32>
    %92 = vector.extract_strided_slice %68 {offsets = [0, 256], sizes = [8, 128], strides = [1, 1]} : vector<8x384xf32> to vector<8x128xf32>
    %93 = vector.extract_strided_slice %75 {offsets = [0, 256], sizes = [8, 128], strides = [1, 1]} : vector<8x384xf32> to vector<8x128xf32>
    %94 = arith.mulf %83, %93 : vector<8x128xf32>
    %95 = arith.addf %92, %94 : vector<8x128xf32>
    %96 = math.tanh %95 : vector<8x128xf32>
    %97 = arith.subf %71, %96 : vector<8x128xf32>
    %98 = arith.mulf %91, %97 : vector<8x128xf32>
    %99 = arith.addf %96, %98 : vector<8x128xf32>
    %100 = arith.subf %99, %71 : vector<8x128xf32>
    %101 = vector.broadcast %70 : vector<8x1xf32> to vector<8x128xf32>
    %102 = arith.mulf %101, %100 : vector<8x128xf32>
    %103 = arith.addf %71, %102 : vector<8x128xf32>
    %c0_37 = arith.constant 0 : index
    %c0_38 = arith.constant 0 : index
    %104 = vector.load %arg11[%c0_37, %c0_38] : memref<8x128xf32, #tpu.memory_space<vmem>>, vector<8x128xf32>
    tpu.vector_store %arg11[%c0_37, %c0_38], %103 {strides = array<i32>} : memref<8x128xf32, #tpu.memory_space<vmem>>, vector<8x128xf32>,
    %105 = vector.broadcast %70 : vector<8x1xf32> to vector<8x128xf32>
    %106 = arith.mulf %105, %99 : vector<8x128xf32>
    %107 = arith.index_cast %66 : i32 to index
    %c0_39 = arith.constant 0 : index
    %108 = vector.load %arg10[%107, %c0_39] : memref<64x128xf32, #tpu.memory_space<vmem>>, vector<8x128xf32>
    tpu.vector_store %arg10[%107, %c0_39], %106 {strides = array<i32>} : memref<64x128xf32, #tpu.memory_space<vmem>>, vector<8x128xf32>,
    %c2_i32 = arith.constant 2 : i32
    %c7_i32_40 = arith.constant 7 : i32
    %109 = arith.subi %c7_i32_40, %c2_i32 : i32
    %110 = arith.select %16, %109, %c2_i32 : i32
    %c8_i32_41 = arith.constant 8 : i32
    %111 = arith.muli %110, %c8_i32_41 : i32
    %112 = tpu.assume_multiple %111, 8 : i32
    %113 = arith.index_cast %112 : i32 to index
    %c0_42 = arith.constant 0 : index
    %114 = vector.load %arg9[%113, %c0_42] : memref<64x384xf32, #tpu.memory_space<vmem>>, vector<8x384xf32>
    %115 = arith.index_cast %112 : i32 to index
    %c0_43 = arith.constant 0 : index
    %116 = vector.load %arg3[%115, %c0_43] : memref<64x1xf32, #tpu.memory_space<vmem>>, vector<8x1xf32>
    %c0_44 = arith.constant 0 : index
    %c0_45 = arith.constant 0 : index
    %117 = vector.load %arg11[%c0_44, %c0_45] : memref<8x128xf32, #tpu.memory_space<vmem>>, vector<8x128xf32>
    %118 = arith.truncf %117 : vector<8x128xf32> to vector<8x128xbf16>
    %cst_46 = arith.constant dense<0.000000e+00> : vector<8x384xf32>
    %119 = tpu.matmul %118, %13, %cst_46 {dimension_numbers = #tpu.dot_dimension_numbers<[1], [0], [0], [1], [0, 0, 1, 1], [], []>} : vector<8x128xbf16>, vector<128x384xbf16>, vector<8x384xf32> -> vector<8x384xf32>
    %120 = vector.broadcast %15 : vector<1x384xf32> to vector<8x384xf32>
    %121 = arith.addf %119, %120 : vector<8x384xf32>
    %122 = vector.extract_strided_slice %114 {offsets = [0, 0], sizes = [8, 128], strides = [1, 1]} : vector<8x384xf32> to vector<8x128xf32>
    %123 = vector.extract_strided_slice %121 {offsets = [0, 0], sizes = [8, 128], strides = [1, 1]} : vector<8x384xf32> to vector<8x128xf32>
    %124 = arith.addf %122, %123 : vector<8x128xf32>
    %125 = arith.negf %124 : vector<8x128xf32>
    %126 = math.exp %125 : vector<8x128xf32>
    %cst_47 = arith.constant 1.000000e+00 : f32
    %127 = vector.broadcast %cst_47 : f32 to vector<8x128xf32>
    %128 = arith.addf %127, %126 : vector<8x128xf32>
    %129 = arith.divf %127, %128 : vector<8x128xf32>
    %130 = vector.extract_strided_slice %114 {offsets = [0, 128], sizes = [8, 128], strides = [1, 1]} : vector<8x384xf32> to vector<8x128xf32>
    %131 = vector.extract_strided_slice %121 {offsets = [0, 128], sizes = [8, 128], strides = [1, 1]} : vector<8x384xf32> to vector<8x128xf32>
    %132 = arith.addf %130, %131 : vector<8x128xf32>
    %133 = arith.negf %132 : vector<8x128xf32>
    %134 = math.exp %133 : vector<8x128xf32>
    %cst_48 = arith.constant 1.000000e+00 : f32
    %135 = vector.broadcast %cst_48 : f32 to vector<8x128xf32>
    %136 = arith.addf %135, %134 : vector<8x128xf32>
    %137 = arith.divf %135, %136 : vector<8x128xf32>
    %138 = vector.extract_strided_slice %114 {offsets = [0, 256], sizes = [8, 128], strides = [1, 1]} : vector<8x384xf32> to vector<8x128xf32>
    %139 = vector.extract_strided_slice %121 {offsets = [0, 256], sizes = [8, 128], strides = [1, 1]} : vector<8x384xf32> to vector<8x128xf32>
    %140 = arith.mulf %129, %139 : vector<8x128xf32>
    %141 = arith.addf %138, %140 : vector<8x128xf32>
    %142 = math.tanh %141 : vector<8x128xf32>
    %143 = arith.subf %117, %142 : vector<8x128xf32>
    %144 = arith.mulf %137, %143 : vector<8x128xf32>
    %145 = arith.addf %142, %144 : vector<8x128xf32>
    %146 = arith.subf %145, %117 : vector<8x128xf32>
    %147 = vector.broadcast %116 : vector<8x1xf32> to vector<8x128xf32>
    %148 = arith.mulf %147, %146 : vector<8x128xf32>
    %149 = arith.addf %117, %148 : vector<8x128xf32>
    %c0_49 = arith.constant 0 : index
    %c0_50 = arith.constant 0 : index
    %150 = vector.load %arg11[%c0_49, %c0_50] : memref<8x128xf32, #tpu.memory_space<vmem>>, vector<8x128xf32>
    tpu.vector_store %arg11[%c0_49, %c0_50], %149 {strides = array<i32>} : memref<8x128xf32, #tpu.memory_space<vmem>>, vector<8x128xf32>,
    %151 = vector.broadcast %116 : vector<8x1xf32> to vector<8x128xf32>
    %152 = arith.mulf %151, %145 : vector<8x128xf32>
    %153 = arith.index_cast %112 : i32 to index
    %c0_51 = arith.constant 0 : index
    %154 = vector.load %arg10[%153, %c0_51] : memref<64x128xf32, #tpu.memory_space<vmem>>, vector<8x128xf32>
    tpu.vector_store %arg10[%153, %c0_51], %152 {strides = array<i32>} : memref<64x128xf32, #tpu.memory_space<vmem>>, vector<8x128xf32>,
    %c3_i32 = arith.constant 3 : i32
    %c7_i32_52 = arith.constant 7 : i32
    %155 = arith.subi %c7_i32_52, %c3_i32 : i32
    %156 = arith.select %16, %155, %c3_i32 : i32
    %c8_i32_53 = arith.constant 8 : i32
    %157 = arith.muli %156, %c8_i32_53 : i32
    %158 = tpu.assume_multiple %157, 8 : i32
    %159 = arith.index_cast %158 : i32 to index
    %c0_54 = arith.constant 0 : index
    %160 = vector.load %arg9[%159, %c0_54] : memref<64x384xf32, #tpu.memory_space<vmem>>, vector<8x384xf32>
    %161 = arith.index_cast %158 : i32 to index
    %c0_55 = arith.constant 0 : index
    %162 = vector.load %arg3[%161, %c0_55] : memref<64x1xf32, #tpu.memory_space<vmem>>, vector<8x1xf32>
    %c0_56 = arith.constant 0 : index
    %c0_57 = arith.constant 0 : index
    %163 = vector.load %arg11[%c0_56, %c0_57] : memref<8x128xf32, #tpu.memory_space<vmem>>, vector<8x128xf32>
    %164 = arith.truncf %163 : vector<8x128xf32> to vector<8x128xbf16>
    %cst_58 = arith.constant dense<0.000000e+00> : vector<8x384xf32>
    %165 = tpu.matmul %164, %13, %cst_58 {dimension_numbers = #tpu.dot_dimension_numbers<[1], [0], [0], [1], [0, 0, 1, 1], [], []>} : vector<8x128xbf16>, vector<128x384xbf16>, vector<8x384xf32> -> vector<8x384xf32>
    %166 = vector.broadcast %15 : vector<1x384xf32> to vector<8x384xf32>
    %167 = arith.addf %165, %166 : vector<8x384xf32>
    %168 = vector.extract_strided_slice %160 {offsets = [0, 0], sizes = [8, 128], strides = [1, 1]} : vector<8x384xf32> to vector<8x128xf32>
    %169 = vector.extract_strided_slice %167 {offsets = [0, 0], sizes = [8, 128], strides = [1, 1]} : vector<8x384xf32> to vector<8x128xf32>
    %170 = arith.addf %168, %169 : vector<8x128xf32>
    %171 = arith.negf %170 : vector<8x128xf32>
    %172 = math.exp %171 : vector<8x128xf32>
    %cst_59 = arith.constant 1.000000e+00 : f32
    %173 = vector.broadcast %cst_59 : f32 to vector<8x128xf32>
    %174 = arith.addf %173, %172 : vector<8x128xf32>
    %175 = arith.divf %173, %174 : vector<8x128xf32>
    %176 = vector.extract_strided_slice %160 {offsets = [0, 128], sizes = [8, 128], strides = [1, 1]} : vector<8x384xf32> to vector<8x128xf32>
    %177 = vector.extract_strided_slice %167 {offsets = [0, 128], sizes = [8, 128], strides = [1, 1]} : vector<8x384xf32> to vector<8x128xf32>
    %178 = arith.addf %176, %177 : vector<8x128xf32>
    %179 = arith.negf %178 : vector<8x128xf32>
    %180 = math.exp %179 : vector<8x128xf32>
    %cst_60 = arith.constant 1.000000e+00 : f32
    %181 = vector.broadcast %cst_60 : f32 to vector<8x128xf32>
    %182 = arith.addf %181, %180 : vector<8x128xf32>
    %183 = arith.divf %181, %182 : vector<8x128xf32>
    %184 = vector.extract_strided_slice %160 {offsets = [0, 256], sizes = [8, 128], strides = [1, 1]} : vector<8x384xf32> to vector<8x128xf32>
    %185 = vector.extract_strided_slice %167 {offsets = [0, 256], sizes = [8, 128], strides = [1, 1]} : vector<8x384xf32> to vector<8x128xf32>
    %186 = arith.mulf %175, %185 : vector<8x128xf32>
    %187 = arith.addf %184, %186 : vector<8x128xf32>
    %188 = math.tanh %187 : vector<8x128xf32>
    %189 = arith.subf %163, %188 : vector<8x128xf32>
    %190 = arith.mulf %183, %189 : vector<8x128xf32>
    %191 = arith.addf %188, %190 : vector<8x128xf32>
    %192 = arith.subf %191, %163 : vector<8x128xf32>
    %193 = vector.broadcast %162 : vector<8x1xf32> to vector<8x128xf32>
    %194 = arith.mulf %193, %192 : vector<8x128xf32>
    %195 = arith.addf %163, %194 : vector<8x128xf32>
    %c0_61 = arith.constant 0 : index
    %c0_62 = arith.constant 0 : index
    %196 = vector.load %arg11[%c0_61, %c0_62] : memref<8x128xf32, #tpu.memory_space<vmem>>, vector<8x128xf32>
    tpu.vector_store %arg11[%c0_61, %c0_62], %195 {strides = array<i32>} : memref<8x128xf32, #tpu.memory_space<vmem>>, vector<8x128xf32>,
    %197 = vector.broadcast %162 : vector<8x1xf32> to vector<8x128xf32>
    %198 = arith.mulf %197, %191 : vector<8x128xf32>
    %199 = arith.index_cast %158 : i32 to index
    %c0_63 = arith.constant 0 : index
    %200 = vector.load %arg10[%199, %c0_63] : memref<64x128xf32, #tpu.memory_space<vmem>>, vector<8x128xf32>
    tpu.vector_store %arg10[%199, %c0_63], %198 {strides = array<i32>} : memref<64x128xf32, #tpu.memory_space<vmem>>, vector<8x128xf32>,
    %c4_i32 = arith.constant 4 : i32
    %c7_i32_64 = arith.constant 7 : i32
    %201 = arith.subi %c7_i32_64, %c4_i32 : i32
    %202 = arith.select %16, %201, %c4_i32 : i32
    %c8_i32_65 = arith.constant 8 : i32
    %203 = arith.muli %202, %c8_i32_65 : i32
    %204 = tpu.assume_multiple %203, 8 : i32
    %205 = arith.index_cast %204 : i32 to index
    %c0_66 = arith.constant 0 : index
    %206 = vector.load %arg9[%205, %c0_66] : memref<64x384xf32, #tpu.memory_space<vmem>>, vector<8x384xf32>
    %207 = arith.index_cast %204 : i32 to index
    %c0_67 = arith.constant 0 : index
    %208 = vector.load %arg3[%207, %c0_67] : memref<64x1xf32, #tpu.memory_space<vmem>>, vector<8x1xf32>
    %c0_68 = arith.constant 0 : index
    %c0_69 = arith.constant 0 : index
    %209 = vector.load %arg11[%c0_68, %c0_69] : memref<8x128xf32, #tpu.memory_space<vmem>>, vector<8x128xf32>
    %210 = arith.truncf %209 : vector<8x128xf32> to vector<8x128xbf16>
    %cst_70 = arith.constant dense<0.000000e+00> : vector<8x384xf32>
    %211 = tpu.matmul %210, %13, %cst_70 {dimension_numbers = #tpu.dot_dimension_numbers<[1], [0], [0], [1], [0, 0, 1, 1], [], []>} : vector<8x128xbf16>, vector<128x384xbf16>, vector<8x384xf32> -> vector<8x384xf32>
    %212 = vector.broadcast %15 : vector<1x384xf32> to vector<8x384xf32>
    %213 = arith.addf %211, %212 : vector<8x384xf32>
    %214 = vector.extract_strided_slice %206 {offsets = [0, 0], sizes = [8, 128], strides = [1, 1]} : vector<8x384xf32> to vector<8x128xf32>
    %215 = vector.extract_strided_slice %213 {offsets = [0, 0], sizes = [8, 128], strides = [1, 1]} : vector<8x384xf32> to vector<8x128xf32>
    %216 = arith.addf %214, %215 : vector<8x128xf32>
    %217 = arith.negf %216 : vector<8x128xf32>
    %218 = math.exp %217 : vector<8x128xf32>
    %cst_71 = arith.constant 1.000000e+00 : f32
    %219 = vector.broadcast %cst_71 : f32 to vector<8x128xf32>
    %220 = arith.addf %219, %218 : vector<8x128xf32>
    %221 = arith.divf %219, %220 : vector<8x128xf32>
    %222 = vector.extract_strided_slice %206 {offsets = [0, 128], sizes = [8, 128], strides = [1, 1]} : vector<8x384xf32> to vector<8x128xf32>
    %223 = vector.extract_strided_slice %213 {offsets = [0, 128], sizes = [8, 128], strides = [1, 1]} : vector<8x384xf32> to vector<8x128xf32>
    %224 = arith.addf %222, %223 : vector<8x128xf32>
    %225 = arith.negf %224 : vector<8x128xf32>
    %226 = math.exp %225 : vector<8x128xf32>
    %cst_72 = arith.constant 1.000000e+00 : f32
    %227 = vector.broadcast %cst_72 : f32 to vector<8x128xf32>
    %228 = arith.addf %227, %226 : vector<8x128xf32>
    %229 = arith.divf %227, %228 : vector<8x128xf32>
    %230 = vector.extract_strided_slice %206 {offsets = [0, 256], sizes = [8, 128], strides = [1, 1]} : vector<8x384xf32> to vector<8x128xf32>
    %231 = vector.extract_strided_slice %213 {offsets = [0, 256], sizes = [8, 128], strides = [1, 1]} : vector<8x384xf32> to vector<8x128xf32>
    %232 = arith.mulf %221, %231 : vector<8x128xf32>
    %233 = arith.addf %230, %232 : vector<8x128xf32>
    %234 = math.tanh %233 : vector<8x128xf32>
    %235 = arith.subf %209, %234 : vector<8x128xf32>
    %236 = arith.mulf %229, %235 : vector<8x128xf32>
    %237 = arith.addf %234, %236 : vector<8x128xf32>
    %238 = arith.subf %237, %209 : vector<8x128xf32>
    %239 = vector.broadcast %208 : vector<8x1xf32> to vector<8x128xf32>
    %240 = arith.mulf %239, %238 : vector<8x128xf32>
    %241 = arith.addf %209, %240 : vector<8x128xf32>
    %c0_73 = arith.constant 0 : index
    %c0_74 = arith.constant 0 : index
    %242 = vector.load %arg11[%c0_73, %c0_74] : memref<8x128xf32, #tpu.memory_space<vmem>>, vector<8x128xf32>
    tpu.vector_store %arg11[%c0_73, %c0_74], %241 {strides = array<i32>} : memref<8x128xf32, #tpu.memory_space<vmem>>, vector<8x128xf32>,
    %243 = vector.broadcast %208 : vector<8x1xf32> to vector<8x128xf32>
    %244 = arith.mulf %243, %237 : vector<8x128xf32>
    %245 = arith.index_cast %204 : i32 to index
    %c0_75 = arith.constant 0 : index
    %246 = vector.load %arg10[%245, %c0_75] : memref<64x128xf32, #tpu.memory_space<vmem>>, vector<8x128xf32>
    tpu.vector_store %arg10[%245, %c0_75], %244 {strides = array<i32>} : memref<64x128xf32, #tpu.memory_space<vmem>>, vector<8x128xf32>,
    %c5_i32 = arith.constant 5 : i32
    %c7_i32_76 = arith.constant 7 : i32
    %247 = arith.subi %c7_i32_76, %c5_i32 : i32
    %248 = arith.select %16, %247, %c5_i32 : i32
    %c8_i32_77 = arith.constant 8 : i32
    %249 = arith.muli %248, %c8_i32_77 : i32
    %250 = tpu.assume_multiple %249, 8 : i32
    %251 = arith.index_cast %250 : i32 to index
    %c0_78 = arith.constant 0 : index
    %252 = vector.load %arg9[%251, %c0_78] : memref<64x384xf32, #tpu.memory_space<vmem>>, vector<8x384xf32>
    %253 = arith.index_cast %250 : i32 to index
    %c0_79 = arith.constant 0 : index
    %254 = vector.load %arg3[%253, %c0_79] : memref<64x1xf32, #tpu.memory_space<vmem>>, vector<8x1xf32>
    %c0_80 = arith.constant 0 : index
    %c0_81 = arith.constant 0 : index
    %255 = vector.load %arg11[%c0_80, %c0_81] : memref<8x128xf32, #tpu.memory_space<vmem>>, vector<8x128xf32>
    %256 = arith.truncf %255 : vector<8x128xf32> to vector<8x128xbf16>
    %cst_82 = arith.constant dense<0.000000e+00> : vector<8x384xf32>
    %257 = tpu.matmul %256, %13, %cst_82 {dimension_numbers = #tpu.dot_dimension_numbers<[1], [0], [0], [1], [0, 0, 1, 1], [], []>} : vector<8x128xbf16>, vector<128x384xbf16>, vector<8x384xf32> -> vector<8x384xf32>
    %258 = vector.broadcast %15 : vector<1x384xf32> to vector<8x384xf32>
    %259 = arith.addf %257, %258 : vector<8x384xf32>
    %260 = vector.extract_strided_slice %252 {offsets = [0, 0], sizes = [8, 128], strides = [1, 1]} : vector<8x384xf32> to vector<8x128xf32>
    %261 = vector.extract_strided_slice %259 {offsets = [0, 0], sizes = [8, 128], strides = [1, 1]} : vector<8x384xf32> to vector<8x128xf32>
    %262 = arith.addf %260, %261 : vector<8x128xf32>
    %263 = arith.negf %262 : vector<8x128xf32>
    %264 = math.exp %263 : vector<8x128xf32>
    %cst_83 = arith.constant 1.000000e+00 : f32
    %265 = vector.broadcast %cst_83 : f32 to vector<8x128xf32>
    %266 = arith.addf %265, %264 : vector<8x128xf32>
    %267 = arith.divf %265, %266 : vector<8x128xf32>
    %268 = vector.extract_strided_slice %252 {offsets = [0, 128], sizes = [8, 128], strides = [1, 1]} : vector<8x384xf32> to vector<8x128xf32>
    %269 = vector.extract_strided_slice %259 {offsets = [0, 128], sizes = [8, 128], strides = [1, 1]} : vector<8x384xf32> to vector<8x128xf32>
    %270 = arith.addf %268, %269 : vector<8x128xf32>
    %271 = arith.negf %270 : vector<8x128xf32>
    %272 = math.exp %271 : vector<8x128xf32>
    %cst_84 = arith.constant 1.000000e+00 : f32
    %273 = vector.broadcast %cst_84 : f32 to vector<8x128xf32>
    %274 = arith.addf %273, %272 : vector<8x128xf32>
    %275 = arith.divf %273, %274 : vector<8x128xf32>
    %276 = vector.extract_strided_slice %252 {offsets = [0, 256], sizes = [8, 128], strides = [1, 1]} : vector<8x384xf32> to vector<8x128xf32>
    %277 = vector.extract_strided_slice %259 {offsets = [0, 256], sizes = [8, 128], strides = [1, 1]} : vector<8x384xf32> to vector<8x128xf32>
    %278 = arith.mulf %267, %277 : vector<8x128xf32>
    %279 = arith.addf %276, %278 : vector<8x128xf32>
    %280 = math.tanh %279 : vector<8x128xf32>
    %281 = arith.subf %255, %280 : vector<8x128xf32>
    %282 = arith.mulf %275, %281 : vector<8x128xf32>
    %283 = arith.addf %280, %282 : vector<8x128xf32>
    %284 = arith.subf %283, %255 : vector<8x128xf32>
    %285 = vector.broadcast %254 : vector<8x1xf32> to vector<8x128xf32>
    %286 = arith.mulf %285, %284 : vector<8x128xf32>
    %287 = arith.addf %255, %286 : vector<8x128xf32>
    %c0_85 = arith.constant 0 : index
    %c0_86 = arith.constant 0 : index
    %288 = vector.load %arg11[%c0_85, %c0_86] : memref<8x128xf32, #tpu.memory_space<vmem>>, vector<8x128xf32>
    tpu.vector_store %arg11[%c0_85, %c0_86], %287 {strides = array<i32>} : memref<8x128xf32, #tpu.memory_space<vmem>>, vector<8x128xf32>,
    %289 = vector.broadcast %254 : vector<8x1xf32> to vector<8x128xf32>
    %290 = arith.mulf %289, %283 : vector<8x128xf32>
    %291 = arith.index_cast %250 : i32 to index
    %c0_87 = arith.constant 0 : index
    %292 = vector.load %arg10[%291, %c0_87] : memref<64x128xf32, #tpu.memory_space<vmem>>, vector<8x128xf32>
    tpu.vector_store %arg10[%291, %c0_87], %290 {strides = array<i32>} : memref<64x128xf32, #tpu.memory_space<vmem>>, vector<8x128xf32>,
    %c6_i32 = arith.constant 6 : i32
    %c7_i32_88 = arith.constant 7 : i32
    %293 = arith.subi %c7_i32_88, %c6_i32 : i32
    %294 = arith.select %16, %293, %c6_i32 : i32
    %c8_i32_89 = arith.constant 8 : i32
    %295 = arith.muli %294, %c8_i32_89 : i32
    %296 = tpu.assume_multiple %295, 8 : i32
    %297 = arith.index_cast %296 : i32 to index
    %c0_90 = arith.constant 0 : index
    %298 = vector.load %arg9[%297, %c0_90] : memref<64x384xf32, #tpu.memory_space<vmem>>, vector<8x384xf32>
    %299 = arith.index_cast %296 : i32 to index
    %c0_91 = arith.constant 0 : index
    %300 = vector.load %arg3[%299, %c0_91] : memref<64x1xf32, #tpu.memory_space<vmem>>, vector<8x1xf32>
    %c0_92 = arith.constant 0 : index
    %c0_93 = arith.constant 0 : index
    %301 = vector.load %arg11[%c0_92, %c0_93] : memref<8x128xf32, #tpu.memory_space<vmem>>, vector<8x128xf32>
    %302 = arith.truncf %301 : vector<8x128xf32> to vector<8x128xbf16>
    %cst_94 = arith.constant dense<0.000000e+00> : vector<8x384xf32>
    %303 = tpu.matmul %302, %13, %cst_94 {dimension_numbers = #tpu.dot_dimension_numbers<[1], [0], [0], [1], [0, 0, 1, 1], [], []>} : vector<8x128xbf16>, vector<128x384xbf16>, vector<8x384xf32> -> vector<8x384xf32>
    %304 = vector.broadcast %15 : vector<1x384xf32> to vector<8x384xf32>
    %305 = arith.addf %303, %304 : vector<8x384xf32>
    %306 = vector.extract_strided_slice %298 {offsets = [0, 0], sizes = [8, 128], strides = [1, 1]} : vector<8x384xf32> to vector<8x128xf32>
    %307 = vector.extract_strided_slice %305 {offsets = [0, 0], sizes = [8, 128], strides = [1, 1]} : vector<8x384xf32> to vector<8x128xf32>
    %308 = arith.addf %306, %307 : vector<8x128xf32>
    %309 = arith.negf %308 : vector<8x128xf32>
    %310 = math.exp %309 : vector<8x128xf32>
    %cst_95 = arith.constant 1.000000e+00 : f32
    %311 = vector.broadcast %cst_95 : f32 to vector<8x128xf32>
    %312 = arith.addf %311, %310 : vector<8x128xf32>
    %313 = arith.divf %311, %312 : vector<8x128xf32>
    %314 = vector.extract_strided_slice %298 {offsets = [0, 128], sizes = [8, 128], strides = [1, 1]} : vector<8x384xf32> to vector<8x128xf32>
    %315 = vector.extract_strided_slice %305 {offsets = [0, 128], sizes = [8, 128], strides = [1, 1]} : vector<8x384xf32> to vector<8x128xf32>
    %316 = arith.addf %314, %315 : vector<8x128xf32>
    %317 = arith.negf %316 : vector<8x128xf32>
    %318 = math.exp %317 : vector<8x128xf32>
    %cst_96 = arith.constant 1.000000e+00 : f32
    %319 = vector.broadcast %cst_96 : f32 to vector<8x128xf32>
    %320 = arith.addf %319, %318 : vector<8x128xf32>
    %321 = arith.divf %319, %320 : vector<8x128xf32>
    %322 = vector.extract_strided_slice %298 {offsets = [0, 256], sizes = [8, 128], strides = [1, 1]} : vector<8x384xf32> to vector<8x128xf32>
    %323 = vector.extract_strided_slice %305 {offsets = [0, 256], sizes = [8, 128], strides = [1, 1]} : vector<8x384xf32> to vector<8x128xf32>
    %324 = arith.mulf %313, %323 : vector<8x128xf32>
    %325 = arith.addf %322, %324 : vector<8x128xf32>
    %326 = math.tanh %325 : vector<8x128xf32>
    %327 = arith.subf %301, %326 : vector<8x128xf32>
    %328 = arith.mulf %321, %327 : vector<8x128xf32>
    %329 = arith.addf %326, %328 : vector<8x128xf32>
    %330 = arith.subf %329, %301 : vector<8x128xf32>
    %331 = vector.broadcast %300 : vector<8x1xf32> to vector<8x128xf32>
    %332 = arith.mulf %331, %330 : vector<8x128xf32>
    %333 = arith.addf %301, %332 : vector<8x128xf32>
    %c0_97 = arith.constant 0 : index
    %c0_98 = arith.constant 0 : index
    %334 = vector.load %arg11[%c0_97, %c0_98] : memref<8x128xf32, #tpu.memory_space<vmem>>, vector<8x128xf32>
    tpu.vector_store %arg11[%c0_97, %c0_98], %333 {strides = array<i32>} : memref<8x128xf32, #tpu.memory_space<vmem>>, vector<8x128xf32>,
    %335 = vector.broadcast %300 : vector<8x1xf32> to vector<8x128xf32>
    %336 = arith.mulf %335, %329 : vector<8x128xf32>
    %337 = arith.index_cast %296 : i32 to index
    %c0_99 = arith.constant 0 : index
    %338 = vector.load %arg10[%337, %c0_99] : memref<64x128xf32, #tpu.memory_space<vmem>>, vector<8x128xf32>
    tpu.vector_store %arg10[%337, %c0_99], %336 {strides = array<i32>} : memref<64x128xf32, #tpu.memory_space<vmem>>, vector<8x128xf32>,
    %c7_i32_100 = arith.constant 7 : i32
    %c7_i32_101 = arith.constant 7 : i32
    %339 = arith.subi %c7_i32_101, %c7_i32_100 : i32
    %340 = arith.select %16, %339, %c7_i32_100 : i32
    %c8_i32_102 = arith.constant 8 : i32
    %341 = arith.muli %340, %c8_i32_102 : i32
    %342 = tpu.assume_multiple %341, 8 : i32
    %343 = arith.index_cast %342 : i32 to index
    %c0_103 = arith.constant 0 : index
    %344 = vector.load %arg9[%343, %c0_103] : memref<64x384xf32, #tpu.memory_space<vmem>>, vector<8x384xf32>
    %345 = arith.index_cast %342 : i32 to index
    %c0_104 = arith.constant 0 : index
    %346 = vector.load %arg3[%345, %c0_104] : memref<64x1xf32, #tpu.memory_space<vmem>>, vector<8x1xf32>
    %c0_105 = arith.constant 0 : index
    %c0_106 = arith.constant 0 : index
    %347 = vector.load %arg11[%c0_105, %c0_106] : memref<8x128xf32, #tpu.memory_space<vmem>>, vector<8x128xf32>
    %348 = arith.truncf %347 : vector<8x128xf32> to vector<8x128xbf16>
    %cst_107 = arith.constant dense<0.000000e+00> : vector<8x384xf32>
    %349 = tpu.matmul %348, %13, %cst_107 {dimension_numbers = #tpu.dot_dimension_numbers<[1], [0], [0], [1], [0, 0, 1, 1], [], []>} : vector<8x128xbf16>, vector<128x384xbf16>, vector<8x384xf32> -> vector<8x384xf32>
    %350 = vector.broadcast %15 : vector<1x384xf32> to vector<8x384xf32>
    %351 = arith.addf %349, %350 : vector<8x384xf32>
    %352 = vector.extract_strided_slice %344 {offsets = [0, 0], sizes = [8, 128], strides = [1, 1]} : vector<8x384xf32> to vector<8x128xf32>
    %353 = vector.extract_strided_slice %351 {offsets = [0, 0], sizes = [8, 128], strides = [1, 1]} : vector<8x384xf32> to vector<8x128xf32>
    %354 = arith.addf %352, %353 : vector<8x128xf32>
    %355 = arith.negf %354 : vector<8x128xf32>
    %356 = math.exp %355 : vector<8x128xf32>
    %cst_108 = arith.constant 1.000000e+00 : f32
    %357 = vector.broadcast %cst_108 : f32 to vector<8x128xf32>
    %358 = arith.addf %357, %356 : vector<8x128xf32>
    %359 = arith.divf %357, %358 : vector<8x128xf32>
    %360 = vector.extract_strided_slice %344 {offsets = [0, 128], sizes = [8, 128], strides = [1, 1]} : vector<8x384xf32> to vector<8x128xf32>
    %361 = vector.extract_strided_slice %351 {offsets = [0, 128], sizes = [8, 128], strides = [1, 1]} : vector<8x384xf32> to vector<8x128xf32>
    %362 = arith.addf %360, %361 : vector<8x128xf32>
    %363 = arith.negf %362 : vector<8x128xf32>
    %364 = math.exp %363 : vector<8x128xf32>
    %cst_109 = arith.constant 1.000000e+00 : f32
    %365 = vector.broadcast %cst_109 : f32 to vector<8x128xf32>
    %366 = arith.addf %365, %364 : vector<8x128xf32>
    %367 = arith.divf %365, %366 : vector<8x128xf32>
    %368 = vector.extract_strided_slice %344 {offsets = [0, 256], sizes = [8, 128], strides = [1, 1]} : vector<8x384xf32> to vector<8x128xf32>
    %369 = vector.extract_strided_slice %351 {offsets = [0, 256], sizes = [8, 128], strides = [1, 1]} : vector<8x384xf32> to vector<8x128xf32>
    %370 = arith.mulf %359, %369 : vector<8x128xf32>
    %371 = arith.addf %368, %370 : vector<8x128xf32>
    %372 = math.tanh %371 : vector<8x128xf32>
    %373 = arith.subf %347, %372 : vector<8x128xf32>
    %374 = arith.mulf %367, %373 : vector<8x128xf32>
    %375 = arith.addf %372, %374 : vector<8x128xf32>
    %376 = arith.subf %375, %347 : vector<8x128xf32>
    %377 = vector.broadcast %346 : vector<8x1xf32> to vector<8x128xf32>
    %378 = arith.mulf %377, %376 : vector<8x128xf32>
    %379 = arith.addf %347, %378 : vector<8x128xf32>
    %c0_110 = arith.constant 0 : index
    %c0_111 = arith.constant 0 : index
    %380 = vector.load %arg11[%c0_110, %c0_111] : memref<8x128xf32, #tpu.memory_space<vmem>>, vector<8x128xf32>
    tpu.vector_store %arg11[%c0_110, %c0_111], %379 {strides = array<i32>} : memref<8x128xf32, #tpu.memory_space<vmem>>, vector<8x128xf32>,
    %381 = vector.broadcast %346 : vector<8x1xf32> to vector<8x128xf32>
    %382 = arith.mulf %381, %375 : vector<8x128xf32>
    %383 = arith.index_cast %342 : i32 to index
    %c0_112 = arith.constant 0 : index
    %384 = vector.load %arg10[%383, %c0_112] : memref<64x128xf32, #tpu.memory_space<vmem>>, vector<8x128xf32>
    tpu.vector_store %arg10[%383, %c0_112], %382 {strides = array<i32>} : memref<64x128xf32, #tpu.memory_space<vmem>>, vector<8x128xf32>,
    %c8_i32_113 = arith.constant 8 : i32
    %c0_114 = arith.constant 0 : index
    %c0_115 = arith.constant 0 : index
    %385 = vector.load %arg10[%c0_114, %c0_115] : memref<64x128xf32, #tpu.memory_space<vmem>>, vector<64x128xf32>
    %386 = arith.truncf %385 : vector<64x128xf32> to vector<64x128xbf16>
    %c0_116 = arith.constant 0 : index
    %c0_117 = arith.constant 0 : index
    %387 = vector.load %arg8[%c0_116, %c0_117] : memref<64x128xbf16, #tpu.memory_space<vmem>>, vector<64x128xbf16>
    tpu.vector_store %arg8[%c0_116, %c0_117], %386 {strides = array<i32>} : memref<64x128xbf16, #tpu.memory_space<vmem>>, vector<64x128xbf16>,
    return
  }
  func.func @transform_0(%arg0: i32, %arg1: i32) -> (i32, i32) {
    %c2_i32 = arith.constant 2 : i32
    %0 = arith.muli %c2_i32, %arg1 : i32
    %c0_i32 = arith.constant 0 : i32
    %1 = arith.subi %c0_i32, %0 : i32
    %2 = arith.muli %arg0, %1 : i32
    %3 = arith.addi %arg1, %2 : i32
    %c0_i32_0 = arith.constant 0 : i32
    %c0_i32_1 = arith.constant 0 : i32
    return %3, %c0_i32_0 : i32, i32
  }
  func.func @transform_1(%arg0: i32, %arg1: i32) -> (i32, i32) {
    %c2_i32 = arith.constant 2 : i32
    %0 = arith.muli %c2_i32, %arg1 : i32
    %c0_i32 = arith.constant 0 : i32
    %1 = arith.subi %c0_i32, %0 : i32
    %2 = arith.muli %arg0, %1 : i32
    %3 = arith.addi %arg1, %2 : i32
    %c0_i32_0 = arith.constant 0 : i32
    %c0_i32_1 = arith.constant 0 : i32
    return %3, %c0_i32_0 : i32, i32
  }
  func.func @transform_2(%arg0: i32, %arg1: i32) -> (i32, i32, i32) {
    %c0_i32 = arith.constant 0 : i32
    %c0_i32_0 = arith.constant 0 : i32
    %c0_i32_1 = arith.constant 0 : i32
    return %arg0, %c0_i32, %c0_i32_0 : i32, i32, i32
  }
  func.func @transform_3(%arg0: i32, %arg1: i32) -> (i32, i32, i32) {
    %c0_i32 = arith.constant 0 : i32
    %c0_i32_0 = arith.constant 0 : i32
    %c0_i32_1 = arith.constant 0 : i32
    return %arg0, %c0_i32, %c0_i32_0 : i32, i32, i32
  }
  func.func @transform_4(%arg0: i32, %arg1: i32) -> (i32, i32, i32) {
    %c0_i32 = arith.constant 0 : i32
    %c0_i32_0 = arith.constant 0 : i32
    %c0_i32_1 = arith.constant 0 : i32
    return %arg0, %c0_i32, %c0_i32_0 : i32, i32, i32
  }
  func.func @transform_5(%arg0: i32, %arg1: i32) -> (i32, i32, i32) {
    %c0_i32 = arith.constant 0 : i32
    %c0_i32_0 = arith.constant 0 : i32
    %c0_i32_1 = arith.constant 0 : i32
    return %arg0, %c0_i32, %c0_i32_0 : i32, i32, i32
  }
  func.func @transform_6(%arg0: i32, %arg1: i32) -> (i32, i32) {
    %c2_i32 = arith.constant 2 : i32
    %0 = arith.muli %c2_i32, %arg1 : i32
    %c0_i32 = arith.constant 0 : i32
    %1 = arith.subi %c0_i32, %0 : i32
    %2 = arith.muli %arg0, %1 : i32
    %3 = arith.addi %arg1, %2 : i32
    %c0_i32_0 = arith.constant 0 : i32
    return %3, %arg0 : i32, i32
  }
}

module attributes {stable_mosaic.version = 11 : i64} {
  func.func @kernel(%arg0: i32, %arg1: i32, %arg2: memref<64x128xbf16, #tpu.memory_space<vmem>>, %arg3: memref<64x1xf32, #tpu.memory_space<vmem>>, %arg4: memref<1x128x384xbf16, #tpu.memory_space<vmem>>, %arg5: memref<1x128x384xbf16, #tpu.memory_space<vmem>>, %arg6: memref<1x1x384xf32, #tpu.memory_space<vmem>>, %arg7: memref<1x1x384xf32, #tpu.memory_space<vmem>>, %arg8: memref<64x128xbf16, #tpu.memory_space<vmem>>, %arg9: memref<64x384xf32, #tpu.memory_space<vmem>>, %arg10: memref<64x128xf32, #tpu.memory_space<vmem>>, %arg11: memref<8x128xf32, #tpu.memory_space<vmem>>) attributes {dimension_semantics = [#tpu.dimension_semantics<parallel>, #tpu.dimension_semantics<arbitrary>], iteration_bounds = array<i64: 2, 1>, scalar_prefetch = 0 : i64, scratch_operands = 3 : i64, tpu.core_type = #tpu.core_type<tc>, window_params = [{transform_indices = @transform_0, window_bounds = array<i64: 64, 128>}, {transform_indices = @transform_1, window_bounds = array<i64: 64, 1>}, {transform_indices = @transform_2, window_bounds = array<i64: 1, 128, 384>}, {transform_indices = @transform_3, window_bounds = array<i64: 1, 128, 384>}, {transform_indices = @transform_4, window_bounds = array<i64: 1, 1, 384>}, {transform_indices = @transform_5, window_bounds = array<i64: 1, 1, 384>}, {transform_indices = @transform_6, window_bounds = array<i64: 64, 128>}]} {
    %c0_i32 = arith.constant 0 : i32
    %0 = arith.cmpi eq, %arg1, %c0_i32 : i32
    %1 = arith.extui %0 : i1 to i32
    %c0_i32_0 = arith.constant 0 : i32
    %2 = arith.cmpi ne, %1, %c0_i32_0 : i32
    scf.if %2 {
      %cst_118 = arith.constant 0.000000e+00 : f32
      %388 = vector.broadcast %cst_118 : f32 to vector<8x128xf32>
      %c0_119 = arith.constant 0 : index
      %c0_120 = arith.constant 0 : index
      %389 = vector.load %arg11[%c0_119, %c0_120] : memref<8x128xf32, #tpu.memory_space<vmem>>, vector<8x128xf32>
      tpu.vector_store %arg11[%c0_119, %c0_120], %388 {strides = array<i32>} : memref<8x128xf32, #tpu.memory_space<vmem>>, vector<8x128xf32>,
    } else {
    }
    %c0 = arith.constant 0 : index
    %c0_1 = arith.constant 0 : index
    %3 = vector.load %arg2[%c0, %c0_1] : memref<64x128xbf16, #tpu.memory_space<vmem>>, vector<64x128xbf16>
    %c0_2 = arith.constant 0 : index
    %c0_3 = arith.constant 0 : index
    %c0_4 = arith.constant 0 : index
    %4 = vector.load %arg4[%c0_2, %c0_3, %c0_4] : memref<1x128x384xbf16, #tpu.memory_space<vmem>>, vector<1x128x384xbf16>
    %5 = vector.shape_cast %4 : vector<1x128x384xbf16> to vector<128x384xbf16>
    %cst = arith.constant dense<0.000000e+00> : vector<64x384xf32>
    %6 = tpu.matmul %3, %5, %cst {dimension_numbers = #tpu.dot_dimension_numbers<[1], [0], [0], [1], [0, 0, 1, 1], [], []>} : vector<64x128xbf16>, vector<128x384xbf16>, vector<64x384xf32> -> vector<64x384xf32>
    %c0_5 = arith.constant 0 : index
    %c0_6 = arith.constant 0 : index
    %c0_7 = arith.constant 0 : index
    %7 = vector.load %arg6[%c0_5, %c0_6, %c0_7] : memref<1x1x384xf32, #tpu.memory_space<vmem>>, vector<1x1x384xf32>
    %8 = vector.shape_cast %7 : vector<1x1x384xf32> to vector<1x384xf32>
    %9 = vector.broadcast %8 : vector<1x384xf32> to vector<64x384xf32>
    %10 = arith.addf %6, %9 : vector<64x384xf32>
    %c0_8 = arith.constant 0 : index
    %c0_9 = arith.constant 0 : index
    %11 = vector.load %arg9[%c0_8, %c0_9] : memref<64x384xf32, #tpu.memory_space<vmem>>, vector<64x384xf32>
    tpu.vector_store %arg9[%c0_8, %c0_9], %10 {strides = array<i32>} : memref<64x384xf32, #tpu.memory_space<vmem>>, vector<64x384xf32>,
    %c0_10 = arith.constant 0 : index
    %c0_11 = arith.constant 0 : index
    %c0_12 = arith.constant 0 : index
    %12 = vector.load %arg5[%c0_10, %c0_11, %c0_12] : memref<1x128x384xbf16, #tpu.memory_space<vmem>>, vector<1x128x384xbf16>
    %13 = vector.shape_cast %12 : vector<1x128x384xbf16> to vector<128x384xbf16>
    %c0_13 = arith.constant 0 : index
    %c0_14 = arith.constant 0 : index
    %c0_15 = arith.constant 0 : index
    %14 = vector.load %arg7[%c0_13, %c0_14, %c0_15] : memref<1x1x384xf32, #tpu.memory_space<vmem>>, vector<1x1x384xf32>
    %15 = vector.shape_cast %14 : vector<1x1x384xf32> to vector<1x384xf32>
    %c1_i32 = arith.constant 1 : i32
    %16 = arith.cmpi eq, %arg0, %c1_i32 : i32
    %c0_i32_16 = arith.constant 0 : i32
    %c7_i32 = arith.constant 7 : i32
    %17 = arith.subi %c7_i32, %c0_i32_16 : i32
    %18 = arith.select %16, %17, %c0_i32_16 : i32
    %c8_i32 = arith.constant 8 : i32
    %19 = arith.muli %18, %c8_i32 : i32
    %20 = tpu.assume_multiple %19, 8 : i32
    %21 = arith.index_cast %20 : i32 to index
    %c0_17 = arith.constant 0 : index
    %22 = vector.load %arg9[%21, %c0_17] : memref<64x384xf32, #tpu.memory_space<vmem>>, vector<8x384xf32>
    %23 = arith.index_cast %20 : i32 to index
    %c0_18 = arith.constant 0 : index
    %24 = vector.load %arg3[%23, %c0_18] : memref<64x1xf32, #tpu.memory_space<vmem>>, vector<8x1xf32>
    %c0_19 = arith.constant 0 : index
    %c0_20 = arith.constant 0 : index
    %25 = vector.load %arg11[%c0_19, %c0_20] : memref<8x128xf32, #tpu.memory_space<vmem>>, vector<8x128xf32>
    %26 = arith.truncf %25 : vector<8x128xf32> to vector<8x128xbf16>
    %cst_21 = arith.constant dense<0.000000e+00> : vector<8x384xf32>
    %27 = tpu.matmul %26, %13, %cst_21 {dimension_numbers = #tpu.dot_dimension_numbers<[1], [0], [0], [1], [0, 0, 1, 1], [], []>} : vector<8x128xbf16>, vector<128x384xbf16>, vector<8x384xf32> -> vector<8x384xf32>
    %28 = vector.broadcast %15 : vector<1x384xf32> to vector<8x384xf32>
    %29 = arith.addf %27, %28 : vector<8x384xf32>
    %30 = vector.extract_strided_slice %22 {offsets = [0, 0], sizes = [8, 128], strides = [1, 1]} : vector<8x384xf32> to vector<8x128xf32>
    %31 = vector.extract_strided_slice %29 {offsets = [0, 0], sizes = [8, 128], strides = [1, 1]} : vector<8x384xf32> to vector<8x128xf32>
    %32 = arith.addf %30, %31 : vector<8x128xf32>
    %33 = arith.negf %32 : vector<8x128xf32>
    %34 = math.exp %33 : vector<8x128xf32>
    %cst_22 = arith.constant 1.000000e+00 : f32
    %35 = vector.broadcast %cst_22 : f32 to vector<8x128xf32>
    %36 = arith.addf %35, %34 : vector<8x128xf32>
    %37 = arith.divf %35, %36 : vector<8x128xf32>
    %38 = vector.extract_strided_slice %22 {offsets = [0, 128], sizes = [8, 128], strides = [1, 1]} : vector<8x384xf32> to vector<8x128xf32>
    %39 = vector.extract_strided_slice %29 {offsets = [0, 128], sizes = [8, 128], strides = [1, 1]} : vector<8x384xf32> to vector<8x128xf32>
    %40 = arith.addf %38, %39 : vector<8x128xf32>
    %41 = arith.negf %40 : vector<8x128xf32>
    %42 = math.exp %41 : vector<8x128xf32>
    %cst_23 = arith.constant 1.000000e+00 : f32
    %43 = vector.broadcast %cst_23 : f32 to vector<8x128xf32>
    %44 = arith.addf %43, %42 : vector<8x128xf32>
    %45 = arith.divf %43, %44 : vector<8x128xf32>
    %46 = vector.extract_strided_slice %22 {offsets = [0, 256], sizes = [8, 128], strides = [1, 1]} : vector<8x384xf32> to vector<8x128xf32>
    %47 = vector.extract_strided_slice %29 {offsets = [0, 256], sizes = [8, 128], strides = [1, 1]} : vector<8x384xf32> to vector<8x128xf32>
    %48 = arith.mulf %37, %47 : vector<8x128xf32>
    %49 = arith.addf %46, %48 : vector<8x128xf32>
    %50 = math.tanh %49 : vector<8x128xf32>
    %51 = arith.subf %25, %50 : vector<8x128xf32>
    %52 = arith.mulf %45, %51 : vector<8x128xf32>
    %53 = arith.addf %50, %52 : vector<8x128xf32>
    %54 = arith.subf %53, %25 : vector<8x128xf32>
    %55 = vector.broadcast %24 : vector<8x1xf32> to vector<8x128xf32>
    %56 = arith.mulf %55, %54 : vector<8x128xf32>
    %57 = arith.addf %25, %56 : vector<8x128xf32>
    %c0_24 = arith.constant 0 : index
    %c0_25 = arith.constant 0 : index
    %58 = vector.load %arg11[%c0_24, %c0_25] : memref<8x128xf32, #tpu.memory_space<vmem>>, vector<8x128xf32>
    tpu.vector_store %arg11[%c0_24, %c0_25], %57 {strides = array<i32>} : memref<8x128xf32, #tpu.memory_space<vmem>>, vector<8x128xf32>,
    %59 = vector.broadcast %24 : vector<8x1xf32> to vector<8x128xf32>
    %60 = arith.mulf %59, %53 : vector<8x128xf32>
    %61 = arith.index_cast %20 : i32 to index
    %c0_26 = arith.constant 0 : index
    %62 = vector.load %arg10[%61, %c0_26] : memref<64x128xf32, #tpu.memory_space<vmem>>, vector<8x128xf32>
    tpu.vector_store %arg10[%61, %c0_26], %60 {strides = array<i32>} : memref<64x128xf32, #tpu.memory_space<vmem>>, vector<8x128xf32>,
    %c1_i32_27 = arith.constant 1 : i32
    %c7_i32_28 = arith.constant 7 : i32
    %63 = arith.subi %c7_i32_28, %c1_i32_27 : i32
    %64 = arith.select %16, %63, %c1_i32_27 : i32
    %c8_i32_29 = arith.constant 8 : i32
    %65 = arith.muli %64, %c8_i32_29 : i32
    %66 = tpu.assume_multiple %65, 8 : i32
    %67 = arith.index_cast %66 : i32 to index
    %c0_30 = arith.constant 0 : index
    %68 = vector.load %arg9[%67, %c0_30] : memref<64x384xf32, #tpu.memory_space<vmem>>, vector<8x384xf32>
    %69 = arith.index_cast %66 : i32 to index
    %c0_31 = arith.constant 0 : index
    %70 = vector.load %arg3[%69, %c0_31] : memref<64x1xf32, #tpu.memory_space<vmem>>, vector<8x1xf32>
    %c0_32 = arith.constant 0 : index
    %c0_33 = arith.constant 0 : index
    %71 = vector.load %arg11[%c0_32, %c0_33] : memref<8x128xf32, #tpu.memory_space<vmem>>, vector<8x128xf32>
    %72 = arith.truncf %71 : vector<8x128xf32> to vector<8x128xbf16>
    %cst_34 = arith.constant dense<0.000000e+00> : vector<8x384xf32>
    %73 = tpu.matmul %72, %13, %cst_34 {dimension_numbers = #tpu.dot_dimension_numbers<[1], [0], [0], [1], [0, 0, 1, 1], [], []>} : vector<8x128xbf16>, vector<128x384xbf16>, vector<8x384xf32> -> vector<8x384xf32>
    %74 = vector.broadcast %15 : vector<1x384xf32> to vector<8x384xf32>
    %75 = arith.addf %73, %74 : vector<8x384xf32>
    %76 = vector.extract_strided_slice %68 {offsets = [0, 0], sizes = [8, 128], strides = [1, 1]} : vector<8x384xf32> to vector<8x128xf32>
    %77 = vector.extract_strided_slice %75 {offsets = [0, 0], sizes = [8, 128], strides = [1, 1]} : vector<8x384xf32> to vector<8x128xf32>
    %78 = arith.addf %76, %77 : vector<8x128xf32>
    %79 = arith.negf %78 : vector<8x128xf32>
    %80 = math.exp %79 : vector<8x128xf32>
    %cst_35 = arith.constant 1.000000e+00 : f32
    %81 = vector.broadcast %cst_35 : f32 to vector<8x128xf32>
    %82 = arith.addf %81, %80 : vector<8x128xf32>
    %83 = arith.divf %81, %82 : vector<8x128xf32>
    %84 = vector.extract_strided_slice %68 {offsets = [0, 128], sizes = [8, 128], strides = [1, 1]} : vector<8x384xf32> to vector<8x128xf32>
    %85 = vector.extract_strided_slice %75 {offsets = [0, 128], sizes = [8, 128], strides = [1, 1]} : vector<8x384xf32> to vector<8x128xf32>
    %86 = arith.addf %84, %85 : vector<8x128xf32>
    %87 = arith.negf %86 : vector<8x128xf32>
    %88 = math.exp %87 : vector<8x128xf32>
    %cst_36 = arith.constant 1.000000e+00 : f32
    %89 = vector.broadcast %cst_36 : f32 to vector<8x128xf32>
    %90 = arith.addf %89, %88 : vector<8x128xf32>
    %91 = arith.divf %89, %90 : vector<8x128xf32>
    %92 = vector.extract_strided_slice %68 {offsets = [0, 256], sizes = [8, 128], strides = [1, 1]} : vector<8x384xf32> to vector<8x128xf32>
    %93 = vector.extract_strided_slice %75 {offsets = [0, 256], sizes = [8, 128], strides = [1, 1]} : vector<8x384xf32> to vector<8x128xf32>
    %94 = arith.mulf %83, %93 : vector<8x128xf32>
    %95 = arith.addf %92, %94 : vector<8x128xf32>
    %96 = math.tanh %95 : vector<8x128xf32>
    %97 = arith.subf %71, %96 : vector<8x128xf32>
    %98 = arith.mulf %91, %97 : vector<8x128xf32>
    %99 = arith.addf %96, %98 : vector<8x128xf32>
    %100 = arith.subf %99, %71 : vector<8x128xf32>
    %101 = vector.broadcast %70 : vector<8x1xf32> to vector<8x128xf32>
    %102 = arith.mulf %101, %100 : vector<8x128xf32>
    %103 = arith.addf %71, %102 : vector<8x128xf32>
    %c0_37 = arith.constant 0 : index
    %c0_38 = arith.constant 0 : index
    %104 = vector.load %arg11[%c0_37, %c0_38] : memref<8x128xf32, #tpu.memory_space<vmem>>, vector<8x128xf32>
    tpu.vector_store %arg11[%c0_37, %c0_38], %103 {strides = array<i32>} : memref<8x128xf32, #tpu.memory_space<vmem>>, vector<8x128xf32>,
    %105 = vector.broadcast %70 : vector<8x1xf32> to vector<8x128xf32>
    %106 = arith.mulf %105, %99 : vector<8x128xf32>
    %107 = arith.index_cast %66 : i32 to index
    %c0_39 = arith.constant 0 : index
    %108 = vector.load %arg10[%107, %c0_39] : memref<64x128xf32, #tpu.memory_space<vmem>>, vector<8x128xf32>
    tpu.vector_store %arg10[%107, %c0_39], %106 {strides = array<i32>} : memref<64x128xf32, #tpu.memory_space<vmem>>, vector<8x128xf32>,
    %c2_i32 = arith.constant 2 : i32
    %c7_i32_40 = arith.constant 7 : i32
    %109 = arith.subi %c7_i32_40, %c2_i32 : i32
    %110 = arith.select %16, %109, %c2_i32 : i32
    %c8_i32_41 = arith.constant 8 : i32
    %111 = arith.muli %110, %c8_i32_41 : i32
    %112 = tpu.assume_multiple %111, 8 : i32
    %113 = arith.index_cast %112 : i32 to index
    %c0_42 = arith.constant 0 : index
    %114 = vector.load %arg9[%113, %c0_42] : memref<64x384xf32, #tpu.memory_space<vmem>>, vector<8x384xf32>
    %115 = arith.index_cast %112 : i32 to index
    %c0_43 = arith.constant 0 : index
    %116 = vector.load %arg3[%115, %c0_43] : memref<64x1xf32, #tpu.memory_space<vmem>>, vector<8x1xf32>
    %c0_44 = arith.constant 0 : index
    %c0_45 = arith.constant 0 : index
    %117 = vector.load %arg11[%c0_44, %c0_45] : memref<8x128xf32, #tpu.memory_space<vmem>>, vector<8x128xf32>
    %118 = arith.truncf %117 : vector<8x128xf32> to vector<8x128xbf16>
    %cst_46 = arith.constant dense<0.000000e+00> : vector<8x384xf32>
    %119 = tpu.matmul %118, %13, %cst_46 {dimension_numbers = #tpu.dot_dimension_numbers<[1], [0], [0], [1], [0, 0, 1, 1], [], []>} : vector<8x128xbf16>, vector<128x384xbf16>, vector<8x384xf32> -> vector<8x384xf32>
    %120 = vector.broadcast %15 : vector<1x384xf32> to vector<8x384xf32>
    %121 = arith.addf %119, %120 : vector<8x384xf32>
    %122 = vector.extract_strided_slice %114 {offsets = [0, 0], sizes = [8, 128], strides = [1, 1]} : vector<8x384xf32> to vector<8x128xf32>
    %123 = vector.extract_strided_slice %121 {offsets = [0, 0], sizes = [8, 128], strides = [1, 1]} : vector<8x384xf32> to vector<8x128xf32>
    %124 = arith.addf %122, %123 : vector<8x128xf32>
    %125 = arith.negf %124 : vector<8x128xf32>
    %126 = math.exp %125 : vector<8x128xf32>
    %cst_47 = arith.constant 1.000000e+00 : f32
    %127 = vector.broadcast %cst_47 : f32 to vector<8x128xf32>
    %128 = arith.addf %127, %126 : vector<8x128xf32>
    %129 = arith.divf %127, %128 : vector<8x128xf32>
    %130 = vector.extract_strided_slice %114 {offsets = [0, 128], sizes = [8, 128], strides = [1, 1]} : vector<8x384xf32> to vector<8x128xf32>
    %131 = vector.extract_strided_slice %121 {offsets = [0, 128], sizes = [8, 128], strides = [1, 1]} : vector<8x384xf32> to vector<8x128xf32>
    %132 = arith.addf %130, %131 : vector<8x128xf32>
    %133 = arith.negf %132 : vector<8x128xf32>
    %134 = math.exp %133 : vector<8x128xf32>
    %cst_48 = arith.constant 1.000000e+00 : f32
    %135 = vector.broadcast %cst_48 : f32 to vector<8x128xf32>
    %136 = arith.addf %135, %134 : vector<8x128xf32>
    %137 = arith.divf %135, %136 : vector<8x128xf32>
    %138 = vector.extract_strided_slice %114 {offsets = [0, 256], sizes = [8, 128], strides = [1, 1]} : vector<8x384xf32> to vector<8x128xf32>
    %139 = vector.extract_strided_slice %121 {offsets = [0, 256], sizes = [8, 128], strides = [1, 1]} : vector<8x384xf32> to vector<8x128xf32>
    %140 = arith.mulf %129, %139 : vector<8x128xf32>
    %141 = arith.addf %138, %140 : vector<8x128xf32>
    %142 = math.tanh %141 : vector<8x128xf32>
    %143 = arith.subf %117, %142 : vector<8x128xf32>
    %144 = arith.mulf %137, %143 : vector<8x128xf32>
    %145 = arith.addf %142, %144 : vector<8x128xf32>
    %146 = arith.subf %145, %117 : vector<8x128xf32>
    %147 = vector.broadcast %116 : vector<8x1xf32> to vector<8x128xf32>
    %148 = arith.mulf %147, %146 : vector<8x128xf32>
    %149 = arith.addf %117, %148 : vector<8x128xf32>
    %c0_49 = arith.constant 0 : index
    %c0_50 = arith.constant 0 : index
    %150 = vector.load %arg11[%c0_49, %c0_50] : memref<8x128xf32, #tpu.memory_space<vmem>>, vector<8x128xf32>
    tpu.vector_store %arg11[%c0_49, %c0_50], %149 {strides = array<i32>} : memref<8x128xf32, #tpu.memory_space<vmem>>, vector<8x128xf32>,
    %151 = vector.broadcast %116 : vector<8x1xf32> to vector<8x128xf32>
    %152 = arith.mulf %151, %145 : vector<8x128xf32>
    %153 = arith.index_cast %112 : i32 to index
    %c0_51 = arith.constant 0 : index
    %154 = vector.load %arg10[%153, %c0_51] : memref<64x128xf32, #tpu.memory_space<vmem>>, vector<8x128xf32>
    tpu.vector_store %arg10[%153, %c0_51], %152 {strides = array<i32>} : memref<64x128xf32, #tpu.memory_space<vmem>>, vector<8x128xf32>,
    %c3_i32 = arith.constant 3 : i32
    %c7_i32_52 = arith.constant 7 : i32
    %155 = arith.subi %c7_i32_52, %c3_i32 : i32
    %156 = arith.select %16, %155, %c3_i32 : i32
    %c8_i32_53 = arith.constant 8 : i32
    %157 = arith.muli %156, %c8_i32_53 : i32
    %158 = tpu.assume_multiple %157, 8 : i32
    %159 = arith.index_cast %158 : i32 to index
    %c0_54 = arith.constant 0 : index
    %160 = vector.load %arg9[%159, %c0_54] : memref<64x384xf32, #tpu.memory_space<vmem>>, vector<8x384xf32>
    %161 = arith.index_cast %158 : i32 to index
    %c0_55 = arith.constant 0 : index
    %162 = vector.load %arg3[%161, %c0_55] : memref<64x1xf32, #tpu.memory_space<vmem>>, vector<8x1xf32>
    %c0_56 = arith.constant 0 : index
    %c0_57 = arith.constant 0 : index
    %163 = vector.load %arg11[%c0_56, %c0_57] : memref<8x128xf32, #tpu.memory_space<vmem>>, vector<8x128xf32>
    %164 = arith.truncf %163 : vector<8x128xf32> to vector<8x128xbf16>
    %cst_58 = arith.constant dense<0.000000e+00> : vector<8x384xf32>
    %165 = tpu.matmul %164, %13, %cst_58 {dimension_numbers = #tpu.dot_dimension_numbers<[1], [0], [0], [1], [0, 0, 1, 1], [], []>} : vector<8x128xbf16>, vector<128x384xbf16>, vector<8x384xf32> -> vector<8x384xf32>
    %166 = vector.broadcast %15 : vector<1x384xf32> to vector<8x384xf32>
    %167 = arith.addf %165, %166 : vector<8x384xf32>
    %168 = vector.extract_strided_slice %160 {offsets = [0, 0], sizes = [8, 128], strides = [1, 1]} : vector<8x384xf32> to vector<8x128xf32>
    %169 = vector.extract_strided_slice %167 {offsets = [0, 0], sizes = [8, 128], strides = [1, 1]} : vector<8x384xf32> to vector<8x128xf32>
    %170 = arith.addf %168, %169 : vector<8x128xf32>
    %171 = arith.negf %170 : vector<8x128xf32>
    %172 = math.exp %171 : vector<8x128xf32>
    %cst_59 = arith.constant 1.000000e+00 : f32
    %173 = vector.broadcast %cst_59 : f32 to vector<8x128xf32>
    %174 = arith.addf %173, %172 : vector<8x128xf32>
    %175 = arith.divf %173, %174 : vector<8x128xf32>
    %176 = vector.extract_strided_slice %160 {offsets = [0, 128], sizes = [8, 128], strides = [1, 1]} : vector<8x384xf32> to vector<8x128xf32>
    %177 = vector.extract_strided_slice %167 {offsets = [0, 128], sizes = [8, 128], strides = [1, 1]} : vector<8x384xf32> to vector<8x128xf32>
    %178 = arith.addf %176, %177 : vector<8x128xf32>
    %179 = arith.negf %178 : vector<8x128xf32>
    %180 = math.exp %179 : vector<8x128xf32>
    %cst_60 = arith.constant 1.000000e+00 : f32
    %181 = vector.broadcast %cst_60 : f32 to vector<8x128xf32>
    %182 = arith.addf %181, %180 : vector<8x128xf32>
    %183 = arith.divf %181, %182 : vector<8x128xf32>
    %184 = vector.extract_strided_slice %160 {offsets = [0, 256], sizes = [8, 128], strides = [1, 1]} : vector<8x384xf32> to vector<8x128xf32>
    %185 = vector.extract_strided_slice %167 {offsets = [0, 256], sizes = [8, 128], strides = [1, 1]} : vector<8x384xf32> to vector<8x128xf32>
    %186 = arith.mulf %175, %185 : vector<8x128xf32>
    %187 = arith.addf %184, %186 : vector<8x128xf32>
    %188 = math.tanh %187 : vector<8x128xf32>
    %189 = arith.subf %163, %188 : vector<8x128xf32>
    %190 = arith.mulf %183, %189 : vector<8x128xf32>
    %191 = arith.addf %188, %190 : vector<8x128xf32>
    %192 = arith.subf %191, %163 : vector<8x128xf32>
    %193 = vector.broadcast %162 : vector<8x1xf32> to vector<8x128xf32>
    %194 = arith.mulf %193, %192 : vector<8x128xf32>
    %195 = arith.addf %163, %194 : vector<8x128xf32>
    %c0_61 = arith.constant 0 : index
    %c0_62 = arith.constant 0 : index
    %196 = vector.load %arg11[%c0_61, %c0_62] : memref<8x128xf32, #tpu.memory_space<vmem>>, vector<8x128xf32>
    tpu.vector_store %arg11[%c0_61, %c0_62], %195 {strides = array<i32>} : memref<8x128xf32, #tpu.memory_space<vmem>>, vector<8x128xf32>,
    %197 = vector.broadcast %162 : vector<8x1xf32> to vector<8x128xf32>
    %198 = arith.mulf %197, %191 : vector<8x128xf32>
    %199 = arith.index_cast %158 : i32 to index
    %c0_63 = arith.constant 0 : index
    %200 = vector.load %arg10[%199, %c0_63] : memref<64x128xf32, #tpu.memory_space<vmem>>, vector<8x128xf32>
    tpu.vector_store %arg10[%199, %c0_63], %198 {strides = array<i32>} : memref<64x128xf32, #tpu.memory_space<vmem>>, vector<8x128xf32>,
    %c4_i32 = arith.constant 4 : i32
    %c7_i32_64 = arith.constant 7 : i32
    %201 = arith.subi %c7_i32_64, %c4_i32 : i32
    %202 = arith.select %16, %201, %c4_i32 : i32
    %c8_i32_65 = arith.constant 8 : i32
    %203 = arith.muli %202, %c8_i32_65 : i32
    %204 = tpu.assume_multiple %203, 8 : i32
    %205 = arith.index_cast %204 : i32 to index
    %c0_66 = arith.constant 0 : index
    %206 = vector.load %arg9[%205, %c0_66] : memref<64x384xf32, #tpu.memory_space<vmem>>, vector<8x384xf32>
    %207 = arith.index_cast %204 : i32 to index
    %c0_67 = arith.constant 0 : index
    %208 = vector.load %arg3[%207, %c0_67] : memref<64x1xf32, #tpu.memory_space<vmem>>, vector<8x1xf32>
    %c0_68 = arith.constant 0 : index
    %c0_69 = arith.constant 0 : index
    %209 = vector.load %arg11[%c0_68, %c0_69] : memref<8x128xf32, #tpu.memory_space<vmem>>, vector<8x128xf32>
    %210 = arith.truncf %209 : vector<8x128xf32> to vector<8x128xbf16>
    %cst_70 = arith.constant dense<0.000000e+00> : vector<8x384xf32>
    %211 = tpu.matmul %210, %13, %cst_70 {dimension_numbers = #tpu.dot_dimension_numbers<[1], [0], [0], [1], [0, 0, 1, 1], [], []>} : vector<8x128xbf16>, vector<128x384xbf16>, vector<8x384xf32> -> vector<8x384xf32>
    %212 = vector.broadcast %15 : vector<1x384xf32> to vector<8x384xf32>
    %213 = arith.addf %211, %212 : vector<8x384xf32>
    %214 = vector.extract_strided_slice %206 {offsets = [0, 0], sizes = [8, 128], strides = [1, 1]} : vector<8x384xf32> to vector<8x128xf32>
    %215 = vector.extract_strided_slice %213 {offsets = [0, 0], sizes = [8, 128], strides = [1, 1]} : vector<8x384xf32> to vector<8x128xf32>
    %216 = arith.addf %214, %215 : vector<8x128xf32>
    %217 = arith.negf %216 : vector<8x128xf32>
    %218 = math.exp %217 : vector<8x128xf32>
    %cst_71 = arith.constant 1.000000e+00 : f32
    %219 = vector.broadcast %cst_71 : f32 to vector<8x128xf32>
    %220 = arith.addf %219, %218 : vector<8x128xf32>
    %221 = arith.divf %219, %220 : vector<8x128xf32>
    %222 = vector.extract_strided_slice %206 {offsets = [0, 128], sizes = [8, 128], strides = [1, 1]} : vector<8x384xf32> to vector<8x128xf32>
    %223 = vector.extract_strided_slice %213 {offsets = [0, 128], sizes = [8, 128], strides = [1, 1]} : vector<8x384xf32> to vector<8x128xf32>
    %224 = arith.addf %222, %223 : vector<8x128xf32>
    %225 = arith.negf %224 : vector<8x128xf32>
    %226 = math.exp %225 : vector<8x128xf32>
    %cst_72 = arith.constant 1.000000e+00 : f32
    %227 = vector.broadcast %cst_72 : f32 to vector<8x128xf32>
    %228 = arith.addf %227, %226 : vector<8x128xf32>
    %229 = arith.divf %227, %228 : vector<8x128xf32>
    %230 = vector.extract_strided_slice %206 {offsets = [0, 256], sizes = [8, 128], strides = [1, 1]} : vector<8x384xf32> to vector<8x128xf32>
    %231 = vector.extract_strided_slice %213 {offsets = [0, 256], sizes = [8, 128], strides = [1, 1]} : vector<8x384xf32> to vector<8x128xf32>
    %232 = arith.mulf %221, %231 : vector<8x128xf32>
    %233 = arith.addf %230, %232 : vector<8x128xf32>
    %234 = math.tanh %233 : vector<8x128xf32>
    %235 = arith.subf %209, %234 : vector<8x128xf32>
    %236 = arith.mulf %229, %235 : vector<8x128xf32>
    %237 = arith.addf %234, %236 : vector<8x128xf32>
    %238 = arith.subf %237, %209 : vector<8x128xf32>
    %239 = vector.broadcast %208 : vector<8x1xf32> to vector<8x128xf32>
    %240 = arith.mulf %239, %238 : vector<8x128xf32>
    %241 = arith.addf %209, %240 : vector<8x128xf32>
    %c0_73 = arith.constant 0 : index
    %c0_74 = arith.constant 0 : index
    %242 = vector.load %arg11[%c0_73, %c0_74] : memref<8x128xf32, #tpu.memory_space<vmem>>, vector<8x128xf32>
    tpu.vector_store %arg11[%c0_73, %c0_74], %241 {strides = array<i32>} : memref<8x128xf32, #tpu.memory_space<vmem>>, vector<8x128xf32>,
    %243 = vector.broadcast %208 : vector<8x1xf32> to vector<8x128xf32>
    %244 = arith.mulf %243, %237 : vector<8x128xf32>
    %245 = arith.index_cast %204 : i32 to index
    %c0_75 = arith.constant 0 : index
    %246 = vector.load %arg10[%245, %c0_75] : memref<64x128xf32, #tpu.memory_space<vmem>>, vector<8x128xf32>
    tpu.vector_store %arg10[%245, %c0_75], %244 {strides = array<i32>} : memref<64x128xf32, #tpu.memory_space<vmem>>, vector<8x128xf32>,
    %c5_i32 = arith.constant 5 : i32
    %c7_i32_76 = arith.constant 7 : i32
    %247 = arith.subi %c7_i32_76, %c5_i32 : i32
    %248 = arith.select %16, %247, %c5_i32 : i32
    %c8_i32_77 = arith.constant 8 : i32
    %249 = arith.muli %248, %c8_i32_77 : i32
    %250 = tpu.assume_multiple %249, 8 : i32
    %251 = arith.index_cast %250 : i32 to index
    %c0_78 = arith.constant 0 : index
    %252 = vector.load %arg9[%251, %c0_78] : memref<64x384xf32, #tpu.memory_space<vmem>>, vector<8x384xf32>
    %253 = arith.index_cast %250 : i32 to index
    %c0_79 = arith.constant 0 : index
    %254 = vector.load %arg3[%253, %c0_79] : memref<64x1xf32, #tpu.memory_space<vmem>>, vector<8x1xf32>
    %c0_80 = arith.constant 0 : index
    %c0_81 = arith.constant 0 : index
    %255 = vector.load %arg11[%c0_80, %c0_81] : memref<8x128xf32, #tpu.memory_space<vmem>>, vector<8x128xf32>
    %256 = arith.truncf %255 : vector<8x128xf32> to vector<8x128xbf16>
    %cst_82 = arith.constant dense<0.000000e+00> : vector<8x384xf32>
    %257 = tpu.matmul %256, %13, %cst_82 {dimension_numbers = #tpu.dot_dimension_numbers<[1], [0], [0], [1], [0, 0, 1, 1], [], []>} : vector<8x128xbf16>, vector<128x384xbf16>, vector<8x384xf32> -> vector<8x384xf32>
    %258 = vector.broadcast %15 : vector<1x384xf32> to vector<8x384xf32>
    %259 = arith.addf %257, %258 : vector<8x384xf32>
    %260 = vector.extract_strided_slice %252 {offsets = [0, 0], sizes = [8, 128], strides = [1, 1]} : vector<8x384xf32> to vector<8x128xf32>
    %261 = vector.extract_strided_slice %259 {offsets = [0, 0], sizes = [8, 128], strides = [1, 1]} : vector<8x384xf32> to vector<8x128xf32>
    %262 = arith.addf %260, %261 : vector<8x128xf32>
    %263 = arith.negf %262 : vector<8x128xf32>
    %264 = math.exp %263 : vector<8x128xf32>
    %cst_83 = arith.constant 1.000000e+00 : f32
    %265 = vector.broadcast %cst_83 : f32 to vector<8x128xf32>
    %266 = arith.addf %265, %264 : vector<8x128xf32>
    %267 = arith.divf %265, %266 : vector<8x128xf32>
    %268 = vector.extract_strided_slice %252 {offsets = [0, 128], sizes = [8, 128], strides = [1, 1]} : vector<8x384xf32> to vector<8x128xf32>
    %269 = vector.extract_strided_slice %259 {offsets = [0, 128], sizes = [8, 128], strides = [1, 1]} : vector<8x384xf32> to vector<8x128xf32>
    %270 = arith.addf %268, %269 : vector<8x128xf32>
    %271 = arith.negf %270 : vector<8x128xf32>
    %272 = math.exp %271 : vector<8x128xf32>
    %cst_84 = arith.constant 1.000000e+00 : f32
    %273 = vector.broadcast %cst_84 : f32 to vector<8x128xf32>
    %274 = arith.addf %273, %272 : vector<8x128xf32>
    %275 = arith.divf %273, %274 : vector<8x128xf32>
    %276 = vector.extract_strided_slice %252 {offsets = [0, 256], sizes = [8, 128], strides = [1, 1]} : vector<8x384xf32> to vector<8x128xf32>
    %277 = vector.extract_strided_slice %259 {offsets = [0, 256], sizes = [8, 128], strides = [1, 1]} : vector<8x384xf32> to vector<8x128xf32>
    %278 = arith.mulf %267, %277 : vector<8x128xf32>
    %279 = arith.addf %276, %278 : vector<8x128xf32>
    %280 = math.tanh %279 : vector<8x128xf32>
    %281 = arith.subf %255, %280 : vector<8x128xf32>
    %282 = arith.mulf %275, %281 : vector<8x128xf32>
    %283 = arith.addf %280, %282 : vector<8x128xf32>
    %284 = arith.subf %283, %255 : vector<8x128xf32>
    %285 = vector.broadcast %254 : vector<8x1xf32> to vector<8x128xf32>
    %286 = arith.mulf %285, %284 : vector<8x128xf32>
    %287 = arith.addf %255, %286 : vector<8x128xf32>
    %c0_85 = arith.constant 0 : index
    %c0_86 = arith.constant 0 : index
    %288 = vector.load %arg11[%c0_85, %c0_86] : memref<8x128xf32, #tpu.memory_space<vmem>>, vector<8x128xf32>
    tpu.vector_store %arg11[%c0_85, %c0_86], %287 {strides = array<i32>} : memref<8x128xf32, #tpu.memory_space<vmem>>, vector<8x128xf32>,
    %289 = vector.broadcast %254 : vector<8x1xf32> to vector<8x128xf32>
    %290 = arith.mulf %289, %283 : vector<8x128xf32>
    %291 = arith.index_cast %250 : i32 to index
    %c0_87 = arith.constant 0 : index
    %292 = vector.load %arg10[%291, %c0_87] : memref<64x128xf32, #tpu.memory_space<vmem>>, vector<8x128xf32>
    tpu.vector_store %arg10[%291, %c0_87], %290 {strides = array<i32>} : memref<64x128xf32, #tpu.memory_space<vmem>>, vector<8x128xf32>,
    %c6_i32 = arith.constant 6 : i32
    %c7_i32_88 = arith.constant 7 : i32
    %293 = arith.subi %c7_i32_88, %c6_i32 : i32
    %294 = arith.select %16, %293, %c6_i32 : i32
    %c8_i32_89 = arith.constant 8 : i32
    %295 = arith.muli %294, %c8_i32_89 : i32
    %296 = tpu.assume_multiple %295, 8 : i32
    %297 = arith.index_cast %296 : i32 to index
    %c0_90 = arith.constant 0 : index
    %298 = vector.load %arg9[%297, %c0_90] : memref<64x384xf32, #tpu.memory_space<vmem>>, vector<8x384xf32>
    %299 = arith.index_cast %296 : i32 to index
    %c0_91 = arith.constant 0 : index
    %300 = vector.load %arg3[%299, %c0_91] : memref<64x1xf32, #tpu.memory_space<vmem>>, vector<8x1xf32>
    %c0_92 = arith.constant 0 : index
    %c0_93 = arith.constant 0 : index
    %301 = vector.load %arg11[%c0_92, %c0_93] : memref<8x128xf32, #tpu.memory_space<vmem>>, vector<8x128xf32>
    %302 = arith.truncf %301 : vector<8x128xf32> to vector<8x128xbf16>
    %cst_94 = arith.constant dense<0.000000e+00> : vector<8x384xf32>
    %303 = tpu.matmul %302, %13, %cst_94 {dimension_numbers = #tpu.dot_dimension_numbers<[1], [0], [0], [1], [0, 0, 1, 1], [], []>} : vector<8x128xbf16>, vector<128x384xbf16>, vector<8x384xf32> -> vector<8x384xf32>
    %304 = vector.broadcast %15 : vector<1x384xf32> to vector<8x384xf32>
    %305 = arith.addf %303, %304 : vector<8x384xf32>
    %306 = vector.extract_strided_slice %298 {offsets = [0, 0], sizes = [8, 128], strides = [1, 1]} : vector<8x384xf32> to vector<8x128xf32>
    %307 = vector.extract_strided_slice %305 {offsets = [0, 0], sizes = [8, 128], strides = [1, 1]} : vector<8x384xf32> to vector<8x128xf32>
    %308 = arith.addf %306, %307 : vector<8x128xf32>
    %309 = arith.negf %308 : vector<8x128xf32>
    %310 = math.exp %309 : vector<8x128xf32>
    %cst_95 = arith.constant 1.000000e+00 : f32
    %311 = vector.broadcast %cst_95 : f32 to vector<8x128xf32>
    %312 = arith.addf %311, %310 : vector<8x128xf32>
    %313 = arith.divf %311, %312 : vector<8x128xf32>
    %314 = vector.extract_strided_slice %298 {offsets = [0, 128], sizes = [8, 128], strides = [1, 1]} : vector<8x384xf32> to vector<8x128xf32>
    %315 = vector.extract_strided_slice %305 {offsets = [0, 128], sizes = [8, 128], strides = [1, 1]} : vector<8x384xf32> to vector<8x128xf32>
    %316 = arith.addf %314, %315 : vector<8x128xf32>
    %317 = arith.negf %316 : vector<8x128xf32>
    %318 = math.exp %317 : vector<8x128xf32>
    %cst_96 = arith.constant 1.000000e+00 : f32
    %319 = vector.broadcast %cst_96 : f32 to vector<8x128xf32>
    %320 = arith.addf %319, %318 : vector<8x128xf32>
    %321 = arith.divf %319, %320 : vector<8x128xf32>
    %322 = vector.extract_strided_slice %298 {offsets = [0, 256], sizes = [8, 128], strides = [1, 1]} : vector<8x384xf32> to vector<8x128xf32>
    %323 = vector.extract_strided_slice %305 {offsets = [0, 256], sizes = [8, 128], strides = [1, 1]} : vector<8x384xf32> to vector<8x128xf32>
    %324 = arith.mulf %313, %323 : vector<8x128xf32>
    %325 = arith.addf %322, %324 : vector<8x128xf32>
    %326 = math.tanh %325 : vector<8x128xf32>
    %327 = arith.subf %301, %326 : vector<8x128xf32>
    %328 = arith.mulf %321, %327 : vector<8x128xf32>
    %329 = arith.addf %326, %328 : vector<8x128xf32>
    %330 = arith.subf %329, %301 : vector<8x128xf32>
    %331 = vector.broadcast %300 : vector<8x1xf32> to vector<8x128xf32>
    %332 = arith.mulf %331, %330 : vector<8x128xf32>
    %333 = arith.addf %301, %332 : vector<8x128xf32>
    %c0_97 = arith.constant 0 : index
    %c0_98 = arith.constant 0 : index
    %334 = vector.load %arg11[%c0_97, %c0_98] : memref<8x128xf32, #tpu.memory_space<vmem>>, vector<8x128xf32>
    tpu.vector_store %arg11[%c0_97, %c0_98], %333 {strides = array<i32>} : memref<8x128xf32, #tpu.memory_space<vmem>>, vector<8x128xf32>,
    %335 = vector.broadcast %300 : vector<8x1xf32> to vector<8x128xf32>
    %336 = arith.mulf %335, %329 : vector<8x128xf32>
    %337 = arith.index_cast %296 : i32 to index
    %c0_99 = arith.constant 0 : index
    %338 = vector.load %arg10[%337, %c0_99] : memref<64x128xf32, #tpu.memory_space<vmem>>, vector<8x128xf32>
    tpu.vector_store %arg10[%337, %c0_99], %336 {strides = array<i32>} : memref<64x128xf32, #tpu.memory_space<vmem>>, vector<8x128xf32>,
    %c7_i32_100 = arith.constant 7 : i32
    %c7_i32_101 = arith.constant 7 : i32
    %339 = arith.subi %c7_i32_101, %c7_i32_100 : i32
    %340 = arith.select %16, %339, %c7_i32_100 : i32
    %c8_i32_102 = arith.constant 8 : i32
    %341 = arith.muli %340, %c8_i32_102 : i32
    %342 = tpu.assume_multiple %341, 8 : i32
    %343 = arith.index_cast %342 : i32 to index
    %c0_103 = arith.constant 0 : index
    %344 = vector.load %arg9[%343, %c0_103] : memref<64x384xf32, #tpu.memory_space<vmem>>, vector<8x384xf32>
    %345 = arith.index_cast %342 : i32 to index
    %c0_104 = arith.constant 0 : index
    %346 = vector.load %arg3[%345, %c0_104] : memref<64x1xf32, #tpu.memory_space<vmem>>, vector<8x1xf32>
    %c0_105 = arith.constant 0 : index
    %c0_106 = arith.constant 0 : index
    %347 = vector.load %arg11[%c0_105, %c0_106] : memref<8x128xf32, #tpu.memory_space<vmem>>, vector<8x128xf32>
    %348 = arith.truncf %347 : vector<8x128xf32> to vector<8x128xbf16>
    %cst_107 = arith.constant dense<0.000000e+00> : vector<8x384xf32>
    %349 = tpu.matmul %348, %13, %cst_107 {dimension_numbers = #tpu.dot_dimension_numbers<[1], [0], [0], [1], [0, 0, 1, 1], [], []>} : vector<8x128xbf16>, vector<128x384xbf16>, vector<8x384xf32> -> vector<8x384xf32>
    %350 = vector.broadcast %15 : vector<1x384xf32> to vector<8x384xf32>
    %351 = arith.addf %349, %350 : vector<8x384xf32>
    %352 = vector.extract_strided_slice %344 {offsets = [0, 0], sizes = [8, 128], strides = [1, 1]} : vector<8x384xf32> to vector<8x128xf32>
    %353 = vector.extract_strided_slice %351 {offsets = [0, 0], sizes = [8, 128], strides = [1, 1]} : vector<8x384xf32> to vector<8x128xf32>
    %354 = arith.addf %352, %353 : vector<8x128xf32>
    %355 = arith.negf %354 : vector<8x128xf32>
    %356 = math.exp %355 : vector<8x128xf32>
    %cst_108 = arith.constant 1.000000e+00 : f32
    %357 = vector.broadcast %cst_108 : f32 to vector<8x128xf32>
    %358 = arith.addf %357, %356 : vector<8x128xf32>
    %359 = arith.divf %357, %358 : vector<8x128xf32>
    %360 = vector.extract_strided_slice %344 {offsets = [0, 128], sizes = [8, 128], strides = [1, 1]} : vector<8x384xf32> to vector<8x128xf32>
    %361 = vector.extract_strided_slice %351 {offsets = [0, 128], sizes = [8, 128], strides = [1, 1]} : vector<8x384xf32> to vector<8x128xf32>
    %362 = arith.addf %360, %361 : vector<8x128xf32>
    %363 = arith.negf %362 : vector<8x128xf32>
    %364 = math.exp %363 : vector<8x128xf32>
    %cst_109 = arith.constant 1.000000e+00 : f32
    %365 = vector.broadcast %cst_109 : f32 to vector<8x128xf32>
    %366 = arith.addf %365, %364 : vector<8x128xf32>
    %367 = arith.divf %365, %366 : vector<8x128xf32>
    %368 = vector.extract_strided_slice %344 {offsets = [0, 256], sizes = [8, 128], strides = [1, 1]} : vector<8x384xf32> to vector<8x128xf32>
    %369 = vector.extract_strided_slice %351 {offsets = [0, 256], sizes = [8, 128], strides = [1, 1]} : vector<8x384xf32> to vector<8x128xf32>
    %370 = arith.mulf %359, %369 : vector<8x128xf32>
    %371 = arith.addf %368, %370 : vector<8x128xf32>
    %372 = math.tanh %371 : vector<8x128xf32>
    %373 = arith.subf %347, %372 : vector<8x128xf32>
    %374 = arith.mulf %367, %373 : vector<8x128xf32>
    %375 = arith.addf %372, %374 : vector<8x128xf32>
    %376 = arith.subf %375, %347 : vector<8x128xf32>
    %377 = vector.broadcast %346 : vector<8x1xf32> to vector<8x128xf32>
    %378 = arith.mulf %377, %376 : vector<8x128xf32>
    %379 = arith.addf %347, %378 : vector<8x128xf32>
    %c0_110 = arith.constant 0 : index
    %c0_111 = arith.constant 0 : index
    %380 = vector.load %arg11[%c0_110, %c0_111] : memref<8x128xf32, #tpu.memory_space<vmem>>, vector<8x128xf32>
    tpu.vector_store %arg11[%c0_110, %c0_111], %379 {strides = array<i32>} : memref<8x128xf32, #tpu.memory_space<vmem>>, vector<8x128xf32>,
    %381 = vector.broadcast %346 : vector<8x1xf32> to vector<8x128xf32>
    %382 = arith.mulf %381, %375 : vector<8x128xf32>
    %383 = arith.index_cast %342 : i32 to index
    %c0_112 = arith.constant 0 : index
    %384 = vector.load %arg10[%383, %c0_112] : memref<64x128xf32, #tpu.memory_space<vmem>>, vector<8x128xf32>
    tpu.vector_store %arg10[%383, %c0_112], %382 {strides = array<i32>} : memref<64x128xf32, #tpu.memory_space<vmem>>, vector<8x128xf32>,
    %c8_i32_113 = arith.constant 8 : i32
    %c0_114 = arith.constant 0 : index
    %c0_115 = arith.constant 0 : index
    %385 = vector.load %arg10[%c0_114, %c0_115] : memref<64x128xf32, #tpu.memory_space<vmem>>, vector<64x128xf32>
    %386 = arith.truncf %385 : vector<64x128xf32> to vector<64x128xbf16>
    %c0_116 = arith.constant 0 : index
    %c0_117 = arith.constant 0 : index
    %387 = vector.load %arg8[%c0_116, %c0_117] : memref<64x128xbf16, #tpu.memory_space<vmem>>, vector<64x128xbf16>
    tpu.vector_store %arg8[%c0_116, %c0_117], %386 {strides = array<i32>} : memref<64x128xbf16, #tpu.memory_space<vmem>>, vector<64x128xbf16>,
    return
  }
  func.func @transform_0(%arg0: i32, %arg1: i32) -> (i32, i32) {
    %c2_i32 = arith.constant 2 : i32
    %0 = arith.muli %c2_i32, %arg1 : i32
    %c0_i32 = arith.constant 0 : i32
    %1 = arith.subi %c0_i32, %0 : i32
    %2 = arith.muli %arg0, %1 : i32
    %3 = arith.addi %arg1, %2 : i32
    %c0_i32_0 = arith.constant 0 : i32
    %c0_i32_1 = arith.constant 0 : i32
    return %3, %c0_i32_0 : i32, i32
  }
  func.func @transform_1(%arg0: i32, %arg1: i32) -> (i32, i32) {
    %c2_i32 = arith.constant 2 : i32
    %0 = arith.muli %c2_i32, %arg1 : i32
    %c0_i32 = arith.constant 0 : i32
    %1 = arith.subi %c0_i32, %0 : i32
    %2 = arith.muli %arg0, %1 : i32
    %3 = arith.addi %arg1, %2 : i32
    %c0_i32_0 = arith.constant 0 : i32
    %c0_i32_1 = arith.constant 0 : i32
    return %3, %c0_i32_0 : i32, i32
  }
  func.func @transform_2(%arg0: i32, %arg1: i32) -> (i32, i32, i32) {
    %c0_i32 = arith.constant 0 : i32
    %c0_i32_0 = arith.constant 0 : i32
    %c0_i32_1 = arith.constant 0 : i32
    return %arg0, %c0_i32, %c0_i32_0 : i32, i32, i32
  }
  func.func @transform_3(%arg0: i32, %arg1: i32) -> (i32, i32, i32) {
    %c0_i32 = arith.constant 0 : i32
    %c0_i32_0 = arith.constant 0 : i32
    %c0_i32_1 = arith.constant 0 : i32
    return %arg0, %c0_i32, %c0_i32_0 : i32, i32, i32
  }
  func.func @transform_4(%arg0: i32, %arg1: i32) -> (i32, i32, i32) {
    %c0_i32 = arith.constant 0 : i32
    %c0_i32_0 = arith.constant 0 : i32
    %c0_i32_1 = arith.constant 0 : i32
    return %arg0, %c0_i32, %c0_i32_0 : i32, i32, i32
  }
  func.func @transform_5(%arg0: i32, %arg1: i32) -> (i32, i32, i32) {
    %c0_i32 = arith.constant 0 : i32
    %c0_i32_0 = arith.constant 0 : i32
    %c0_i32_1 = arith.constant 0 : i32
    return %arg0, %c0_i32, %c0_i32_0 : i32, i32, i32
  }
  func.func @transform_6(%arg0: i32, %arg1: i32) -> (i32, i32) {
    %c2_i32 = arith.constant 2 : i32
    %0 = arith.muli %c2_i32, %arg1 : i32
    %c0_i32 = arith.constant 0 : i32
    %1 = arith.subi %c0_i32, %0 : i32
    %2 = arith.muli %arg0, %1 : i32
    %3 = arith.addi %arg1, %2 : i32
    %c0_i32_0 = arith.constant 0 : i32
    return %3, %arg0 : i32, i32
  }
}

</mosaic_0001>

<llo_original>
// kernel: _bigru_core.5
$region0: #{_bigru_core.5}
  #allocation0 [shape = 'u32[]', space=smem, size = 0x4, offset = 0x4, fixed_abs, tag = 'smem constant byte address 0x4 - core index']
  #allocation1 [shape = 'u32[72,128]{1,0:T(1,128)}', space=vmem, size = 0x9000, scoped, tag = 'internal scratch']
  %s0 = inlined_call_operand.vmem [shape: bf16[256,256], index: 0, kind: input, shape index: {}]
  %s1 = inlined_call_operand.vmem [shape: bf16[256,128], index: 1, kind: input, shape index: {}]
  %s2 = inlined_call_operand.vmem [shape: f32[1,128], index: 2, kind: input, shape index: {}]
  %s3 = inlined_call_operand.vmem [shape: f32[256,128], index: 3, kind: output, shape index: {}]
  %s4 = sld [smem:[#allocation0]]
  $region22: #{_bigru_core.5} parent=0
    _
  %s6 = ssub.s32 1, %s4
  %s7 = scalar_select 0, %s6, %s4
  // Predicated region
  $region2: #{_bigru_core.5} parent=0 // pred_check
    _
  $region3: #{_bigru_core.5} parent=0 // pred_check_branch
    %9 = sbr.rel (0) target = $region5
  $region4: #{_bigru_core.5} parent=0 // pred_region
    _
  $region5: #{_bigru_core.5} parent=0 // pred_fallthru
    _
  // Predicated region
  $region6: #{_bigru_core.5} parent=0 // pred_check
    _
  $region7: #{_bigru_core.5} parent=0 // pred_check_branch
    %11 = sbr.rel (0) target = $region9
  $region8: #{_bigru_core.5} parent=0 // pred_region
    _
  $region9: #{_bigru_core.5} parent=0 // pred_fallthru
    _
  // Predicated region
  $region10: #{_bigru_core.5} parent=0 // pred_check
    _
  $region11: #{_bigru_core.5} parent=0 // pred_check_branch
    %13 = sbr.rel (0) target = $region13
  $region12: #{_bigru_core.5} parent=0 // pred_region
    _
  $region13: #{_bigru_core.5} parent=0 // pred_fallthru
    _
  %v14 = vld [vmem:[%s0] sm:$0xff]
  %v15 = vld [vmem:[%s0 + $0x8] sm:$0xff]
  %v16 = vld [vmem:[%s0 + $0x10] sm:$0xff]
  %v17 = vld [vmem:[%s0 + $0x18] sm:$0xff]
  %v18 = vld [vmem:[%s0 + $0x20] sm:$0xff]
  %v19 = vld [vmem:[%s0 + $0x28] sm:$0xff]
  %v20 = vld [vmem:[%s0 + $0x30] sm:$0xff]
  %v21 = vld [vmem:[%s0 + $0x38] sm:$0xff]
  %v22 = vld [vmem:[%s0 + $0x40] sm:$0xff]
  %v23 = vld [vmem:[%s0 + $0x48] sm:$0xff]
  %v24 = vld [vmem:[%s0 + $0x50] sm:$0xff]
  %v25 = vld [vmem:[%s0 + $0x58] sm:$0xff]
  %v26 = vld [vmem:[%s0 + $0x60] sm:$0xff]
  %v27 = vld [vmem:[%s0 + $0x68] sm:$0xff]
  %v28 = vld [vmem:[%s0 + $0x70] sm:$0xff]
  %v29 = vld [vmem:[%s0 + $0x78] sm:$0xff]
  %v30 = vld [vmem:[%s0 + $0x80] sm:$0xff]
  %v31 = vld [vmem:[%s0 + $0x88] sm:$0xff]
  %v32 = vld [vmem:[%s0 + $0x90] sm:$0xff]
  %v33 = vld [vmem:[%s0 + $0x98] sm:$0xff]
  %v34 = vld [vmem:[%s0 + $0xa0] sm:$0xff]
  %v35 = vld [vmem:[%s0 + $0xa8] sm:$0xff]
  %v36 = vld [vmem:[%s0 + $0xb0] sm:$0xff]
  %v37 = vld [vmem:[%s0 + $0xb8] sm:$0xff]
  %v38 = vld [vmem:[%s0 + $0xc0] sm:$0xff]
  %v39 = vld [vmem:[%s0 + $0xc8] sm:$0xff]
  %v40 = vld [vmem:[%s0 + $0xd0] sm:$0xff]
  %v41 = vld [vmem:[%s0 + $0xd8] sm:$0xff]
  %v42 = vld [vmem:[%s0 + $0xe0] sm:$0xff]
  %v43 = vld [vmem:[%s0 + $0xe8] sm:$0xff]
  %v44 = vld [vmem:[%s0 + $0xf0] sm:$0xff]
  %v45 = vld [vmem:[%s0 + $0xf8] sm:$0xff]
  %v46 = vld [vmem:[%s1] sm:$0xf]
  %v47 = vld [vmem:[%s1 + $0x4] sm:$0xf]
  %v48 = vld [vmem:[%s1 + $0x8] sm:$0xf]
  %v49 = vld [vmem:[%s1 + $0xc] sm:$0xf]
  %v50 = vld [vmem:[%s1 + $0x10] sm:$0xf]
  %v51 = vld [vmem:[%s1 + $0x14] sm:$0xf]
  %v52 = vld [vmem:[%s1 + $0x18] sm:$0xf]
  %v53 = vld [vmem:[%s1 + $0x1c] sm:$0xf]
  %v54 = vld [vmem:[%s1 + $0x20] sm:$0xf]
  %v55 = vld [vmem:[%s1 + $0x24] sm:$0xf]
  %v56 = vld [vmem:[%s1 + $0x28] sm:$0xf]
  %v57 = vld [vmem:[%s1 + $0x2c] sm:$0xf]
  %v58 = vld [vmem:[%s1 + $0x30] sm:$0xf]
  %v59 = vld [vmem:[%s1 + $0x34] sm:$0xf]
  %v60 = vld [vmem:[%s1 + $0x38] sm:$0xf]
  %v61 = vld [vmem:[%s1 + $0x3c] sm:$0xf]
  %v62 = vld [vmem:[%s1 + $0x40] sm:$0xf]
  %v63 = vld [vmem:[%s1 + $0x44] sm:$0xf]
  %v64 = vld [vmem:[%s1 + $0x48] sm:$0xf]
  %v65 = vld [vmem:[%s1 + $0x4c] sm:$0xf]
  %v66 = vld [vmem:[%s1 + $0x50] sm:$0xf]
  %v67 = vld [vmem:[%s1 + $0x54] sm:$0xf]
  %v68 = vld [vmem:[%s1 + $0x58] sm:$0xf]
  %v69 = vld [vmem:[%s1 + $0x5c] sm:$0xf]
  %v70 = vld [vmem:[%s1 + $0x60] sm:$0xf]
  %v71 = vld [vmem:[%s1 + $0x64] sm:$0xf]
  %v72 = vld [vmem:[%s1 + $0x68] sm:$0xf]
  %v73 = vld [vmem:[%s1 + $0x6c] sm:$0xf]
  %v74 = vld [vmem:[%s1 + $0x70] sm:$0xf]
  %v75 = vld [vmem:[%s1 + $0x74] sm:$0xf]
  %v76 = vld [vmem:[%s1 + $0x78] sm:$0xf]
  %v77 = vld [vmem:[%s1 + $0x7c] sm:$0xf]
  %v78 = vld [vmem:[%s2] sm:$0x1]
  %v80 = vperm.slane %v78, 0
  %v114 = vunpack.c.l.b16 %v14
  %v115 = vunpack.c.h.b16 %v14
  %v116 = vunpack.c.l.b16 %v15
  %v117 = vunpack.c.h.b16 %v15
  %v118 = vunpack.c.l.b16 %v16
  %v119 = vunpack.c.h.b16 %v16
  %v120 = vunpack.c.l.b16 %v17
  %v121 = vunpack.c.h.b16 %v17
  %v122 = vunpack.c.l.b16 %v18
  %v123 = vunpack.c.h.b16 %v18
  %v124 = vunpack.c.l.b16 %v19
  %v125 = vunpack.c.h.b16 %v19
  %v126 = vunpack.c.l.b16 %v20
  %v127 = vunpack.c.h.b16 %v20
  %v128 = vunpack.c.l.b16 %v21
  %v129 = vunpack.c.h.b16 %v21
  %v130 = vunpack.c.l.b16 %v22
  %v131 = vunpack.c.h.b16 %v22
  %v132 = vunpack.c.l.b16 %v23
  %v133 = vunpack.c.h.b16 %v23
  %v134 = vunpack.c.l.b16 %v24
  %v135 = vunpack.c.h.b16 %v24
  %v136 = vunpack.c.l.b16 %v25
  %v137 = vunpack.c.h.b16 %v25
  %v138 = vunpack.c.l.b16 %v26
  %v139 = vunpack.c.h.b16 %v26
  %v140 = vunpack.c.l.b16 %v27
  %v141 = vunpack.c.h.b16 %v27
  %v142 = vunpack.c.l.b16 %v28
  %v143 = vunpack.c.h.b16 %v28
  %v144 = vunpack.c.l.b16 %v29
  %v145 = vunpack.c.h.b16 %v29
  %v146 = vunpack.c.l.b16 %v30
  %v147 = vunpack.c.h.b16 %v30
  %v148 = vunpack.c.l.b16 %v31
  %v149 = vunpack.c.h.b16 %v31
  %v150 = vunpack.c.l.b16 %v32
  %v151 = vunpack.c.h.b16 %v32
  %v152 = vunpack.c.l.b16 %v33
  %v153 = vunpack.c.h.b16 %v33
  %v154 = vunpack.c.l.b16 %v34
  %v155 = vunpack.c.h.b16 %v34
  %v156 = vunpack.c.l.b16 %v35
  %v157 = vunpack.c.h.b16 %v35
  %v158 = vunpack.c.l.b16 %v36
  %v159 = vunpack.c.h.b16 %v36
  %v160 = vunpack.c.l.b16 %v37
  %v161 = vunpack.c.h.b16 %v37
  %v162 = vunpack.c.l.b16 %v38
  %v163 = vunpack.c.h.b16 %v38
  %v164 = vunpack.c.l.b16 %v39
  %v165 = vunpack.c.h.b16 %v39
  %v166 = vunpack.c.l.b16 %v40
  %v167 = vunpack.c.h.b16 %v40
  %v168 = vunpack.c.l.b16 %v41
  %v169 = vunpack.c.h.b16 %v41
  %v170 = vunpack.c.l.b16 %v42
  %v171 = vunpack.c.h.b16 %v42
  %v172 = vunpack.c.l.b16 %v43
  %v173 = vunpack.c.h.b16 %v43
  %v174 = vunpack.c.l.b16 %v44
  %v175 = vunpack.c.h.b16 %v44
  %v176 = vunpack.c.l.b16 %v45
  %v177 = vunpack.c.h.b16 %v45
  %v178 = vpack.c.b16 %v116, %v114
  %v179 = vpack.c.b16 %v117, %v115
  %v180 = vpack.c.b16 %v120, %v118
  %v181 = vpack.c.b16 %v121, %v119
  %v182 = vpack.c.b16 %v124, %v122
  %v183 = vpack.c.b16 %v125, %v123
  %v184 = vpack.c.b16 %v128, %v126
  %v185 = vpack.c.b16 %v129, %v127
  %v186 = vpack.c.b16 %v132, %v130
  %v187 = vpack.c.b16 %v133, %v131
  %v188 = vpack.c.b16 %v136, %v134
  %v189 = vpack.c.b16 %v137, %v135
  %v190 = vpack.c.b16 %v140, %v138
  %v191 = vpack.c.b16 %v141, %v139
  %v192 = vpack.c.b16 %v144, %v142
  %v193 = vpack.c.b16 %v145, %v143
  %v194 = vpack.c.b16 %v148, %v146
  %v195 = vpack.c.b16 %v149, %v147
  %v196 = vpack.c.b16 %v152, %v150
  %v197 = vpack.c.b16 %v153, %v151
  %v198 = vpack.c.b16 %v156, %v154
  %v199 = vpack.c.b16 %v157, %v155
  %v200 = vpack.c.b16 %v160, %v158
  %v201 = vpack.c.b16 %v161, %v159
  %v202 = vpack.c.b16 %v164, %v162
  %v203 = vpack.c.b16 %v165, %v163
  %v204 = vpack.c.b16 %v168, %v166
  %v205 = vpack.c.b16 %v169, %v167
  %v206 = vpack.c.b16 %v172, %v170
  %v207 = vpack.c.b16 %v173, %v171
  %v208 = vpack.c.b16 %v176, %v174
  %v209 = vpack.c.b16 %v177, %v175
  %v274 = vunpack.c.l.b16 %v46
  %v275 = vunpack.c.l.b16 %v47
  %v276 = vunpack.c.l.b16 %v48
  %v277 = vunpack.c.l.b16 %v49
  %v278 = vunpack.c.l.b16 %v50
  %v279 = vunpack.c.l.b16 %v51
  %v280 = vunpack.c.l.b16 %v52
  %v281 = vunpack.c.l.b16 %v53
  %v282 = vunpack.c.l.b16 %v54
  %v283 = vunpack.c.l.b16 %v55
  %v284 = vunpack.c.l.b16 %v56
  %v285 = vunpack.c.l.b16 %v57
  %v286 = vunpack.c.l.b16 %v58
  %v287 = vunpack.c.l.b16 %v59
  %v288 = vunpack.c.l.b16 %v60
  %v289 = vunpack.c.l.b16 %v61
  %v290 = vunpack.c.l.b16 %v62
  %v291 = vunpack.c.l.b16 %v63
  %v292 = vunpack.c.l.b16 %v64
  %v293 = vunpack.c.l.b16 %v65
  %v294 = vunpack.c.l.b16 %v66
  %v295 = vunpack.c.l.b16 %v67
  %v296 = vunpack.c.l.b16 %v68
  %v297 = vunpack.c.l.b16 %v69
  %v298 = vunpack.c.l.b16 %v70
  %v299 = vunpack.c.l.b16 %v71
  %v300 = vunpack.c.l.b16 %v72
  %v301 = vunpack.c.l.b16 %v73
  %v302 = vunpack.c.l.b16 %v74
  %v303 = vunpack.c.l.b16 %v75
  %v304 = vunpack.c.l.b16 %v76
  %v305 = vunpack.c.l.b16 %v77
  %v306 = vpack.c.b16 %v275, %v274
  %v307 = vpack.c.b16 %v277, %v276
  %v308 = vpack.c.b16 %v279, %v278
  %v309 = vpack.c.b16 %v281, %v280
  %v310 = vpack.c.b16 %v283, %v282
  %v311 = vpack.c.b16 %v285, %v284
  %v312 = vpack.c.b16 %v287, %v286
  %v313 = vpack.c.b16 %v289, %v288
  %v314 = vpack.c.b16 %v291, %v290
  %v315 = vpack.c.b16 %v293, %v292
  %v316 = vpack.c.b16 %v295, %v294
  %v317 = vpack.c.b16 %v297, %v296
  %v318 = vpack.c.b16 %v299, %v298
  %v319 = vpack.c.b16 %v301, %v300
  %v320 = vpack.c.b16 %v303, %v302
  %v321 = vpack.c.b16 %v305, %v304
  %338 = vmatpush.bf16.msra.mxu0 %v313
  %339 = vmatpush.bf16.msra.mxu0 %v312
  %340 = vmatpush.bf16.msra.mxu0 %v311
  %341 = vmatpush.bf16.msra.mxu0 %v310
  %342 = vmatpush.bf16.msra.mxu0 %v309
  %343 = vmatpush.bf16.msra.mxu0 %v308
  %344 = vmatpush.bf16.msra.mxu0 %v307
  %345 = vmatpush.bf16.msra.mxu0 %v306
  %346 = vmatmul.bf16.gmra.mxu0 %v178
  %v347 = vpop.f32.mrf.mxu0
  %v348 = vadd.f32 %v80, %v347
  %v349 = vpop.f32.mrf.mxu0
  %v350 = vadd.f32 %v80, %v349
  %351 = vmatmul.bf16.gmra.mxu0 %v180
  %v352 = vpop.f32.mrf.mxu0
  %v353 = vadd.f32 %v80, %v352
  %v354 = vpop.f32.mrf.mxu0
  %v355 = vadd.f32 %v80, %v354
  %356 = vmatmul.bf16.gmra.mxu0 %v182
  %v357 = vpop.f32.mrf.mxu0
  %v358 = vadd.f32 %v80, %v357
  %v359 = vpop.f32.mrf.mxu0
  %v360 = vadd.f32 %v80, %v359
  %361 = vmatmul.bf16.gmra.mxu0 %v184
  %v362 = vpop.f32.mrf.mxu0
  %v363 = vadd.f32 %v80, %v362
  %v364 = vpop.f32.mrf.mxu0
  %v365 = vadd.f32 %v80, %v364
  %366 = vmatmul.bf16.gmra.mxu0 %v186
  %v367 = vpop.f32.mrf.mxu0
  %v368 = vadd.f32 %v80, %v367
  %v369 = vpop.f32.mrf.mxu0
  %v370 = vadd.f32 %v80, %v369
  %371 = vmatmul.bf16.gmra.mxu0 %v188
  %v372 = vpop.f32.mrf.mxu0
  %v373 = vadd.f32 %v80, %v372
  %v374 = vpop.f32.mrf.mxu0
  %v375 = vadd.f32 %v80, %v374
  %376 = vmatmul.bf16.gmra.mxu0 %v190
  %v377 = vpop.f32.mrf.mxu0
  %v378 = vadd.f32 %v80, %v377
  %v379 = vpop.f32.mrf.mxu0
  %v380 = vadd.f32 %v80, %v379
  %381 = vmatmul.bf16.gmra.mxu0 %v192
  %v382 = vpop.f32.mrf.mxu0
  %v383 = vadd.f32 %v80, %v382
  %v384 = vpop.f32.mrf.mxu0
  %v385 = vadd.f32 %v80, %v384
  %386 = vmatmul.bf16.gmra.mxu0 %v194
  %v387 = vpop.f32.mrf.mxu0
  %v388 = vadd.f32 %v80, %v387
  %v389 = vpop.f32.mrf.mxu0
  %v390 = vadd.f32 %v80, %v389
  %391 = vmatmul.bf16.gmra.mxu0 %v196
  %v392 = vpop.f32.mrf.mxu0
  %v393 = vadd.f32 %v80, %v392
  %v394 = vpop.f32.mrf.mxu0
  %v395 = vadd.f32 %v80, %v394
  %396 = vmatmul.bf16.gmra.mxu0 %v198
  %v397 = vpop.f32.mrf.mxu0
  %v398 = vadd.f32 %v80, %v397
  %v399 = vpop.f32.mrf.mxu0
  %v400 = vadd.f32 %v80, %v399
  %401 = vmatmul.bf16.gmra.mxu0 %v200
  %v402 = vpop.f32.mrf.mxu0
  %v403 = vadd.f32 %v80, %v402
  %v404 = vpop.f32.mrf.mxu0
  %v405 = vadd.f32 %v80, %v404
  %406 = vmatmul.bf16.gmra.mxu0 %v202
  %v407 = vpop.f32.mrf.mxu0
  %v408 = vadd.f32 %v80, %v407
  %v409 = vpop.f32.mrf.mxu0
  %v410 = vadd.f32 %v80, %v409
  %411 = vmatmul.bf16.gmra.mxu0 %v204
  %v412 = vpop.f32.mrf.mxu0
  %v413 = vadd.f32 %v80, %v412
  %v414 = vpop.f32.mrf.mxu0
  %v415 = vadd.f32 %v80, %v414
  %416 = vmatmul.bf16.gmra.mxu0 %v206
  %v417 = vpop.f32.mrf.mxu0
  %v418 = vadd.f32 %v80, %v417
  %v419 = vpop.f32.mrf.mxu0
  %v420 = vadd.f32 %v80, %v419
  %421 = vmatmul.bf16.gmra.mxu0 %v208
  %v422 = vpop.f32.mrf.mxu0
  %v423 = vadd.f32 %v80, %v422
  %v424 = vpop.f32.mrf.mxu0
  %v425 = vadd.f32 %v80, %v424
  %426 = vdwg.mxu0
  %427 = vmatpush.bf16.msra.mxu0 %v321
  %428 = vmatpush.bf16.msra.mxu0 %v320
  %429 = vmatpush.bf16.msra.mxu0 %v319
  %430 = vmatpush.bf16.msra.mxu0 %v318
  %431 = vmatpush.bf16.msra.mxu0 %v317
  %432 = vmatpush.bf16.msra.mxu0 %v316
  %433 = vmatpush.bf16.msra.mxu0 %v315
  %434 = vmatpush.bf16.msra.mxu0 %v314
  %435 = vmatmul.bf16.gmra.mxu0 %v179
  %v436 = vpop.f32.mrf.mxu0
  %v437 = vadd.f32 %v348, %v436
  %v438 = vpop.f32.mrf.mxu0
  %v439 = vadd.f32 %v350, %v438
  %440 = vmatmul.bf16.gmra.mxu0 %v181
  %v441 = vpop.f32.mrf.mxu0
  %v442 = vadd.f32 %v353, %v441
  %v443 = vpop.f32.mrf.mxu0
  %v444 = vadd.f32 %v355, %v443
  %445 = vmatmul.bf16.gmra.mxu0 %v183
  %v446 = vpop.f32.mrf.mxu0
  %v447 = vadd.f32 %v358, %v446
  %v448 = vpop.f32.mrf.mxu0
  %v449 = vadd.f32 %v360, %v448
  %450 = vmatmul.bf16.gmra.mxu0 %v185
  %v451 = vpop.f32.mrf.mxu0
  %v452 = vadd.f32 %v363, %v451
  %v453 = vpop.f32.mrf.mxu0
  %v454 = vadd.f32 %v365, %v453
  %455 = vmatmul.bf16.gmra.mxu0 %v187
  %v456 = vpop.f32.mrf.mxu0
  %v457 = vadd.f32 %v368, %v456
  %v458 = vpop.f32.mrf.mxu0
  %v459 = vadd.f32 %v370, %v458
  %460 = vmatmul.bf16.gmra.mxu0 %v189
  %v461 = vpop.f32.mrf.mxu0
  %v462 = vadd.f32 %v373, %v461
  %v463 = vpop.f32.mrf.mxu0
  %v464 = vadd.f32 %v375, %v463
  %465 = vmatmul.bf16.gmra.mxu0 %v191
  %v466 = vpop.f32.mrf.mxu0
  %v467 = vadd.f32 %v378, %v466
  %v468 = vpop.f32.mrf.mxu0
  %v469 = vadd.f32 %v380, %v468
  %470 = vmatmul.bf16.gmra.mxu0 %v193
  %v471 = vpop.f32.mrf.mxu0
  %v472 = vadd.f32 %v383, %v471
  %v473 = vpop.f32.mrf.mxu0
  %v474 = vadd.f32 %v385, %v473
  %475 = vmatmul.bf16.gmra.mxu0 %v195
  %v476 = vpop.f32.mrf.mxu0
  %v477 = vadd.f32 %v388, %v476
  %v478 = vpop.f32.mrf.mxu0
  %v479 = vadd.f32 %v390, %v478
  %480 = vmatmul.bf16.gmra.mxu0 %v197
  %v481 = vpop.f32.mrf.mxu0
  %v482 = vadd.f32 %v393, %v481
  %v483 = vpop.f32.mrf.mxu0
  %v484 = vadd.f32 %v395, %v483
  %485 = vmatmul.bf16.gmra.mxu0 %v199
  %v486 = vpop.f32.mrf.mxu0
  %v487 = vadd.f32 %v398, %v486
  %v488 = vpop.f32.mrf.mxu0
  %v489 = vadd.f32 %v400, %v488
  %490 = vmatmul.bf16.gmra.mxu0 %v201
  %v491 = vpop.f32.mrf.mxu0
  %v492 = vadd.f32 %v403, %v491
  %v493 = vpop.f32.mrf.mxu0
  %v494 = vadd.f32 %v405, %v493
  %495 = vmatmul.bf16.gmra.mxu0 %v203
  %v496 = vpop.f32.mrf.mxu0
  %v497 = vadd.f32 %v408, %v496
  %v498 = vpop.f32.mrf.mxu0
  %v499 = vadd.f32 %v410, %v498
  %500 = vmatmul.bf16.gmra.mxu0 %v205
  %v501 = vpop.f32.mrf.mxu0
  %v502 = vadd.f32 %v413, %v501
  %v503 = vpop.f32.mrf.mxu0
  %v504 = vadd.f32 %v415, %v503
  %505 = vmatmul.bf16.gmra.mxu0 %v207
  %v506 = vpop.f32.mrf.mxu0
  %v507 = vadd.f32 %v418, %v506
  %v508 = vpop.f32.mrf.mxu0
  %v509 = vadd.f32 %v420, %v508
  %510 = vmatmul.bf16.gmra.mxu0 %v209
  %v511 = vpop.f32.mrf.mxu0
  %v512 = vadd.f32 %v423, %v511
  %v513 = vpop.f32.mrf.mxu0
  %v514 = vadd.f32 %v425, %v513
  %515 = vdwg.mxu0
  %v516 = vmax.f32 %v437, 0.0
  %v517 = vmax.f32 %v439, 0.0
  %v518 = vmax.f32 %v442, 0.0
  %v519 = vmax.f32 %v444, 0.0
  %v520 = vmax.f32 %v447, 0.0
  %v521 = vmax.f32 %v449, 0.0
  %v522 = vmax.f32 %v452, 0.0
  %v523 = vmax.f32 %v454, 0.0
  %v524 = vmax.f32 %v457, 0.0
  %v525 = vmax.f32 %v459, 0.0
  %v526 = vmax.f32 %v462, 0.0
  %v527 = vmax.f32 %v464, 0.0
  %v528 = vmax.f32 %v467, 0.0
  %v529 = vmax.f32 %v469, 0.0
  %v530 = vmax.f32 %v472, 0.0
  %v531 = vmax.f32 %v474, 0.0
  %v532 = vmax.f32 %v477, 0.0
  %v533 = vmax.f32 %v479, 0.0
  %v534 = vmax.f32 %v482, 0.0
  %v535 = vmax.f32 %v484, 0.0
  %v536 = vmax.f32 %v487, 0.0
  %v537 = vmax.f32 %v489, 0.0
  %v538 = vmax.f32 %v492, 0.0
  %v539 = vmax.f32 %v494, 0.0
  %v540 = vmax.f32 %v497, 0.0
  %v541 = vmax.f32 %v499, 0.0
  %v542 = vmax.f32 %v502, 0.0
  %v543 = vmax.f32 %v504, 0.0
  %v544 = vmax.f32 %v507, 0.0
  %v545 = vmax.f32 %v509, 0.0
  %v546 = vmax.f32 %v512, 0.0
  %v547 = vmax.f32 %v514, 0.0
  %548 = vst [vmem:[%s3] sm:$0xff] %v516
  %549 = vst [vmem:[%s3 + $0x8] sm:$0xff] %v517
  %550 = vst [vmem:[%s3 + $0x10] sm:$0xff] %v518
  %551 = vst [vmem:[%s3 + $0x18] sm:$0xff] %v519
  %552 = vst [vmem:[%s3 + $0x20] sm:$0xff] %v520
  %553 = vst [vmem:[%s3 + $0x28] sm:$0xff] %v521
  %554 = vst [vmem:[%s3 + $0x30] sm:$0xff] %v522
  %555 = vst [vmem:[%s3 + $0x38] sm:$0xff] %v523
  %556 = vst [vmem:[%s3 + $0x40] sm:$0xff] %v524
  %557 = vst [vmem:[%s3 + $0x48] sm:$0xff] %v525
  %558 = vst [vmem:[%s3 + $0x50] sm:$0xff] %v526
  %559 = vst [vmem:[%s3 + $0x58] sm:$0xff] %v527
  %560 = vst [vmem:[%s3 + $0x60] sm:$0xff] %v528
  %561 = vst [vmem:[%s3 + $0x68] sm:$0xff] %v529
  %562 = vst [vmem:[%s3 + $0x70] sm:$0xff] %v530
  %563 = vst [vmem:[%s3 + $0x78] sm:$0xff] %v531
  %564 = vst [vmem:[%s3 + $0x80] sm:$0xff] %v532
  %565 = vst [vmem:[%s3 + $0x88] sm:$0xff] %v533
  %566 = vst [vmem:[%s3 + $0x90] sm:$0xff] %v534
  %567 = vst [vmem:[%s3 + $0x98] sm:$0xff] %v535
  %568 = vst [vmem:[%s3 + $0xa0] sm:$0xff] %v536
  %569 = vst [vmem:[%s3 + $0xa8] sm:$0xff] %v537
  %570 = vst [vmem:[%s3 + $0xb0] sm:$0xff] %v538
  %571 = vst [vmem:[%s3 + $0xb8] sm:$0xff] %v539
  %572 = vst [vmem:[%s3 + $0xc0] sm:$0xff] %v540
  %573 = vst [vmem:[%s3 + $0xc8] sm:$0xff] %v541
  %574 = vst [vmem:[%s3 + $0xd0] sm:$0xff] %v542
  %575 = vst [vmem:[%s3 + $0xd8] sm:$0xff] %v543
  %576 = vst [vmem:[%s3 + $0xe0] sm:$0xff] %v544
  %577 = vst [vmem:[%s3 + $0xe8] sm:$0xff] %v545
  %578 = vst [vmem:[%s3 + $0xf0] sm:$0xff] %v546
  %579 = vst [vmem:[%s3 + $0xf8] sm:$0xff] %v547
  // Predicated region
  $region14: #{_bigru_core.5} parent=0 // pred_check
    _
  $region15: #{_bigru_core.5} parent=0 // pred_check_branch
    %581 = sbr.rel (0) target = $region17
  $region16: #{_bigru_core.5} parent=0 // pred_region
    _
  $region17: #{_bigru_core.5} parent=0 // pred_fallthru
    _
  // Predicated region
  $region18: #{_bigru_core.5} parent=0 // pred_check
    _
  $region19: #{_bigru_core.5} parent=0 // pred_check_branch
    %583 = sbr.rel (0) target = $region21
  $region20: #{_bigru_core.5} parent=0 // pred_region
    _
  $region21: #{_bigru_core.5} parent=0 // pred_fallthru
    _

// kernel: _bigru_core.3
$region0: #{_bigru_core.3}
  #allocation0 [shape = 'u32[]', space=smem, size = 0x4, offset = 0x4, fixed_abs, tag = 'smem constant byte address 0x4 - core index']
  #allocation1 [shape = 'u32[72,128]{1,0:T(1,128)}', space=vmem, size = 0x9000, scoped, tag = 'internal scratch']
  #allocation2 [shape = 'f32[64,384]{1,0:T(8,128)}', space=vmem, size = 0x18000, scoped, tag = 'scratch operand']
  #allocation3 [shape = 'f32[64,128]{1,0:T(8,128)}', space=vmem, size = 0x8000, scoped, tag = 'scratch operand']
  #allocation4 [shape = 'f32[8,128]{1,0:T(8,128)}', space=vmem, size = 0x1000, scoped, tag = 'scratch operand']
  %s0 = inlined_call_operand.vmem [shape: bf16[64,128], index: 0, kind: input, shape index: {}]
  %s1 = inlined_call_operand.vmem [shape: f32[64,1], index: 1, kind: input, shape index: {}]
  %s2 = inlined_call_operand.hbm [shape: bf16[2,128,384], index: 2, kind: input, shape index: {}]
  %s3 = inlined_call_operand.hbm [shape: bf16[2,128,384], index: 3, kind: input, shape index: {}]
  %s4 = inlined_call_operand.vmem [shape: f32[2,1,384], index: 4, kind: input, shape index: {}]
  %s5 = inlined_call_operand.vmem [shape: f32[2,1,384], index: 5, kind: input, shape index: {}]
  %s6 = inlined_call_operand.vmem [shape: bf16[64,256], index: 6, kind: output, shape index: {}]
  %s7 = sld [smem:[#allocation0]]
  $region106: #{_bigru_core.3} parent=0
    _
  %s9 = ssub.s32 1, %s7
  %s10 = scalar_select 0, %s9, %s7
  $region1: #{_bigru_core.3} parent=0
    #allocation5 [shape = 'u8[196608]{0}', space=vmem, size = 0x30000, scoped, tag = 'input window, operand 2']
    #allocation6 [shape = 's32[2]{0}', space=sflag, size = 0x8, scoped, tag = 'scoped memory for _bigru_core.3']
    #allocation7 [shape = 'u8[196608]{0}', space=vmem, size = 0x30000, scoped, tag = 'input window, operand 3']
    #allocation8 [shape = 's32[2]{0}', space=sflag, size = 0x8, scoped, tag = 'scoped memory for _bigru_core.3']
    #allocation9 [shape = 'u8[32768]{0}', space=vmem, size = 0x8000, scoped, tag = 'output window, operand 0']
    %11 = vsyncpa [#allocation6], 0
    %s12 = scalar_lea.sflag [#allocation6], 1
    %13 = vsyncpa %s12, 0
    %14 = vsyncpa [#allocation8], 0
    %s15 = scalar_lea.sflag [#allocation8], 1
    %16 = vsyncpa %s15, 0
    loop: start=0, step=1, limit=4
    $region2: #{_bigru_core.3} parent=1 // loop_pre_header
      _
    $region3: #{_bigru_core.3} parent=1 // loop_header
      %s18 = sphi 0, %s22
      %p19 = scmp.ge.s32.totalorder %s18, 4
      %s25 = sphi 0, %s37
      %s26 = sphi 0, %s33
      %s27 = sphi 0, %s25
      %s28 = sphi 0, %s26
      %s29 = sphi 0, %s27
      %s30 = sphi 0, %s28
      %s48 = sphi 0, %s50
      %s51 = sphi 0, %s48
      %s52 = sphi 0, %s51
      %s68 = sphi 0, %s52
      %s82 = sphi 0, %s84
      %s85 = sphi 0, %s82
      %s86 = sphi 0, %s85
      %s102 = sphi 0, %s86
      %s108 = sphi 0, %s110
      %s111 = sphi 0, %s108
      %s112 = sphi 0, %s111
      %s128 = sphi 0, %s112
      %s134 = sphi 0, %s136
      %s137 = sphi 0, %s134
      %s138 = sphi 0, %s137
      %s154 = sphi 0, %s138
      %s160 = sphi 0, %s162
      %s163 = sphi 0, %s160
      %s164 = sphi 0, %s163
      %s180 = sphi 0, %s164
      %s186 = sphi 0, %s188
      %s189 = sphi 0, %s186
      %s190 = sphi 0, %s189
      %s206 = sphi 0, %s190
      %s222 = sphi 0, %s224
      %s225 = sphi 0, %s222
      %s226 = sphi 0, %s225
      %s242 = sphi 0, %s226
    $region4: #{_bigru_core.3} parent=1 // loop_header_branch
      %21 = sbr.rel (%p19) target = $region8
    $region5: #{_bigru_core.3} parent=1 // loop_body
      %s23 = ssub.s32 %s18, 1
      %s24 = ssub.s32 %s18, 2
      %s31 = sadd.s32 1, %s26
      %p32 = scmp.ge.s32.totalorder %s31, 1
      %s33 = scalar_select %p32, 0, %s31
      %s34 = sadd.s32 1, %s25
      %s35 = scalar_select %p32, %s34, %s25
      %p36 = scmp.ge.s32.totalorder %s35, 2
      %s37 = scalar_select %p36, 0, %s35
      %s38 = smul.u32 %s26, 2
      %s39 = ssub.s32 0, %s38
      %s40 = smul.u32 %s25, %s39
      %s41 = sadd.s32 %s26, %s40
      %s42 = smul.u32 %s33, 2
      %s43 = ssub.s32 0, %s42
      %s44 = smul.u32 %s37, %s43
      %s45 = sadd.s32 %s33, %s44
      %s46 = ssub.s32 %s41, %s45
      %p47 = scmp.eq.s32.totalorder %s46, 0
      %s49 = sadd.s32 %s48, 1
      %s50 = scalar_select %p47, %s48, %s49
      %p53 = pneg %p47
      %p54 = scmp.eq.s32.totalorder %s18, 1
      %p55 = por %p53, %p54
      %p56 = scmp.ne.s32.totalorder %s48, %s51
      %p57 = scmp.eq.s32.totalorder %s18, 0
      %p58 = por %p56, %p57
      %p59 = scmp.ne.s32.totalorder %s48, %s51
      %p60 = scmp.eq.s32.totalorder %s23, 1
      %p61 = por %p59, %p60
      %p62 = scmp.ne.s32.totalorder %s51, %s52
      %p63 = scmp.eq.s32.totalorder %s23, 0
      %p64 = por %p62, %p63
      %p65 = scmp.ne.s32.totalorder %s51, %s52
      %p66 = scmp.eq.s32.totalorder %s24, 1
      %p67 = por %p65, %p66
      %p69 = scmp.ne.s32.totalorder %s52, %s68
      %p70 = scmp.eq.s32.totalorder %s24, 0
      %p71 = por %p69, %p70
      %s72 = smul.u32 %s26, 2
      %s73 = ssub.s32 0, %s72
      %s74 = smul.u32 %s25, %s73
      %s75 = sadd.s32 %s26, %s74
      %s76 = smul.u32 %s33, 2
      %s77 = ssub.s32 0, %s76
      %s78 = smul.u32 %s37, %s77
      %s79 = sadd.s32 %s33, %s78
      %s80 = ssub.s32 %s75, %s79
      %p81 = scmp.eq.s32.totalorder %s80, 0
      %s83 = sadd.s32 %s82, 1
      %s84 = scalar_select %p81, %s82, %s83
      %p87 = pneg %p81
      %p88 = scmp.eq.s32.totalorder %s18, 1
      %p89 = por %p87, %p88
      %p90 = scmp.ne.s32.totalorder %s82, %s85
      %p91 = scmp.eq.s32.totalorder %s18, 0
      %p92 = por %p90, %p91
      %p93 = scmp.ne.s32.totalorder %s82, %s85
      %p94 = scmp.eq.s32.totalorder %s23, 1
      %p95 = por %p93, %p94
      %p96 = scmp.ne.s32.totalorder %s85, %s86
      %p97 = scmp.eq.s32.totalorder %s23, 0
      %p98 = por %p96, %p97
      %p99 = scmp.ne.s32.totalorder %s85, %s86
      %p100 = scmp.eq.s32.totalorder %s24, 1
      %p101 = por %p99, %p100
      %p103 = scmp.ne.s32.totalorder %s86, %s102
      %p104 = scmp.eq.s32.totalorder %s24, 0
      %p105 = por %p103, %p104
      %s106 = ssub.s32 %s25, %s37
      %p107 = scmp.eq.s32.totalorder %s106, 0
      %s109 = sadd.s32 %s108, 1
      %s110 = scalar_select %p107, %s108, %s109
      %p113 = pneg %p107
      %p114 = scmp.eq.s32.totalorder %s18, 1
      %p115 = por %p113, %p114
      %p116 = scmp.ne.s32.totalorder %s108, %s111
      %p117 = scmp.eq.s32.totalorder %s18, 0
      %p118 = por %p116, %p117
      %p119 = scmp.ne.s32.totalorder %s108, %s111
      %p120 = scmp.eq.s32.totalorder %s23, 1
      %p121 = por %p119, %p120
      %p122 = scmp.ne.s32.totalorder %s111, %s112
      %p123 = scmp.eq.s32.totalorder %s23, 0
      %p124 = por %p122, %p123
      %p125 = scmp.ne.s32.totalorder %s111, %s112
      %p126 = scmp.eq.s32.totalorder %s24, 1
      %p127 = por %p125, %p126
      %p129 = scmp.ne.s32.totalorder %s112, %s128
      %p130 = scmp.eq.s32.totalorder %s24, 0
      %p131 = por %p129, %p130
      %s132 = ssub.s32 %s25, %s37
      %p133 = scmp.eq.s32.totalorder %s132, 0
      %s135 = sadd.s32 %s134, 1
      %s136 = scalar_select %p133, %s134, %s135
      %p139 = pneg %p133
      %p140 = scmp.eq.s32.totalorder %s18, 1
      %p141 = por %p139, %p140
      %p142 = scmp.ne.s32.totalorder %s134, %s137
      %p143 = scmp.eq.s32.totalorder %s18, 0
      %p144 = por %p142, %p143
      %p145 = scmp.ne.s32.totalorder %s134, %s137
      %p146 = scmp.eq.s32.totalorder %s23, 1
      %p147 = por %p145, %p146
      %p148 = scmp.ne.s32.totalorder %s137, %s138
      %p149 = scmp.eq.s32.totalorder %s23, 0
      %p150 = por %p148, %p149
      %p151 = scmp.ne.s32.totalorder %s137, %s138
      %p152 = scmp.eq.s32.totalorder %s24, 1
      %p153 = por %p151, %p152
      %p155 = scmp.ne.s32.totalorder %s138, %s154
      %p156 = scmp.eq.s32.totalorder %s24, 0
      %p157 = por %p155, %p156
      %s158 = ssub.s32 %s25, %s37
      %p159 = scmp.eq.s32.totalorder %s158, 0
      %s161 = sadd.s32 %s160, 1
      %s162 = scalar_select %p159, %s160, %s161
      %p165 = pneg %p159
      %p166 = scmp.eq.s32.totalorder %s18, 1
      %p167 = por %p165, %p166
      %p168 = scmp.ne.s32.totalorder %s160, %s163
      %p169 = scmp.eq.s32.totalorder %s18, 0
      %p170 = por %p168, %p169
      %p171 = scmp.ne.s32.totalorder %s160, %s163
      %p172 = scmp.eq.s32.totalorder %s23, 1
      %p173 = por %p171, %p172
      %p174 = scmp.ne.s32.totalorder %s163, %s164
      %p175 = scmp.eq.s32.totalorder %s23, 0
      %p176 = por %p174, %p175
      %p177 = scmp.ne.s32.totalorder %s163, %s164
      %p178 = scmp.eq.s32.totalorder %s24, 1
      %p179 = por %p177, %p178
      %p181 = scmp.ne.s32.totalorder %s164, %s180
      %p182 = scmp.eq.s32.totalorder %s24, 0
      %p183 = por %p181, %p182
      %s184 = ssub.s32 %s25, %s37
      %p185 = scmp.eq.s32.totalorder %s184, 0
      %s187 = sadd.s32 %s186, 1
      %s188 = scalar_select %p185, %s186, %s187
      %p191 = pneg %p185
      %p192 = scmp.eq.s32.totalorder %s18, 1
      %p193 = por %p191, %p192
      %p194 = scmp.ne.s32.totalorder %s186, %s189
      %p195 = scmp.eq.s32.totalorder %s18, 0
      %p196 = por %p194, %p195
      %p197 = scmp.ne.s32.totalorder %s186, %s189
      %p198 = scmp.eq.s32.totalorder %s23, 1
      %p199 = por %p197, %p198
      %p200 = scmp.ne.s32.totalorder %s189, %s190
      %p201 = scmp.eq.s32.totalorder %s23, 0
      %p202 = por %p200, %p201
      %p203 = scmp.ne.s32.totalorder %s189, %s190
      %p204 = scmp.eq.s32.totalorder %s24, 1
      %p205 = por %p203, %p204
      %p207 = scmp.ne.s32.totalorder %s190, %s206
      %p208 = scmp.eq.s32.totalorder %s24, 0
      %p209 = por %p207, %p208
      %s210 = smul.u32 %s26, 2
      %s211 = ssub.s32 0, %s210
      %s212 = smul.u32 %s25, %s211
      %s213 = sadd.s32 %s26, %s212
      %s214 = smul.u32 %s33, 2
      %s215 = ssub.s32 0, %s214
      %s216 = smul.u32 %s37, %s215
      %s217 = sadd.s32 %s33, %s216
      %s218 = ssub.s32 %s213, %s217
      %s219 = ssub.s32 %s25, %s37
      %s220 = sor.u32 %s218, %s219
      %p221 = scmp.eq.s32.totalorder %s220, 0
      %s223 = sadd.s32 %s222, 1
      %s224 = scalar_select %p221, %s222, %s223
      %p227 = pneg %p221
      %p228 = scmp.eq.s32.totalorder %s18, 1
      %p229 = por %p227, %p228
      %p230 = scmp.ne.s32.totalorder %s222, %s225
      %p231 = scmp.eq.s32.totalorder %s18, 0
      %p232 = por %p230, %p231
      %p233 = scmp.ne.s32.totalorder %s222, %s225
      %p234 = scmp.eq.s32.totalorder %s23, 1
      %p235 = por %p233, %p234
      %p236 = scmp.ne.s32.totalorder %s225, %s226
      %p237 = scmp.eq.s32.totalorder %s23, 0
      %p238 = por %p236, %p237
      %p239 = scmp.ne.s32.totalorder %s225, %s226
      %p240 = scmp.eq.s32.totalorder %s24, 1
      %p241 = por %p239, %p240
      %p243 = scmp.ne.s32.totalorder %s226, %s242
      %p244 = scmp.eq.s32.totalorder %s24, 0
      %p245 = por %p243, %p244
      %p246 = scmp.le.s32.totalorder 1, %s18
      %p247 = scmp.lt.s32.totalorder %s18, 3
      %p248 = pnand %p246, %p247
      %p249 = pneg %p248
      // Predicated region
      $region9: #{_bigru_core.3} parent=5 // pred_check
        _
      $region10: #{_bigru_core.3} parent=5 // pred_check_branch
        %251 = sbr.rel (%p248) target = $region12
      $region11: #{_bigru_core.3} parent=5 // pred_region
        %s252 = ssub.s32 %s18, 1
      $region12: #{_bigru_core.3} parent=5 // pred_fallthru
        _
      %p253 = scmp.lt.s32.totalorder %s18, 2
      // Predicated region
      $region13: #{_bigru_core.3} parent=5 // pred_check
        %p254 = pneg %p253
      $region14: #{_bigru_core.3} parent=5 // pred_check_branch
        %256 = sbr.rel (%p254) target = $region16
      $region15: #{_bigru_core.3} parent=5 // pred_region
        // Predicated region
        $region17: #{_bigru_core.3} parent=15 // pred_check
          %p257 = pneg %p58
        $region18: #{_bigru_core.3} parent=15 // pred_check_branch
          %259 = sbr.rel (%p257) target = $region20
        $region19: #{_bigru_core.3} parent=15 // pred_region
          %s260 = smul.u32 %s26, 2
          %s261 = ssub.s32 0, %s260
          %s262 = smul.u32 %s25, %s261
          %s263 = sadd.s32 %s26, %s262
          %s264 = smul.u32 8, %s263
          %p265 = scmp.lt.s32.totalorder %s264, 7
          %s266 = scalar_select %p265, %s264, 7
          %s267 = smul.addr %s266, 4
          %s268 = scalar_lea.vmem %s0, %s267
          %s269 = smul.u32 %s26, 2
          %s270 = ssub.s32 0, %s269
          %s271 = smul.u32 %s25, %s270
          %s272 = sadd.s32 %s26, %s271
          %s273 = smul.u32 8, %s272
        $region20: #{_bigru_core.3} parent=15 // pred_fallthru
          _
        // Predicated region
        $region21: #{_bigru_core.3} parent=15 // pred_check
          %p274 = pneg %p92
        $region22: #{_bigru_core.3} parent=15 // pred_check_branch
          %276 = sbr.rel (%p274) target = $region24
        $region23: #{_bigru_core.3} parent=15 // pred_region
          %s277 = smul.u32 %s26, 2
          %s278 = ssub.s32 0, %s277
          %s279 = smul.u32 %s25, %s278
          %s280 = sadd.s32 %s26, %s279
          %s281 = smul.u32 8, %s280
          %p282 = scmp.lt.s32.totalorder %s281, 7
          %s283 = scalar_select %p282, %s281, 7
          %s284 = smul.addr %s283, 8
          %s285 = scalar_lea.vmem %s1, %s284
          %s286 = smul.u32 %s26, 2
          %s287 = ssub.s32 0, %s286
          %s288 = smul.u32 %s25, %s287
          %s289 = sadd.s32 %s26, %s288
          %s290 = smul.u32 8, %s289
        $region24: #{_bigru_core.3} parent=15 // pred_fallthru
          _
        // Predicated region
        $region25: #{_bigru_core.3} parent=15 // pred_check
          %p291 = pneg %p118
        $region26: #{_bigru_core.3} parent=15 // pred_check_branch
          %293 = sbr.rel (%p291) target = $region28
        $region27: #{_bigru_core.3} parent=15 // pred_region
          %s294 = sand.u32 %s108, 1
          %s295 = scalar_lea.sflag [#allocation6], %s294
          %s296 = sand.u32 %s108, 1
          %s297 = smul.addr %s296, 192
          %s298 = scalar_lea.vmem [#allocation5], %s297
          %300 = vsyncadd %s295, 0
          %s301 = smul.addr %s25, 48
          %s302 = smul.addr %s301, 4
          %s303 = scalar_lea.hbm %s2, %s302
          %s304 = sshll.u32 %s303, 4
          %s305 = int_to_ptr.hbm [resolvable:$true] %s304
          %s306 = sshll.u32 %s298, 4
          %s307 = int_to_ptr.vmem [resolvable:$true] %s306
          %312 = dma.hbm_to_vmem [thread:$0]  %s305, 3072, %s307, %s295, 192, 192, 12
        $region28: #{_bigru_core.3} parent=15 // pred_fallthru
          _
        // Predicated region
        $region29: #{_bigru_core.3} parent=15 // pred_check
          %p313 = pneg %p144
        $region30: #{_bigru_core.3} parent=15 // pred_check_branch
          %315 = sbr.rel (%p313) target = $region32
        $region31: #{_bigru_core.3} parent=15 // pred_region
          %s316 = sand.u32 %s134, 1
          %s317 = scalar_lea.sflag [#allocation8], %s316
          %s318 = sand.u32 %s134, 1
          %s319 = smul.addr %s318, 192
          %s320 = scalar_lea.vmem [#allocation7], %s319
          %322 = vsyncadd %s317, 0
          %s323 = smul.addr %s25, 48
          %s324 = smul.addr %s323, 4
          %s325 = scalar_lea.hbm %s3, %s324
          %s326 = sshll.u32 %s325, 4
          %s327 = int_to_ptr.hbm [resolvable:$true] %s326
          %s328 = sshll.u32 %s320, 4
          %s329 = int_to_ptr.vmem [resolvable:$true] %s328
          %334 = dma.hbm_to_vmem [thread:$0]  %s327, 3072, %s329, %s317, 192, 192, 12
        $region32: #{_bigru_core.3} parent=15 // pred_fallthru
          _
        // Predicated region
        $region33: #{_bigru_core.3} parent=15 // pred_check
          %p335 = pneg %p170
        $region34: #{_bigru_core.3} parent=15 // pred_check_branch
          %337 = sbr.rel (%p335) target = $region36
        $region35: #{_bigru_core.3} parent=15 // pred_region
          %p338 = scmp.lt.s32.totalorder %s25, 1
          %s339 = scalar_select %p338, %s25, 1
          %s340 = smul.addr %s339, 3
          %s341 = scalar_lea.vmem %s4, %s340
        $region36: #{_bigru_core.3} parent=15 // pred_fallthru
          _
        // Predicated region
        $region37: #{_bigru_core.3} parent=15 // pred_check
          %p342 = pneg %p196
        $region38: #{_bigru_core.3} parent=15 // pred_check_branch
          %344 = sbr.rel (%p342) target = $region40
        $region39: #{_bigru_core.3} parent=15 // pred_region
          %p345 = scmp.lt.s32.totalorder %s25, 1
          %s346 = scalar_select %p345, %s25, 1
          %s347 = smul.addr %s346, 3
          %s348 = scalar_lea.vmem %s5, %s347
        $region40: #{_bigru_core.3} parent=15 // pred_fallthru
          _
      $region16: #{_bigru_core.3} parent=5 // pred_fallthru
        _
      %p349 = scmp.le.s32.totalorder 1, %s18
      %p350 = scmp.lt.s32.totalorder %s18, 3
      %p351 = pnand %p349, %p350
      %p352 = pneg %p351
      // Predicated region
      $region41: #{_bigru_core.3} parent=5 // pred_check
        _
      $region42: #{_bigru_core.3} parent=5 // pred_check_branch
        %354 = sbr.rel (%p351) target = $region44
      $region43: #{_bigru_core.3} parent=5 // pred_region
        %s355 = ssub.s32 %s18, 1
        %s356 = sand.u32 %s111, 1
        %s357 = scalar_lea.sflag [#allocation6], %s356
        %s358 = sand.u32 %s111, 1
        %s359 = smul.addr %s358, 192
        %s360 = scalar_lea.vmem [#allocation5], %s359
        // Predicated region
        $region45: #{_bigru_core.3} parent=43 // pred_check
          %p361 = pneg %p124
        $region46: #{_bigru_core.3} parent=43 // pred_check_branch
          %363 = sbr.rel (%p361) target = $region48
        $region47: #{_bigru_core.3} parent=43 // pred_region
          %365 = dma.done %s357, 3072
        $region48: #{_bigru_core.3} parent=43 // pred_fallthru
          _
        %s366 = sand.u32 %s137, 1
        %s367 = scalar_lea.sflag [#allocation8], %s366
        %s368 = sand.u32 %s137, 1
        %s369 = smul.addr %s368, 192
        %s370 = scalar_lea.vmem [#allocation7], %s369
        // Predicated region
        $region49: #{_bigru_core.3} parent=43 // pred_check
          %p371 = pneg %p150
        $region50: #{_bigru_core.3} parent=43 // pred_check_branch
          %373 = sbr.rel (%p371) target = $region52
        $region51: #{_bigru_core.3} parent=43 // pred_region
          %375 = dma.done %s367, 3072
        $region52: #{_bigru_core.3} parent=43 // pred_fallthru
          _
        %s376 = smul.u32 %s28, 2
        %s377 = ssub.s32 0, %s376
        %s378 = smul.u32 %s27, %s377
        %s379 = sadd.s32 %s28, %s378
        %s380 = smul.u32 8, %s379
        %p381 = scmp.lt.s32.totalorder %s380, 7
        %s382 = scalar_select %p381, %s380, 7
        %s383 = smul.addr %s382, 4
        %s384 = scalar_lea.vmem %s0, %s383
        %p385 = pneg %p64
        %p386 = pneg %p61
        %s387 = smul.u32 %s28, 2
        %s388 = ssub.s32 0, %s387
        %s389 = smul.u32 %s27, %s388
        %s390 = sadd.s32 %s28, %s389
        %s391 = smul.u32 8, %s390
        %p392 = scmp.lt.s32.totalorder %s391, 7
        %s393 = scalar_select %p392, %s391, 7
        %s394 = smul.addr %s393, 8
        %s395 = scalar_lea.vmem %s1, %s394
        %p396 = pneg %p98
        %p397 = pneg %p95
        %s398 = sand.u32 %s111, 1
        %s399 = scalar_lea.sflag [#allocation6], %s398
        %s400 = sand.u32 %s111, 1
        %s401 = smul.addr %s400, 192
        %s402 = scalar_lea.vmem [#allocation5], %s401
        %p403 = pneg %p124
        %p404 = pneg %p121
        %s405 = sand.u32 %s137, 1
        %s406 = scalar_lea.sflag [#allocation8], %s405
        %s407 = sand.u32 %s137, 1
        %s408 = smul.addr %s407, 192
        %s409 = scalar_lea.vmem [#allocation7], %s408
        %p410 = pneg %p150
        %p411 = pneg %p147
        %p412 = scmp.lt.s32.totalorder %s27, 1
        %s413 = scalar_select %p412, %s27, 1
        %s414 = smul.addr %s413, 3
        %s415 = scalar_lea.vmem %s4, %s414
        %p416 = pneg %p176
        %p417 = pneg %p173
        %p418 = scmp.lt.s32.totalorder %s27, 1
        %s419 = scalar_select %p418, %s27, 1
        %s420 = smul.addr %s419, 3
        %s421 = scalar_lea.vmem %s5, %s420
        %p422 = pneg %p202
        %p423 = pneg %p199
        %p424 = pneg %p238
        %p425 = pneg %p235
        %s426 = sand.u32 %s225, 1
        %s427 = sand.u32 %s225, 1
        %s428 = smul.addr %s427, 32
        %s429 = scalar_lea.vmem [#allocation9], %s428
        %s430 = smul.u32 %s28, 2
        %s431 = ssub.s32 0, %s430
        %s432 = smul.u32 %s27, %s431
        %s433 = sadd.s32 %s28, %s432
        %s434 = smul.u32 8, %s433
        %p435 = scmp.lt.s32.totalorder %s434, 7
        %s436 = scalar_select %p435, %s434, 7
        %s437 = smul.addr %s436, 4
        %s438 = scalar_lea.vmem %s0, %s437
        %s439 = smul.u32 %s28, 2
        %s440 = ssub.s32 0, %s439
        %s441 = smul.u32 %s27, %s440
        %s442 = sadd.s32 %s28, %s441
        %s443 = smul.u32 8, %s442
        %s444 = smul.u32 %s28, 2
        %s445 = ssub.s32 0, %s444
        %s446 = smul.u32 %s27, %s445
        %s447 = sadd.s32 %s28, %s446
        %s448 = smul.u32 8, %s447
        %p449 = scmp.lt.s32.totalorder %s448, 7
        %s450 = scalar_select %p449, %s448, 7
        %s451 = smul.addr %s450, 8
        %s452 = scalar_lea.vmem %s1, %s451
        %s453 = smul.u32 %s28, 2
        %s454 = ssub.s32 0, %s453
        %s455 = smul.u32 %s27, %s454
        %s456 = sadd.s32 %s28, %s455
        %s457 = smul.u32 8, %s456
        %p458 = scmp.lt.s32.totalorder %s27, 1
        %s459 = scalar_select %p458, %s27, 1
        %s460 = smul.addr %s459, 3
        %s461 = scalar_lea.vmem %s4, %s460
        %p462 = scmp.lt.s32.totalorder %s27, 1
        %s463 = scalar_select %p462, %s27, 1
        %s464 = smul.addr %s463, 3
        %s465 = scalar_lea.vmem %s5, %s464
        %s466 = smul.u32 %s28, 2
        %s467 = ssub.s32 0, %s466
        %s468 = smul.u32 %s27, %s467
        %s469 = sadd.s32 %s28, %s468
        %s470 = smul.u32 8, %s469
        %p471 = scmp.eq.s32.totalorder %s28, 0
        // Predicated region
        $region53: #{_bigru_core.3} parent=43 // pred_check
          %p472 = pneg %p471
        $region54: #{_bigru_core.3} parent=43 // pred_check_branch
          %474 = sbr.rel (%p472) target = $region56
        $region55: #{_bigru_core.3} parent=43 // pred_region
          %475 = vst [vmem:[#allocation4] sm:$0xff] 0.0
        $region56: #{_bigru_core.3} parent=43 // pred_fallthru
          _
        %v476 = vld [vmem:[%s438] sm:$0xf]
        %v477 = vld [vmem:[%s438 + $0x4] sm:$0xf]
        %v478 = vld [vmem:[%s438 + $0x8] sm:$0xf]
        %v479 = vld [vmem:[%s438 + $0xc] sm:$0xf]
        %v480 = vld [vmem:[%s438 + $0x10] sm:$0xf]
        %v481 = vld [vmem:[%s438 + $0x14] sm:$0xf]
        %v482 = vld [vmem:[%s438 + $0x18] sm:$0xf]
        %v483 = vld [vmem:[%s438 + $0x1c] sm:$0xf]
        %v484 = vld [vmem:[%s360] sm:$0xff]
        %v485 = vld [vmem:[%s360 + $0x8] sm:$0xf]
        %v486 = vld [vmem:[%s360 + $0xc] sm:$0xff]
        %v487 = vld [vmem:[%s360 + $0x14] sm:$0xf]
        %v488 = vld [vmem:[%s360 + $0x18] sm:$0xff]
        %v489 = vld [vmem:[%s360 + $0x20] sm:$0xf]
        %v490 = vld [vmem:[%s360 + $0x24] sm:$0xff]
        %v491 = vld [vmem:[%s360 + $0x2c] sm:$0xf]
        %v492 = vld [vmem:[%s360 + $0x30] sm:$0xff]
        %v493 = vld [vmem:[%s360 + $0x38] sm:$0xf]
        %v494 = vld [vmem:[%s360 + $0x3c] sm:$0xff]
        %v495 = vld [vmem:[%s360 + $0x44] sm:$0xf]
        %v496 = vld [vmem:[%s360 + $0x48] sm:$0xff]
        %v497 = vld [vmem:[%s360 + $0x50] sm:$0xf]
        %v498 = vld [vmem:[%s360 + $0x54] sm:$0xff]
        %v499 = vld [vmem:[%s360 + $0x5c] sm:$0xf]
        %v500 = vld [vmem:[%s360 + $0x60] sm:$0xff]
        %v501 = vld [vmem:[%s360 + $0x68] sm:$0xf]
        %v502 = vld [vmem:[%s360 + $0x6c] sm:$0xff]
        %v503 = vld [vmem:[%s360 + $0x74] sm:$0xf]
        %v504 = vld [vmem:[%s360 + $0x78] sm:$0xff]
        %v505 = vld [vmem:[%s360 + $0x80] sm:$0xf]
        %v506 = vld [vmem:[%s360 + $0x84] sm:$0xff]
        %v507 = vld [vmem:[%s360 + $0x8c] sm:$0xf]
        %v508 = vld [vmem:[%s360 + $0x90] sm:$0xff]
        %v509 = vld [vmem:[%s360 + $0x98] sm:$0xf]
        %v510 = vld [vmem:[%s360 + $0x9c] sm:$0xff]
        %v511 = vld [vmem:[%s360 + $0xa4] sm:$0xf]
        %v512 = vld [vmem:[%s360 + $0xa8] sm:$0xff]
        %v513 = vld [vmem:[%s360 + $0xb0] sm:$0xf]
        %v514 = vld [vmem:[%s360 + $0xb4] sm:$0xff]
        %v515 = vld [vmem:[%s360 + $0xbc] sm:$0xf]
        %v516 = vld [vmem:[%s461] sm:$0x7]
        %v518 = vperm.slane %v516, 0
        %v519 = vperm.slane %v516, 1
        %v520 = vperm.slane %v516, 2
        %v532 = vunpack.c.l.b16 %v476
        %v533 = vunpack.c.l.b16 %v477
        %v534 = vunpack.c.l.b16 %v478
        %v535 = vunpack.c.l.b16 %v479
        %v536 = vunpack.c.l.b16 %v480
        %v537 = vunpack.c.l.b16 %v481
        %v538 = vunpack.c.l.b16 %v482
        %v539 = vunpack.c.l.b16 %v483
        %v540 = vpack.c.b16 %v533, %v532
        %v541 = vpack.c.b16 %v535, %v534
        %v542 = vpack.c.b16 %v537, %v536
        %v543 = vpack.c.b16 %v539, %v538
        %v580 = vunpack.c.l.b16 %v484
        %v581 = vunpack.c.h.b16 %v484
        %v582 = vunpack.c.l.b16 %v485
        %v583 = vunpack.c.l.b16 %v486
        %v584 = vunpack.c.h.b16 %v486
        %v585 = vunpack.c.l.b16 %v487
        %v586 = vunpack.c.l.b16 %v488
        %v587 = vunpack.c.h.b16 %v488
        %v588 = vunpack.c.l.b16 %v489
        %v589 = vunpack.c.l.b16 %v490
        %v590 = vunpack.c.h.b16 %v490
        %v591 = vunpack.c.l.b16 %v491
        %v592 = vunpack.c.l.b16 %v492
        %v593 = vunpack.c.h.b16 %v492
        %v594 = vunpack.c.l.b16 %v493
        %v595 = vunpack.c.l.b16 %v494
        %v596 = vunpack.c.h.b16 %v494
        %v597 = vunpack.c.l.b16 %v495
        %v598 = vunpack.c.l.b16 %v496
        %v599 = vunpack.c.h.b16 %v496
        %v600 = vunpack.c.l.b16 %v497
        %v601 = vunpack.c.l.b16 %v498
        %v602 = vunpack.c.h.b16 %v498
        %v603 = vunpack.c.l.b16 %v499
        %v604 = vunpack.c.l.b16 %v500
        %v605 = vunpack.c.h.b16 %v500
        %v606 = vunpack.c.l.b16 %v501
        %v607 = vunpack.c.l.b16 %v502
        %v608 = vunpack.c.h.b16 %v502
        %v609 = vunpack.c.l.b16 %v503
        %v610 = vunpack.c.l.b16 %v504
        %v611 = vunpack.c.h.b16 %v504
        %v612 = vunpack.c.l.b16 %v505
        %v613 = vunpack.c.l.b16 %v506
        %v614 = vunpack.c.h.b16 %v506
        %v615 = vunpack.c.l.b16 %v507
        %v616 = vunpack.c.l.b16 %v508
        %v617 = vunpack.c.h.b16 %v508
        %v618 = vunpack.c.l.b16 %v509
        %v619 = vunpack.c.l.b16 %v510
        %v620 = vunpack.c.h.b16 %v510
        %v621 = vunpack.c.l.b16 %v511
        %v622 = vunpack.c.l.b16 %v512
        %v623 = vunpack.c.h.b16 %v512
        %v624 = vunpack.c.l.b16 %v513
        %v625 = vunpack.c.l.b16 %v514
        %v626 = vunpack.c.h.b16 %v514
        %v627 = vunpack.c.l.b16 %v515
        %v628 = vpack.c.b16 %v583, %v580
        %v629 = vpack.c.b16 %v584, %v581
        %v630 = vpack.c.b16 %v585, %v582
        %v631 = vpack.c.b16 %v589, %v586
        %v632 = vpack.c.b16 %v590, %v587
        %v633 = vpack.c.b16 %v591, %v588
        %v634 = vpack.c.b16 %v595, %v592
        %v635 = vpack.c.b16 %v596, %v593
        %v636 = vpack.c.b16 %v597, %v594
        %v637 = vpack.c.b16 %v601, %v598
        %v638 = vpack.c.b16 %v602, %v599
        %v639 = vpack.c.b16 %v603, %v600
        %v640 = vpack.c.b16 %v607, %v604
        %v641 = vpack.c.b16 %v608, %v605
        %v642 = vpack.c.b16 %v609, %v606
        %v643 = vpack.c.b16 %v613, %v610
        %v644 = vpack.c.b16 %v614, %v611
        %v645 = vpack.c.b16 %v615, %v612
        %v646 = vpack.c.b16 %v619, %v616
        %v647 = vpack.c.b16 %v620, %v617
        %v648 = vpack.c.b16 %v621, %v618
        %v649 = vpack.c.b16 %v625, %v622
        %v650 = vpack.c.b16 %v626, %v623
        %v651 = vpack.c.b16 %v627, %v624
        %676 = vmatpush.bf16.msra.mxu0 %v649
        %677 = vmatpush.bf16.msra.mxu0 %v646
        %678 = vmatpush.bf16.msra.mxu0 %v643
        %679 = vmatpush.bf16.msra.mxu0 %v640
        %680 = vmatpush.bf16.msra.mxu0 %v637
        %681 = vmatpush.bf16.msra.mxu0 %v634
        %682 = vmatpush.bf16.msra.mxu0 %v631
        %683 = vmatpush.bf16.msra.mxu0 %v628
        %684 = vmatmul.bf16.gmra.mxu0 %v540
        %v685 = vpop.f32.mrf.mxu0
        %v686 = vadd.f32 %v518, %v685
        %v687 = vpop.f32.mrf.mxu0
        %v688 = vadd.f32 %v518, %v687
        %689 = vmatmul.bf16.gmra.mxu0 %v541
        %v690 = vpop.f32.mrf.mxu0
        %v691 = vadd.f32 %v518, %v690
        %v692 = vpop.f32.mrf.mxu0
        %v693 = vadd.f32 %v518, %v692
        %694 = vmatmul.bf16.gmra.mxu0 %v542
        %v695 = vpop.f32.mrf.mxu0
        %v696 = vadd.f32 %v518, %v695
        %v697 = vpop.f32.mrf.mxu0
        %v698 = vadd.f32 %v518, %v697
        %699 = vmatmul.bf16.gmra.mxu0 %v543
        %v700 = vpop.f32.mrf.mxu0
        %v701 = vadd.f32 %v518, %v700
        %v702 = vpop.f32.mrf.mxu0
        %v703 = vadd.f32 %v518, %v702
        %704 = vdwg.mxu0
        %705 = vmatpush.bf16.msra.mxu0 %v650
        %706 = vmatpush.bf16.msra.mxu0 %v647
        %707 = vmatpush.bf16.msra.mxu0 %v644
        %708 = vmatpush.bf16.msra.mxu0 %v641
        %709 = vmatpush.bf16.msra.mxu0 %v638
        %710 = vmatpush.bf16.msra.mxu0 %v635
        %711 = vmatpush.bf16.msra.mxu0 %v632
        %712 = vmatpush.bf16.msra.mxu0 %v629
        %713 = vmatmul.bf16.gmra.mxu0 %v540
        %v714 = vpop.f32.mrf.mxu0
        %v715 = vadd.f32 %v519, %v714
        %v716 = vpop.f32.mrf.mxu0
        %v717 = vadd.f32 %v519, %v716
        %718 = vmatmul.bf16.gmra.mxu0 %v541
        %v719 = vpop.f32.mrf.mxu0
        %v720 = vadd.f32 %v519, %v719
        %v721 = vpop.f32.mrf.mxu0
        %v722 = vadd.f32 %v519, %v721
        %723 = vmatmul.bf16.gmra.mxu0 %v542
        %v724 = vpop.f32.mrf.mxu0
        %v725 = vadd.f32 %v519, %v724
        %v726 = vpop.f32.mrf.mxu0
        %v727 = vadd.f32 %v519, %v726
        %728 = vmatmul.bf16.gmra.mxu0 %v543
        %v729 = vpop.f32.mrf.mxu0
        %v730 = vadd.f32 %v519, %v729
        %v731 = vpop.f32.mrf.mxu0
        %v732 = vadd.f32 %v519, %v731
        %733 = vdwg.mxu0
        %734 = vmatpush.bf16.msra.mxu0 %v651
        %735 = vmatpush.bf16.msra.mxu0 %v648
        %736 = vmatpush.bf16.msra.mxu0 %v645
        %737 = vmatpush.bf16.msra.mxu0 %v642
        %738 = vmatpush.bf16.msra.mxu0 %v639
        %739 = vmatpush.bf16.msra.mxu0 %v636
        %740 = vmatpush.bf16.msra.mxu0 %v633
        %741 = vmatpush.bf16.msra.mxu0 %v630
        %742 = vmatmul.bf16.gmra.mxu0 %v540
        %v743 = vpop.f32.mrf.mxu0
        %v744 = vadd.f32 %v520, %v743
        %v745 = vpop.f32.mrf.mxu0
        %v746 = vadd.f32 %v520, %v745
        %747 = vmatmul.bf16.gmra.mxu0 %v541
        %v748 = vpop.f32.mrf.mxu0
        %v749 = vadd.f32 %v520, %v748
        %v750 = vpop.f32.mrf.mxu0
        %v751 = vadd.f32 %v520, %v750
        %752 = vmatmul.bf16.gmra.mxu0 %v542
        %v753 = vpop.f32.mrf.mxu0
        %v754 = vadd.f32 %v520, %v753
        %v755 = vpop.f32.mrf.mxu0
        %v756 = vadd.f32 %v520, %v755
        %757 = vmatmul.bf16.gmra.mxu0 %v543
        %v758 = vpop.f32.mrf.mxu0
        %v759 = vadd.f32 %v520, %v758
        %v760 = vpop.f32.mrf.mxu0
        %v761 = vadd.f32 %v520, %v760
        %762 = vdwg.mxu0
        %763 = vst [vmem:[#allocation2] sm:$0xff] %v686
        %764 = vst [vmem:[#allocation2 + $0x8] sm:$0xff] %v715
        %765 = vst [vmem:[#allocation2 + $0x10] sm:$0xff] %v744
        %766 = vst [vmem:[#allocation2 + $0x18] sm:$0xff] %v688
        %767 = vst [vmem:[#allocation2 + $0x20] sm:$0xff] %v717
        %768 = vst [vmem:[#allocation2 + $0x28] sm:$0xff] %v746
        %769 = vst [vmem:[#allocation2 + $0x30] sm:$0xff] %v691
        %770 = vst [vmem:[#allocation2 + $0x38] sm:$0xff] %v720
        %771 = vst [vmem:[#allocation2 + $0x40] sm:$0xff] %v749
        %772 = vst [vmem:[#allocation2 + $0x48] sm:$0xff] %v693
        %773 = vst [vmem:[#allocation2 + $0x50] sm:$0xff] %v722
        %774 = vst [vmem:[#allocation2 + $0x58] sm:$0xff] %v751
        %775 = vst [vmem:[#allocation2 + $0x60] sm:$0xff] %v696
        %776 = vst [vmem:[#allocation2 + $0x68] sm:$0xff] %v725
        %777 = vst [vmem:[#allocation2 + $0x70] sm:$0xff] %v754
        %778 = vst [vmem:[#allocation2 + $0x78] sm:$0xff] %v698
        %779 = vst [vmem:[#allocation2 + $0x80] sm:$0xff] %v727
        %780 = vst [vmem:[#allocation2 + $0x88] sm:$0xff] %v756
        %781 = vst [vmem:[#allocation2 + $0x90] sm:$0xff] %v701
        %782 = vst [vmem:[#allocation2 + $0x98] sm:$0xff] %v730
        %783 = vst [vmem:[#allocation2 + $0xa0] sm:$0xff] %v759
        %784 = vst [vmem:[#allocation2 + $0xa8] sm:$0xff] %v703
        %785 = vst [vmem:[#allocation2 + $0xb0] sm:$0xff] %v732
        %786 = vst [vmem:[#allocation2 + $0xb8] sm:$0xff] %v761
        %v787 = vld [vmem:[%s370] sm:$0xff]
        %v788 = vld [vmem:[%s370 + $0x8] sm:$0xf]
        %v789 = vld [vmem:[%s370 + $0xc] sm:$0xff]
        %v790 = vld [vmem:[%s370 + $0x14] sm:$0xf]
        %v791 = vld [vmem:[%s370 + $0x18] sm:$0xff]
        %v792 = vld [vmem:[%s370 + $0x20] sm:$0xf]
        %v793 = vld [vmem:[%s370 + $0x24] sm:$0xff]
        %v794 = vld [vmem:[%s370 + $0x2c] sm:$0xf]
        %v795 = vld [vmem:[%s370 + $0x30] sm:$0xff]
        %v796 = vld [vmem:[%s370 + $0x38] sm:$0xf]
        %v797 = vld [vmem:[%s370 + $0x3c] sm:$0xff]
        %v798 = vld [vmem:[%s370 + $0x44] sm:$0xf]
        %v799 = vld [vmem:[%s370 + $0x48] sm:$0xff]
        %v800 = vld [vmem:[%s370 + $0x50] sm:$0xf]
        %v801 = vld [vmem:[%s370 + $0x54] sm:$0xff]
        %v802 = vld [vmem:[%s370 + $0x5c] sm:$0xf]
        %v803 = vld [vmem:[%s370 + $0x60] sm:$0xff]
        %v804 = vld [vmem:[%s370 + $0x68] sm:$0xf]
        %v805 = vld [vmem:[%s370 + $0x6c] sm:$0xff]
        %v806 = vld [vmem:[%s370 + $0x74] sm:$0xf]
        %v807 = vld [vmem:[%s370 + $0x78] sm:$0xff]
        %v808 = vld [vmem:[%s370 + $0x80] sm:$0xf]
        %v809 = vld [vmem:[%s370 + $0x84] sm:$0xff]
        %v810 = vld [vmem:[%s370 + $0x8c] sm:$0xf]
        %v811 = vld [vmem:[%s370 + $0x90] sm:$0xff]
        %v812 = vld [vmem:[%s370 + $0x98] sm:$0xf]
        %v813 = vld [vmem:[%s370 + $0x9c] sm:$0xff]
        %v814 = vld [vmem:[%s370 + $0xa4] sm:$0xf]
        %v815 = vld [vmem:[%s370 + $0xa8] sm:$0xff]
        %v816 = vld [vmem:[%s370 + $0xb0] sm:$0xf]
        %v817 = vld [vmem:[%s370 + $0xb4] sm:$0xff]
        %v818 = vld [vmem:[%s370 + $0xbc] sm:$0xf]
        %v819 = vld [vmem:[%s465] sm:$0x7]
        %p820 = scmp.eq.s32.totalorder %s27, 1
        %s821 = scalar_select %p820, 7, 0
        %s822 = smul.u32 %s821, 8
        %s823 = sshra.s32 %s822, 3
        %s824 = sand.u32 %s822, 7
        %s825 = smul.u32 %s823, 3
        %s826 = smul.addr %s825, 8
        %s827 = scalar_lea.vmem [#allocation2], %s826
        %v828 = vld [vmem:[%s827] sm:$0xff]
        %v829 = vld [vmem:[%s827 + $0x8] sm:$0xff]
        %v830 = vld [vmem:[%s827 + $0x10] sm:$0xff]
        %s831 = scalar_lea.vmem %s452, %s822
        %v832 = vld [vmem:[%s831] sm:$0xff]
        %v833 = vld [vmem:[#allocation4] sm:$0xff]
        %v834 = vpack.c.bf16 %v833, %v833
        %v836 = vperm.slane %v819, 0
        %v837 = vperm.slane %v819, 1
        %v838 = vperm.slane %v819, 2
        %v874 = vunpack.c.l.b16 %v787
        %v875 = vunpack.c.h.b16 %v787
        %v876 = vunpack.c.l.b16 %v788
        %v877 = vunpack.c.l.b16 %v789
        %v878 = vunpack.c.h.b16 %v789
        %v879 = vunpack.c.l.b16 %v790
        %v880 = vunpack.c.l.b16 %v791
        %v881 = vunpack.c.h.b16 %v791
        %v882 = vunpack.c.l.b16 %v792
        %v883 = vunpack.c.l.b16 %v793
        %v884 = vunpack.c.h.b16 %v793
        %v885 = vunpack.c.l.b16 %v794
        %v886 = vunpack.c.l.b16 %v795
        %v887 = vunpack.c.h.b16 %v795
        %v888 = vunpack.c.l.b16 %v796
        %v889 = vunpack.c.l.b16 %v797
        %v890 = vunpack.c.h.b16 %v797
        %v891 = vunpack.c.l.b16 %v798
        %v892 = vunpack.c.l.b16 %v799
        %v893 = vunpack.c.h.b16 %v799
        %v894 = vunpack.c.l.b16 %v800
        %v895 = vunpack.c.l.b16 %v801
        %v896 = vunpack.c.h.b16 %v801
        %v897 = vunpack.c.l.b16 %v802
        %v898 = vunpack.c.l.b16 %v803
        %v899 = vunpack.c.h.b16 %v803
        %v900 = vunpack.c.l.b16 %v804
        %v901 = vunpack.c.l.b16 %v805
        %v902 = vunpack.c.h.b16 %v805
        %v903 = vunpack.c.l.b16 %v806
        %v904 = vunpack.c.l.b16 %v807
        %v905 = vunpack.c.h.b16 %v807
        %v906 = vunpack.c.l.b16 %v808
        %v907 = vunpack.c.l.b16 %v809
        %v908 = vunpack.c.h.b16 %v809
        %v909 = vunpack.c.l.b16 %v810
        %v910 = vunpack.c.l.b16 %v811
        %v911 = vunpack.c.h.b16 %v811
        %v912 = vunpack.c.l.b16 %v812
        %v913 = vunpack.c.l.b16 %v813
        %v914 = vunpack.c.h.b16 %v813
        %v915 = vunpack.c.l.b16 %v814
        %v916 = vunpack.c.l.b16 %v815
        %v917 = vunpack.c.h.b16 %v815
        %v918 = vunpack.c.l.b16 %v816
        %v919 = vunpack.c.l.b16 %v817
        %v920 = vunpack.c.h.b16 %v817
        %v921 = vunpack.c.l.b16 %v818
        %v922 = vpack.c.b16 %v877, %v874
        %v923 = vpack.c.b16 %v878, %v875
        %v924 = vpack.c.b16 %v879, %v876
        %v925 = vpack.c.b16 %v883, %v880
        %v926 = vpack.c.b16 %v884, %v881
        %v927 = vpack.c.b16 %v885, %v882
        %v928 = vpack.c.b16 %v889, %v886
        %v929 = vpack.c.b16 %v890, %v887
        %v930 = vpack.c.b16 %v891, %v888
        %v931 = vpack.c.b16 %v895, %v892
        %v932 = vpack.c.b16 %v896, %v893
        %v933 = vpack.c.b16 %v897, %v894
        %v934 = vpack.c.b16 %v901, %v898
        %v935 = vpack.c.b16 %v902, %v899
        %v936 = vpack.c.b16 %v903, %v900
        %v937 = vpack.c.b16 %v907, %v904
        %v938 = vpack.c.b16 %v908, %v905
        %v939 = vpack.c.b16 %v909, %v906
        %v940 = vpack.c.b16 %v913, %v910
        %v941 = vpack.c.b16 %v914, %v911
        %v942 = vpack.c.b16 %v915, %v912
        %v943 = vpack.c.b16 %v919, %v916
        %v944 = vpack.c.b16 %v920, %v917
        %v945 = vpack.c.b16 %v921, %v918
        %970 = vmatpush.bf16.msra.mxu0 %v943
        %971 = vmatpush.bf16.msra.mxu0 %v940
        %972 = vmatpush.bf16.msra.mxu0 %v937
        %973 = vmatpush.bf16.msra.mxu0 %v934
        %974 = vmatpush.bf16.msra.mxu0 %v931
        %975 = vmatpush.bf16.msra.mxu0 %v928
        %976 = vmatpush.bf16.msra.mxu0 %v925
        %977 = vmatpush.bf16.msra.mxu0 %v922
        %978 = vmatmul.bf16.gmra.mxu0 %v834
        %v979 = vpop.f32.mrf.mxu0
        %v980 = vadd.f32 %v836, %v979
        %v981 = vpop.f32.mrf.mxu0
        %982 = vdwg.mxu0
        %983 = vmatpush.bf16.msra.mxu0 %v944
        %984 = vmatpush.bf16.msra.mxu0 %v941
        %985 = vmatpush.bf16.msra.mxu0 %v938
        %986 = vmatpush.bf16.msra.mxu0 %v935
        %987 = vmatpush.bf16.msra.mxu0 %v932
        %988 = vmatpush.bf16.msra.mxu0 %v929
        %989 = vmatpush.bf16.msra.mxu0 %v926
        %990 = vmatpush.bf16.msra.mxu0 %v923
        %991 = vmatmul.bf16.gmra.mxu0 %v834
        %v992 = vpop.f32.mrf.mxu0
        %v993 = vadd.f32 %v837, %v992
        %v994 = vpop.f32.mrf.mxu0
        %995 = vdwg.mxu0
        %996 = vmatpush.bf16.msra.mxu0 %v945
        %997 = vmatpush.bf16.msra.mxu0 %v942
        %998 = vmatpush.bf16.msra.mxu0 %v939
        %999 = vmatpush.bf16.msra.mxu0 %v936
        %1000 = vmatpush.bf16.msra.mxu0 %v933
        %1001 = vmatpush.bf16.msra.mxu0 %v930
        %1002 = vmatpush.bf16.msra.mxu0 %v927
        %1003 = vmatpush.bf16.msra.mxu0 %v924
        %1004 = vmatmul.bf16.gmra.mxu0 %v834
        %v1005 = vpop.f32.mrf.mxu0
        %v1006 = vadd.f32 %v838, %v1005
        %v1007 = vpop.f32.mrf.mxu0
        %1008 = vdwg.mxu0
        %v1009 = vadd.f32 %v828, %v980
        %v1010 = vxor.u32 %v1009, 2147483648
        %v1011 = vmul.f32 %v1010, 1.442695
        %v1012 = vpow.pop %v1011
        %v1013 = vadd.f32 %v1012, 1.0
        %v1014 = vrcp.pop %v1013
        %v1015 = vmul.f32 %v1013, %v1014
        %v1016 = vsub.f32 1.0, %v1015
        %v1017 = vmul.f32 %v1014, %v1016
        %v1018 = vadd.f32 %v1014, %v1017
        %vm1019 = vweird.f32 %v1013
        %vm1020 = vweird.f32 %v1014
        %vm1021 = vmor %vm1019, %vm1020
        %v1022 = vsel %vm1021, %v1014, %v1018
        %v1023 = vand.u32 2147483647, %v1013
        %vm1024 = vcmp.eq.f32.partialorder %v1023, 8.507059e+37
        %v1025 = vand.u32 %v1013, 2147483648
        %v1026 = vor.u32 1.1754944e-38, %v1025
        %v1027 = vsel %vm1024, %v1026, %v1022
        %v1028 = vmul.f32 1.0, %v1027
        %v1029 = vadd.f32 %v829, %v993
        %v1030 = vxor.u32 %v1029, 2147483648
        %v1031 = vmul.f32 %v1030, 1.442695
        %v1032 = vpow.pop %v1031
        %v1033 = vadd.f32 %v1032, 1.0
        %v1034 = vrcp.pop %v1033
        %v1035 = vmul.f32 %v1033, %v1034
        %v1036 = vsub.f32 1.0, %v1035
        %v1037 = vmul.f32 %v1034, %v1036
        %v1038 = vadd.f32 %v1034, %v1037
        %vm1039 = vweird.f32 %v1033
        %vm1040 = vweird.f32 %v1034
        %vm1041 = vmor %vm1039, %vm1040
        %v1042 = vsel %vm1041, %v1034, %v1038
        %v1043 = vand.u32 2147483647, %v1033
        %vm1044 = vcmp.eq.f32.partialorder %v1043, 8.507059e+37
        %v1045 = vand.u32 %v1033, 2147483648
        %v1046 = vor.u32 1.1754944e-38, %v1045
        %v1047 = vsel %vm1044, %v1046, %v1042
        %v1048 = vmul.f32 1.0, %v1047
        %v1049 = vmul.f32 %v1028, %v1006
        %v1050 = vadd.f32 %v830, %v1049
        %v1051 = vtanh.pop %v1050
        %v1052 = vsub.f32 %v833, %v1051
        %v1053 = vmul.f32 %v1048, %v1052
        %v1054 = vadd.f32 %v1051, %v1053
        %v1055 = vsub.f32 %v1054, %v833
        %1057 = vset.pattern.permute.xlu0 0
        %1058 = vperm.xlu0 %1057, %v832
        %v1059 = vpop.permute.xlu0 %1058
        %v1061 = vmul.f32 %v1059, %v1055
        %v1062 = vadd.f32 %v833, %v1061
        %1063 = vst [vmem:[#allocation4] sm:$0xff] %v1062
        %v1064 = vmul.f32 %v1059, %v1054
        %s1065 = scalar_lea.vmem [#allocation3], %s822
        %1066 = vst [vmem:[%s1065] sm:$0xff] %v1064
        %s1067 = scalar_select %p820, 6, 1
        %s1068 = smul.u32 %s1067, 8
        %s1069 = sshra.s32 %s1068, 3
        %s1070 = sand.u32 %s1068, 7
        %s1071 = smul.u32 %s1069, 3
        %s1072 = smul.addr %s1071, 8
        %s1073 = scalar_lea.vmem [#allocation2], %s1072
        %v1074 = vld [vmem:[%s1073] sm:$0xff]
        %v1075 = vld [vmem:[%s1073 + $0x8] sm:$0xff]
        %v1076 = vld [vmem:[%s1073 + $0x10] sm:$0xff]
        %s1077 = scalar_lea.vmem %s452, %s1068
        %v1078 = vld [vmem:[%s1077] sm:$0xff]
        %v1079 = vld [vmem:[#allocation4] sm:$0xff]
        %v1080 = vpack.c.bf16 %v1079, %v1079
        %1081 = vmatpush.bf16.msra.mxu0 %v943
        %1082 = vmatpush.bf16.msra.mxu0 %v940
        %1083 = vmatpush.bf16.msra.mxu0 %v937
        %1084 = vmatpush.bf16.msra.mxu0 %v934
        %1085 = vmatpush.bf16.msra.mxu0 %v931
        %1086 = vmatpush.bf16.msra.mxu0 %v928
        %1087 = vmatpush.bf16.msra.mxu0 %v925
        %1088 = vmatpush.bf16.msra.mxu0 %v922
        %1089 = vmatmul.bf16.gmra.mxu0 %v1080
        %v1090 = vpop.f32.mrf.mxu0
        %v1091 = vadd.f32 %v836, %v1090
        %v1092 = vpop.f32.mrf.mxu0
        %1093 = vdwg.mxu0
        %1094 = vmatpush.bf16.msra.mxu0 %v944
        %1095 = vmatpush.bf16.msra.mxu0 %v941
        %1096 = vmatpush.bf16.msra.mxu0 %v938
        %1097 = vmatpush.bf16.msra.mxu0 %v935
        %1098 = vmatpush.bf16.msra.mxu0 %v932
        %1099 = vmatpush.bf16.msra.mxu0 %v929
        %1100 = vmatpush.bf16.msra.mxu0 %v926
        %1101 = vmatpush.bf16.msra.mxu0 %v923
        %1102 = vmatmul.bf16.gmra.mxu0 %v1080
        %v1103 = vpop.f32.mrf.mxu0
        %v1104 = vadd.f32 %v837, %v1103
        %v1105 = vpop.f32.mrf.mxu0
        %1106 = vdwg.mxu0
        %1107 = vmatpush.bf16.msra.mxu0 %v945
        %1108 = vmatpush.bf16.msra.mxu0 %v942
        %1109 = vmatpush.bf16.msra.mxu0 %v939
        %1110 = vmatpush.bf16.msra.mxu0 %v936
        %1111 = vmatpush.bf16.msra.mxu0 %v933
        %1112 = vmatpush.bf16.msra.mxu0 %v930
        %1113 = vmatpush.bf16.msra.mxu0 %v927
        %1114 = vmatpush.bf16.msra.mxu0 %v924
        %1115 = vmatmul.bf16.gmra.mxu0 %v1080
        %v1116 = vpop.f32.mrf.mxu0
        %v1117 = vadd.f32 %v838, %v1116
        %v1118 = vpop.f32.mrf.mxu0
        %1119 = vdwg.mxu0
        %v1120 = vadd.f32 %v1074, %v1091
        %v1121 = vxor.u32 %v1120, 2147483648
        %v1122 = vmul.f32 %v1121, 1.442695
        %v1123 = vpow.pop %v1122
        %v1124 = vadd.f32 %v1123, 1.0
        %v1125 = vrcp.pop %v1124
        %v1126 = vmul.f32 %v1124, %v1125
        %v1127 = vsub.f32 1.0, %v1126
        %v1128 = vmul.f32 %v1125, %v1127
        %v1129 = vadd.f32 %v1125, %v1128
        %vm1130 = vweird.f32 %v1124
        %vm1131 = vweird.f32 %v1125
        %vm1132 = vmor %vm1130, %vm1131
        %v1133 = vsel %vm1132, %v1125, %v1129
        %v1134 = vand.u32 2147483647, %v1124
        %vm1135 = vcmp.eq.f32.partialorder %v1134, 8.507059e+37
        %v1136 = vand.u32 %v1124, 2147483648
        %v1137 = vor.u32 1.1754944e-38, %v1136
        %v1138 = vsel %vm1135, %v1137, %v1133
        %v1139 = vmul.f32 1.0, %v1138
        %v1140 = vadd.f32 %v1075, %v1104
        %v1141 = vxor.u32 %v1140, 2147483648
        %v1142 = vmul.f32 %v1141, 1.442695
        %v1143 = vpow.pop %v1142
        %v1144 = vadd.f32 %v1143, 1.0
        %v1145 = vrcp.pop %v1144
        %v1146 = vmul.f32 %v1144, %v1145
        %v1147 = vsub.f32 1.0, %v1146
        %v1148 = vmul.f32 %v1145, %v1147
        %v1149 = vadd.f32 %v1145, %v1148
        %vm1150 = vweird.f32 %v1144
        %vm1151 = vweird.f32 %v1145
        %vm1152 = vmor %vm1150, %vm1151
        %v1153 = vsel %vm1152, %v1145, %v1149
        %v1154 = vand.u32 2147483647, %v1144
        %vm1155 = vcmp.eq.f32.partialorder %v1154, 8.507059e+37
        %v1156 = vand.u32 %v1144, 2147483648
        %v1157 = vor.u32 1.1754944e-38, %v1156
        %v1158 = vsel %vm1155, %v1157, %v1153
        %v1159 = vmul.f32 1.0, %v1158
        %v1160 = vmul.f32 %v1139, %v1117
        %v1161 = vadd.f32 %v1076, %v1160
        %v1162 = vtanh.pop %v1161
        %v1163 = vsub.f32 %v1079, %v1162
        %v1164 = vmul.f32 %v1159, %v1163
        %v1165 = vadd.f32 %v1162, %v1164
        %v1166 = vsub.f32 %v1165, %v1079
        %1168 = vset.pattern.permute.xlu0 0
        %1169 = vperm.xlu0 %1168, %v1078
        %v1170 = vpop.permute.xlu0 %1169
        %v1172 = vmul.f32 %v1170, %v1166
        %v1173 = vadd.f32 %v1079, %v1172
        %1174 = vst [vmem:[#allocation4] sm:$0xff] %v1173
        %v1175 = vmul.f32 %v1170, %v1165
        %s1176 = scalar_lea.vmem [#allocation3], %s1068
        %1177 = vst [vmem:[%s1176] sm:$0xff] %v1175
        %s1178 = scalar_select %p820, 5, 2
        %s1179 = smul.u32 %s1178, 8
        %s1180 = sshra.s32 %s1179, 3
        %s1181 = sand.u32 %s1179, 7
        %s1182 = smul.u32 %s1180, 3
        %s1183 = smul.addr %s1182, 8
        %s1184 = scalar_lea.vmem [#allocation2], %s1183
        %v1185 = vld [vmem:[%s1184] sm:$0xff]
        %v1186 = vld [vmem:[%s1184 + $0x8] sm:$0xff]
        %v1187 = vld [vmem:[%s1184 + $0x10] sm:$0xff]
        %s1188 = scalar_lea.vmem %s452, %s1179
        %v1189 = vld [vmem:[%s1188] sm:$0xff]
        %v1190 = vld [vmem:[#allocation4] sm:$0xff]
        %v1191 = vpack.c.bf16 %v1190, %v1190
        %1192 = vmatpush.bf16.msra.mxu0 %v943
        %1193 = vmatpush.bf16.msra.mxu0 %v940
        %1194 = vmatpush.bf16.msra.mxu0 %v937
        %1195 = vmatpush.bf16.msra.mxu0 %v934
        %1196 = vmatpush.bf16.msra.mxu0 %v931
        %1197 = vmatpush.bf16.msra.mxu0 %v928
        %1198 = vmatpush.bf16.msra.mxu0 %v925
        %1199 = vmatpush.bf16.msra.mxu0 %v922
        %1200 = vmatmul.bf16.gmra.mxu0 %v1191
        %v1201 = vpop.f32.mrf.mxu0
        %v1202 = vadd.f32 %v836, %v1201
        %v1203 = vpop.f32.mrf.mxu0
        %1204 = vdwg.mxu0
        %1205 = vmatpush.bf16.msra.mxu0 %v944
        %1206 = vmatpush.bf16.msra.mxu0 %v941
        %1207 = vmatpush.bf16.msra.mxu0 %v938
        %1208 = vmatpush.bf16.msra.mxu0 %v935
        %1209 = vmatpush.bf16.msra.mxu0 %v932
        %1210 = vmatpush.bf16.msra.mxu0 %v929
        %1211 = vmatpush.bf16.msra.mxu0 %v926
        %1212 = vmatpush.bf16.msra.mxu0 %v923
        %1213 = vmatmul.bf16.gmra.mxu0 %v1191
        %v1214 = vpop.f32.mrf.mxu0
        %v1215 = vadd.f32 %v837, %v1214
        %v1216 = vpop.f32.mrf.mxu0
        %1217 = vdwg.mxu0
        %1218 = vmatpush.bf16.msra.mxu0 %v945
        %1219 = vmatpush.bf16.msra.mxu0 %v942
        %1220 = vmatpush.bf16.msra.mxu0 %v939
        %1221 = vmatpush.bf16.msra.mxu0 %v936
        %1222 = vmatpush.bf16.msra.mxu0 %v933
        %1223 = vmatpush.bf16.msra.mxu0 %v930
        %1224 = vmatpush.bf16.msra.mxu0 %v927
        %1225 = vmatpush.bf16.msra.mxu0 %v924
        %1226 = vmatmul.bf16.gmra.mxu0 %v1191
        %v1227 = vpop.f32.mrf.mxu0
        %v1228 = vadd.f32 %v838, %v1227
        %v1229 = vpop.f32.mrf.mxu0
        %1230 = vdwg.mxu0
        %v1231 = vadd.f32 %v1185, %v1202
        %v1232 = vxor.u32 %v1231, 2147483648
        %v1233 = vmul.f32 %v1232, 1.442695
        %v1234 = vpow.pop %v1233
        %v1235 = vadd.f32 %v1234, 1.0
        %v1236 = vrcp.pop %v1235
        %v1237 = vmul.f32 %v1235, %v1236
        %v1238 = vsub.f32 1.0, %v1237
        %v1239 = vmul.f32 %v1236, %v1238
        %v1240 = vadd.f32 %v1236, %v1239
        %vm1241 = vweird.f32 %v1235
        %vm1242 = vweird.f32 %v1236
        %vm1243 = vmor %vm1241, %vm1242
        %v1244 = vsel %vm1243, %v1236, %v1240
        %v1245 = vand.u32 2147483647, %v1235
        %vm1246 = vcmp.eq.f32.partialorder %v1245, 8.507059e+37
        %v1247 = vand.u32 %v1235, 2147483648
        %v1248 = vor.u32 1.1754944e-38, %v1247
        %v1249 = vsel %vm1246, %v1248, %v1244
        %v1250 = vmul.f32 1.0, %v1249
        %v1251 = vadd.f32 %v1186, %v1215
        %v1252 = vxor.u32 %v1251, 2147483648
        %v1253 = vmul.f32 %v1252, 1.442695
        %v1254 = vpow.pop %v1253
        %v1255 = vadd.f32 %v1254, 1.0
        %v1256 = vrcp.pop %v1255
        %v1257 = vmul.f32 %v1255, %v1256
        %v1258 = vsub.f32 1.0, %v1257
        %v1259 = vmul.f32 %v1256, %v1258
        %v1260 = vadd.f32 %v1256, %v1259
        %vm1261 = vweird.f32 %v1255
        %vm1262 = vweird.f32 %v1256
        %vm1263 = vmor %vm1261, %vm1262
        %v1264 = vsel %vm1263, %v1256, %v1260
        %v1265 = vand.u32 2147483647, %v1255
        %vm1266 = vcmp.eq.f32.partialorder %v1265, 8.507059e+37
        %v1267 = vand.u32 %v1255, 2147483648
        %v1268 = vor.u32 1.1754944e-38, %v1267
        %v1269 = vsel %vm1266, %v1268, %v1264
        %v1270 = vmul.f32 1.0, %v1269
        %v1271 = vmul.f32 %v1250, %v1228
        %v1272 = vadd.f32 %v1187, %v1271
        %v1273 = vtanh.pop %v1272
        %v1274 = vsub.f32 %v1190, %v1273
        %v1275 = vmul.f32 %v1270, %v1274
        %v1276 = vadd.f32 %v1273, %v1275
        %v1277 = vsub.f32 %v1276, %v1190
        %1279 = vset.pattern.permute.xlu0 0
        %1280 = vperm.xlu0 %1279, %v1189
        %v1281 = vpop.permute.xlu0 %1280
        %v1283 = vmul.f32 %v1281, %v1277
        %v1284 = vadd.f32 %v1190, %v1283
        %1285 = vst [vmem:[#allocation4] sm:$0xff] %v1284
        %v1286 = vmul.f32 %v1281, %v1276
        %s1287 = scalar_lea.vmem [#allocation3], %s1179
        %1288 = vst [vmem:[%s1287] sm:$0xff] %v1286
        %s1289 = scalar_select %p820, 4, 3
        %s1290 = smul.u32 %s1289, 8
        %s1291 = sshra.s32 %s1290, 3
        %s1292 = sand.u32 %s1290, 7
        %s1293 = smul.u32 %s1291, 3
        %s1294 = smul.addr %s1293, 8
        %s1295 = scalar_lea.vmem [#allocation2], %s1294
        %v1296 = vld [vmem:[%s1295] sm:$0xff]
        %v1297 = vld [vmem:[%s1295 + $0x8] sm:$0xff]
        %v1298 = vld [vmem:[%s1295 + $0x10] sm:$0xff]
        %s1299 = scalar_lea.vmem %s452, %s1290
        %v1300 = vld [vmem:[%s1299] sm:$0xff]
        %v1301 = vld [vmem:[#allocation4] sm:$0xff]
        %v1302 = vpack.c.bf16 %v1301, %v1301
        %1303 = vmatpush.bf16.msra.mxu0 %v943
        %1304 = vmatpush.bf16.msra.mxu0 %v940
        %1305 = vmatpush.bf16.msra.mxu0 %v937
        %1306 = vmatpush.bf16.msra.mxu0 %v934
        %1307 = vmatpush.bf16.msra.mxu0 %v931
        %1308 = vmatpush.bf16.msra.mxu0 %v928
        %1309 = vmatpush.bf16.msra.mxu0 %v925
        %1310 = vmatpush.bf16.msra.mxu0 %v922
        %1311 = vmatmul.bf16.gmra.mxu0 %v1302
        %v1312 = vpop.f32.mrf.mxu0
        %v1313 = vadd.f32 %v836, %v1312
        %v1314 = vpop.f32.mrf.mxu0
        %1315 = vdwg.mxu0
        %1316 = vmatpush.bf16.msra.mxu0 %v944
        %1317 = vmatpush.bf16.msra.mxu0 %v941
        %1318 = vmatpush.bf16.msra.mxu0 %v938
        %1319 = vmatpush.bf16.msra.mxu0 %v935
        %1320 = vmatpush.bf16.msra.mxu0 %v932
        %1321 = vmatpush.bf16.msra.mxu0 %v929
        %1322 = vmatpush.bf16.msra.mxu0 %v926
        %1323 = vmatpush.bf16.msra.mxu0 %v923
        %1324 = vmatmul.bf16.gmra.mxu0 %v1302
        %v1325 = vpop.f32.mrf.mxu0
        %v1326 = vadd.f32 %v837, %v1325
        %v1327 = vpop.f32.mrf.mxu0
        %1328 = vdwg.mxu0
        %1329 = vmatpush.bf16.msra.mxu0 %v945
        %1330 = vmatpush.bf16.msra.mxu0 %v942
        %1331 = vmatpush.bf16.msra.mxu0 %v939
        %1332 = vmatpush.bf16.msra.mxu0 %v936
        %1333 = vmatpush.bf16.msra.mxu0 %v933
        %1334 = vmatpush.bf16.msra.mxu0 %v930
        %1335 = vmatpush.bf16.msra.mxu0 %v927
        %1336 = vmatpush.bf16.msra.mxu0 %v924
        %1337 = vmatmul.bf16.gmra.mxu0 %v1302
        %v1338 = vpop.f32.mrf.mxu0
        %v1339 = vadd.f32 %v838, %v1338
        %v1340 = vpop.f32.mrf.mxu0
        %1341 = vdwg.mxu0
        %v1342 = vadd.f32 %v1296, %v1313
        %v1343 = vxor.u32 %v1342, 2147483648
        %v1344 = vmul.f32 %v1343, 1.442695
        %v1345 = vpow.pop %v1344
        %v1346 = vadd.f32 %v1345, 1.0
        %v1347 = vrcp.pop %v1346
        %v1348 = vmul.f32 %v1346, %v1347
        %v1349 = vsub.f32 1.0, %v1348
        %v1350 = vmul.f32 %v1347, %v1349
        %v1351 = vadd.f32 %v1347, %v1350
        %vm1352 = vweird.f32 %v1346
        %vm1353 = vweird.f32 %v1347
        %vm1354 = vmor %vm1352, %vm1353
        %v1355 = vsel %vm1354, %v1347, %v1351
        %v1356 = vand.u32 2147483647, %v1346
        %vm1357 = vcmp.eq.f32.partialorder %v1356, 8.507059e+37
        %v1358 = vand.u32 %v1346, 2147483648
        %v1359 = vor.u32 1.1754944e-38, %v1358
        %v1360 = vsel %vm1357, %v1359, %v1355
        %v1361 = vmul.f32 1.0, %v1360
        %v1362 = vadd.f32 %v1297, %v1326
        %v1363 = vxor.u32 %v1362, 2147483648
        %v1364 = vmul.f32 %v1363, 1.442695
        %v1365 = vpow.pop %v1364
        %v1366 = vadd.f32 %v1365, 1.0
        %v1367 = vrcp.pop %v1366
        %v1368 = vmul.f32 %v1366, %v1367
        %v1369 = vsub.f32 1.0, %v1368
        %v1370 = vmul.f32 %v1367, %v1369
        %v1371 = vadd.f32 %v1367, %v1370
        %vm1372 = vweird.f32 %v1366
        %vm1373 = vweird.f32 %v1367
        %vm1374 = vmor %vm1372, %vm1373
        %v1375 = vsel %vm1374, %v1367, %v1371
        %v1376 = vand.u32 2147483647, %v1366
        %vm1377 = vcmp.eq.f32.partialorder %v1376, 8.507059e+37
        %v1378 = vand.u32 %v1366, 2147483648
        %v1379 = vor.u32 1.1754944e-38, %v1378
        %v1380 = vsel %vm1377, %v1379, %v1375
        %v1381 = vmul.f32 1.0, %v1380
        %v1382 = vmul.f32 %v1361, %v1339
        %v1383 = vadd.f32 %v1298, %v1382
        %v1384 = vtanh.pop %v1383
        %v1385 = vsub.f32 %v1301, %v1384
        %v1386 = vmul.f32 %v1381, %v1385
        %v1387 = vadd.f32 %v1384, %v1386
        %v1388 = vsub.f32 %v1387, %v1301
        %1390 = vset.pattern.permute.xlu0 0
        %1391 = vperm.xlu0 %1390, %v1300
        %v1392 = vpop.permute.xlu0 %1391
        %v1394 = vmul.f32 %v1392, %v1388
        %v1395 = vadd.f32 %v1301, %v1394
        %1396 = vst [vmem:[#allocation4] sm:$0xff] %v1395
        %v1397 = vmul.f32 %v1392, %v1387
        %s1398 = scalar_lea.vmem [#allocation3], %s1290
        %1399 = vst [vmem:[%s1398] sm:$0xff] %v1397
        %s1400 = scalar_select %p820, 3, 4
        %s1401 = smul.u32 %s1400, 8
        %s1402 = sshra.s32 %s1401, 3
        %s1403 = sand.u32 %s1401, 7
        %s1404 = smul.u32 %s1402, 3
        %s1405 = smul.addr %s1404, 8
        %s1406 = scalar_lea.vmem [#allocation2], %s1405
        %v1407 = vld [vmem:[%s1406] sm:$0xff]
        %v1408 = vld [vmem:[%s1406 + $0x8] sm:$0xff]
        %v1409 = vld [vmem:[%s1406 + $0x10] sm:$0xff]
        %s1410 = scalar_lea.vmem %s452, %s1401
        %v1411 = vld [vmem:[%s1410] sm:$0xff]
        %v1412 = vld [vmem:[#allocation4] sm:$0xff]
        %v1413 = vpack.c.bf16 %v1412, %v1412
        %1414 = vmatpush.bf16.msra.mxu0 %v943
        %1415 = vmatpush.bf16.msra.mxu0 %v940
        %1416 = vmatpush.bf16.msra.mxu0 %v937
        %1417 = vmatpush.bf16.msra.mxu0 %v934
        %1418 = vmatpush.bf16.msra.mxu0 %v931
        %1419 = vmatpush.bf16.msra.mxu0 %v928
        %1420 = vmatpush.bf16.msra.mxu0 %v925
        %1421 = vmatpush.bf16.msra.mxu0 %v922
        %1422 = vmatmul.bf16.gmra.mxu0 %v1413
        %v1423 = vpop.f32.mrf.mxu0
        %v1424 = vadd.f32 %v836, %v1423
        %v1425 = vpop.f32.mrf.mxu0
        %1426 = vdwg.mxu0
        %1427 = vmatpush.bf16.msra.mxu0 %v944
        %1428 = vmatpush.bf16.msra.mxu0 %v941
        %1429 = vmatpush.bf16.msra.mxu0 %v938
        %1430 = vmatpush.bf16.msra.mxu0 %v935
        %1431 = vmatpush.bf16.msra.mxu0 %v932
        %1432 = vmatpush.bf16.msra.mxu0 %v929
        %1433 = vmatpush.bf16.msra.mxu0 %v926
        %1434 = vmatpush.bf16.msra.mxu0 %v923
        %1435 = vmatmul.bf16.gmra.mxu0 %v1413
        %v1436 = vpop.f32.mrf.mxu0
        %v1437 = vadd.f32 %v837, %v1436
        %v1438 = vpop.f32.mrf.mxu0
        %1439 = vdwg.mxu0
        %1440 = vmatpush.bf16.msra.mxu0 %v945
        %1441 = vmatpush.bf16.msra.mxu0 %v942
        %1442 = vmatpush.bf16.msra.mxu0 %v939
        %1443 = vmatpush.bf16.msra.mxu0 %v936
        %1444 = vmatpush.bf16.msra.mxu0 %v933
        %1445 = vmatpush.bf16.msra.mxu0 %v930
        %1446 = vmatpush.bf16.msra.mxu0 %v927
        %1447 = vmatpush.bf16.msra.mxu0 %v924
        %1448 = vmatmul.bf16.gmra.mxu0 %v1413
        %v1449 = vpop.f32.mrf.mxu0
        %v1450 = vadd.f32 %v838, %v1449
        %v1451 = vpop.f32.mrf.mxu0
        %1452 = vdwg.mxu0
        %v1453 = vadd.f32 %v1407, %v1424
        %v1454 = vxor.u32 %v1453, 2147483648
        %v1455 = vmul.f32 %v1454, 1.442695
        %v1456 = vpow.pop %v1455
        %v1457 = vadd.f32 %v1456, 1.0
        %v1458 = vrcp.pop %v1457
        %v1459 = vmul.f32 %v1457, %v1458
        %v1460 = vsub.f32 1.0, %v1459
        %v1461 = vmul.f32 %v1458, %v1460
        %v1462 = vadd.f32 %v1458, %v1461
        %vm1463 = vweird.f32 %v1457
        %vm1464 = vweird.f32 %v1458
        %vm1465 = vmor %vm1463, %vm1464
        %v1466 = vsel %vm1465, %v1458, %v1462
        %v1467 = vand.u32 2147483647, %v1457
        %vm1468 = vcmp.eq.f32.partialorder %v1467, 8.507059e+37
        %v1469 = vand.u32 %v1457, 2147483648
        %v1470 = vor.u32 1.1754944e-38, %v1469
        %v1471 = vsel %vm1468, %v1470, %v1466
        %v1472 = vmul.f32 1.0, %v1471
        %v1473 = vadd.f32 %v1408, %v1437
        %v1474 = vxor.u32 %v1473, 2147483648
        %v1475 = vmul.f32 %v1474, 1.442695
        %v1476 = vpow.pop %v1475
        %v1477 = vadd.f32 %v1476, 1.0
        %v1478 = vrcp.pop %v1477
        %v1479 = vmul.f32 %v1477, %v1478
        %v1480 = vsub.f32 1.0, %v1479
        %v1481 = vmul.f32 %v1478, %v1480
        %v1482 = vadd.f32 %v1478, %v1481
        %vm1483 = vweird.f32 %v1477
        %vm1484 = vweird.f32 %v1478
        %vm1485 = vmor %vm1483, %vm1484
        %v1486 = vsel %vm1485, %v1478, %v1482
        %v1487 = vand.u32 2147483647, %v1477
        %vm1488 = vcmp.eq.f32.partialorder %v1487, 8.507059e+37
        %v1489 = vand.u32 %v1477, 2147483648
        %v1490 = vor.u32 1.1754944e-38, %v1489
        %v1491 = vsel %vm1488, %v1490, %v1486
        %v1492 = vmul.f32 1.0, %v1491
        %v1493 = vmul.f32 %v1472, %v1450
        %v1494 = vadd.f32 %v1409, %v1493
        %v1495 = vtanh.pop %v1494
        %v1496 = vsub.f32 %v1412, %v1495
        %v1497 = vmul.f32 %v1492, %v1496
        %v1498 = vadd.f32 %v1495, %v1497
        %v1499 = vsub.f32 %v1498, %v1412
        %1501 = vset.pattern.permute.xlu0 0
        %1502 = vperm.xlu0 %1501, %v1411
        %v1503 = vpop.permute.xlu0 %1502
        %v1505 = vmul.f32 %v1503, %v1499
        %v1506 = vadd.f32 %v1412, %v1505
        %1507 = vst [vmem:[#allocation4] sm:$0xff] %v1506
        %v1508 = vmul.f32 %v1503, %v1498
        %s1509 = scalar_lea.vmem [#allocation3], %s1401
        %1510 = vst [vmem:[%s1509] sm:$0xff] %v1508
        %s1511 = scalar_select %p820, 2, 5
        %s1512 = smul.u32 %s1511, 8
        %s1513 = sshra.s32 %s1512, 3
        %s1514 = sand.u32 %s1512, 7
        %s1515 = smul.u32 %s1513, 3
        %s1516 = smul.addr %s1515, 8
        %s1517 = scalar_lea.vmem [#allocation2], %s1516
        %v1518 = vld [vmem:[%s1517] sm:$0xff]
        %v1519 = vld [vmem:[%s1517 + $0x8] sm:$0xff]
        %v1520 = vld [vmem:[%s1517 + $0x10] sm:$0xff]
        %s1521 = scalar_lea.vmem %s452, %s1512
        %v1522 = vld [vmem:[%s1521] sm:$0xff]
        %v1523 = vld [vmem:[#allocation4] sm:$0xff]
        %v1524 = vpack.c.bf16 %v1523, %v1523
        %1525 = vmatpush.bf16.msra.mxu0 %v943
        %1526 = vmatpush.bf16.msra.mxu0 %v940
        %1527 = vmatpush.bf16.msra.mxu0 %v937
        %1528 = vmatpush.bf16.msra.mxu0 %v934
        %1529 = vmatpush.bf16.msra.mxu0 %v931
        %1530 = vmatpush.bf16.msra.mxu0 %v928
        %1531 = vmatpush.bf16.msra.mxu0 %v925
        %1532 = vmatpush.bf16.msra.mxu0 %v922
        %1533 = vmatmul.bf16.gmra.mxu0 %v1524
        %v1534 = vpop.f32.mrf.mxu0
        %v1535 = vadd.f32 %v836, %v1534
        %v1536 = vpop.f32.mrf.mxu0
        %1537 = vdwg.mxu0
        %1538 = vmatpush.bf16.msra.mxu0 %v944
        %1539 = vmatpush.bf16.msra.mxu0 %v941
        %1540 = vmatpush.bf16.msra.mxu0 %v938
        %1541 = vmatpush.bf16.msra.mxu0 %v935
        %1542 = vmatpush.bf16.msra.mxu0 %v932
        %1543 = vmatpush.bf16.msra.mxu0 %v929
        %1544 = vmatpush.bf16.msra.mxu0 %v926
        %1545 = vmatpush.bf16.msra.mxu0 %v923
        %1546 = vmatmul.bf16.gmra.mxu0 %v1524
        %v1547 = vpop.f32.mrf.mxu0
        %v1548 = vadd.f32 %v837, %v1547
        %v1549 = vpop.f32.mrf.mxu0
        %1550 = vdwg.mxu0
        %1551 = vmatpush.bf16.msra.mxu0 %v945
        %1552 = vmatpush.bf16.msra.mxu0 %v942
        %1553 = vmatpush.bf16.msra.mxu0 %v939
        %1554 = vmatpush.bf16.msra.mxu0 %v936
        %1555 = vmatpush.bf16.msra.mxu0 %v933
        %1556 = vmatpush.bf16.msra.mxu0 %v930
        %1557 = vmatpush.bf16.msra.mxu0 %v927
        %1558 = vmatpush.bf16.msra.mxu0 %v924
        %1559 = vmatmul.bf16.gmra.mxu0 %v1524
        %v1560 = vpop.f32.mrf.mxu0
        %v1561 = vadd.f32 %v838, %v1560
        %v1562 = vpop.f32.mrf.mxu0
        %1563 = vdwg.mxu0
        %v1564 = vadd.f32 %v1518, %v1535
        %v1565 = vxor.u32 %v1564, 2147483648
        %v1566 = vmul.f32 %v1565, 1.442695
        %v1567 = vpow.pop %v1566
        %v1568 = vadd.f32 %v1567, 1.0
        %v1569 = vrcp.pop %v1568
        %v1570 = vmul.f32 %v1568, %v1569
        %v1571 = vsub.f32 1.0, %v1570
        %v1572 = vmul.f32 %v1569, %v1571
        %v1573 = vadd.f32 %v1569, %v1572
        %vm1574 = vweird.f32 %v1568
        %vm1575 = vweird.f32 %v1569
        %vm1576 = vmor %vm1574, %vm1575
        %v1577 = vsel %vm1576, %v1569, %v1573
        %v1578 = vand.u32 2147483647, %v1568
        %vm1579 = vcmp.eq.f32.partialorder %v1578, 8.507059e+37
        %v1580 = vand.u32 %v1568, 2147483648
        %v1581 = vor.u32 1.1754944e-38, %v1580
        %v1582 = vsel %vm1579, %v1581, %v1577
        %v1583 = vmul.f32 1.0, %v1582
        %v1584 = vadd.f32 %v1519, %v1548
        %v1585 = vxor.u32 %v1584, 2147483648
        %v1586 = vmul.f32 %v1585, 1.442695
        %v1587 = vpow.pop %v1586
        %v1588 = vadd.f32 %v1587, 1.0
        %v1589 = vrcp.pop %v1588
        %v1590 = vmul.f32 %v1588, %v1589
        %v1591 = vsub.f32 1.0, %v1590
        %v1592 = vmul.f32 %v1589, %v1591
        %v1593 = vadd.f32 %v1589, %v1592
        %vm1594 = vweird.f32 %v1588
        %vm1595 = vweird.f32 %v1589
        %vm1596 = vmor %vm1594, %vm1595
        %v1597 = vsel %vm1596, %v1589, %v1593
        %v1598 = vand.u32 2147483647, %v1588
        %vm1599 = vcmp.eq.f32.partialorder %v1598, 8.507059e+37
        %v1600 = vand.u32 %v1588, 2147483648
        %v1601 = vor.u32 1.1754944e-38, %v1600
        %v1602 = vsel %vm1599, %v1601, %v1597
        %v1603 = vmul.f32 1.0, %v1602
        %v1604 = vmul.f32 %v1583, %v1561
        %v1605 = vadd.f32 %v1520, %v1604
        %v1606 = vtanh.pop %v1605
        %v1607 = vsub.f32 %v1523, %v1606
        %v1608 = vmul.f32 %v1603, %v1607
        %v1609 = vadd.f32 %v1606, %v1608
        %v1610 = vsub.f32 %v1609, %v1523
        %1612 = vset.pattern.permute.xlu0 0
        %1613 = vperm.xlu0 %1612, %v1522
        %v1614 = vpop.permute.xlu0 %1613
        %v1616 = vmul.f32 %v1614, %v1610
        %v1617 = vadd.f32 %v1523, %v1616
        %1618 = vst [vmem:[#allocation4] sm:$0xff] %v1617
        %v1619 = vmul.f32 %v1614, %v1609
        %s1620 = scalar_lea.vmem [#allocation3], %s1512
        %1621 = vst [vmem:[%s1620] sm:$0xff] %v1619
        %s1622 = scalar_select %p820, 1, 6
        %s1623 = smul.u32 %s1622, 8
        %s1624 = sshra.s32 %s1623, 3
        %s1625 = sand.u32 %s1623, 7
        %s1626 = smul.u32 %s1624, 3
        %s1627 = smul.addr %s1626, 8
        %s1628 = scalar_lea.vmem [#allocation2], %s1627
        %v1629 = vld [vmem:[%s1628] sm:$0xff]
        %v1630 = vld [vmem:[%s1628 + $0x8] sm:$0xff]
        %v1631 = vld [vmem:[%s1628 + $0x10] sm:$0xff]
        %s1632 = scalar_lea.vmem %s452, %s1623
        %v1633 = vld [vmem:[%s1632] sm:$0xff]
        %v1634 = vld [vmem:[#allocation4] sm:$0xff]
        %v1635 = vpack.c.bf16 %v1634, %v1634
        %1636 = vmatpush.bf16.msra.mxu0 %v943
        %1637 = vmatpush.bf16.msra.mxu0 %v940
        %1638 = vmatpush.bf16.msra.mxu0 %v937
        %1639 = vmatpush.bf16.msra.mxu0 %v934
        %1640 = vmatpush.bf16.msra.mxu0 %v931
        %1641 = vmatpush.bf16.msra.mxu0 %v928
        %1642 = vmatpush.bf16.msra.mxu0 %v925
        %1643 = vmatpush.bf16.msra.mxu0 %v922
        %1644 = vmatmul.bf16.gmra.mxu0 %v1635
        %v1645 = vpop.f32.mrf.mxu0
        %v1646 = vadd.f32 %v836, %v1645
        %v1647 = vpop.f32.mrf.mxu0
        %1648 = vdwg.mxu0
        %1649 = vmatpush.bf16.msra.mxu0 %v944
        %1650 = vmatpush.bf16.msra.mxu0 %v941
        %1651 = vmatpush.bf16.msra.mxu0 %v938
        %1652 = vmatpush.bf16.msra.mxu0 %v935
        %1653 = vmatpush.bf16.msra.mxu0 %v932
        %1654 = vmatpush.bf16.msra.mxu0 %v929
        %1655 = vmatpush.bf16.msra.mxu0 %v926
        %1656 = vmatpush.bf16.msra.mxu0 %v923
        %1657 = vmatmul.bf16.gmra.mxu0 %v1635
        %v1658 = vpop.f32.mrf.mxu0
        %v1659 = vadd.f32 %v837, %v1658
        %v1660 = vpop.f32.mrf.mxu0
        %1661 = vdwg.mxu0
        %1662 = vmatpush.bf16.msra.mxu0 %v945
        %1663 = vmatpush.bf16.msra.mxu0 %v942
        %1664 = vmatpush.bf16.msra.mxu0 %v939
        %1665 = vmatpush.bf16.msra.mxu0 %v936
        %1666 = vmatpush.bf16.msra.mxu0 %v933
        %1667 = vmatpush.bf16.msra.mxu0 %v930
        %1668 = vmatpush.bf16.msra.mxu0 %v927
        %1669 = vmatpush.bf16.msra.mxu0 %v924
        %1670 = vmatmul.bf16.gmra.mxu0 %v1635
        %v1671 = vpop.f32.mrf.mxu0
        %v1672 = vadd.f32 %v838, %v1671
        %v1673 = vpop.f32.mrf.mxu0
        %1674 = vdwg.mxu0
        %v1675 = vadd.f32 %v1629, %v1646
        %v1676 = vxor.u32 %v1675, 2147483648
        %v1677 = vmul.f32 %v1676, 1.442695
        %v1678 = vpow.pop %v1677
        %v1679 = vadd.f32 %v1678, 1.0
        %v1680 = vrcp.pop %v1679
        %v1681 = vmul.f32 %v1679, %v1680
        %v1682 = vsub.f32 1.0, %v1681
        %v1683 = vmul.f32 %v1680, %v1682
        %v1684 = vadd.f32 %v1680, %v1683
        %vm1685 = vweird.f32 %v1679
        %vm1686 = vweird.f32 %v1680
        %vm1687 = vmor %vm1685, %vm1686
        %v1688 = vsel %vm1687, %v1680, %v1684
        %v1689 = vand.u32 2147483647, %v1679
        %vm1690 = vcmp.eq.f32.partialorder %v1689, 8.507059e+37
        %v1691 = vand.u32 %v1679, 2147483648
        %v1692 = vor.u32 1.1754944e-38, %v1691
        %v1693 = vsel %vm1690, %v1692, %v1688
        %v1694 = vmul.f32 1.0, %v1693
        %v1695 = vadd.f32 %v1630, %v1659
        %v1696 = vxor.u32 %v1695, 2147483648
        %v1697 = vmul.f32 %v1696, 1.442695
        %v1698 = vpow.pop %v1697
        %v1699 = vadd.f32 %v1698, 1.0
        %v1700 = vrcp.pop %v1699
        %v1701 = vmul.f32 %v1699, %v1700
        %v1702 = vsub.f32 1.0, %v1701
        %v1703 = vmul.f32 %v1700, %v1702
        %v1704 = vadd.f32 %v1700, %v1703
        %vm1705 = vweird.f32 %v1699
        %vm1706 = vweird.f32 %v1700
        %vm1707 = vmor %vm1705, %vm1706
        %v1708 = vsel %vm1707, %v1700, %v1704
        %v1709 = vand.u32 2147483647, %v1699
        %vm1710 = vcmp.eq.f32.partialorder %v1709, 8.507059e+37
        %v1711 = vand.u32 %v1699, 2147483648
        %v1712 = vor.u32 1.1754944e-38, %v1711
        %v1713 = vsel %vm1710, %v1712, %v1708
        %v1714 = vmul.f32 1.0, %v1713
        %v1715 = vmul.f32 %v1694, %v1672
        %v1716 = vadd.f32 %v1631, %v1715
        %v1717 = vtanh.pop %v1716
        %v1718 = vsub.f32 %v1634, %v1717
        %v1719 = vmul.f32 %v1714, %v1718
        %v1720 = vadd.f32 %v1717, %v1719
        %v1721 = vsub.f32 %v1720, %v1634
        %1723 = vset.pattern.permute.xlu0 0
        %1724 = vperm.xlu0 %1723, %v1633
        %v1725 = vpop.permute.xlu0 %1724
        %v1727 = vmul.f32 %v1725, %v1721
        %v1728 = vadd.f32 %v1634, %v1727
        %1729 = vst [vmem:[#allocation4] sm:$0xff] %v1728
        %v1730 = vmul.f32 %v1725, %v1720
        %s1731 = scalar_lea.vmem [#allocation3], %s1623
        %1732 = vst [vmem:[%s1731] sm:$0xff] %v1730
        %s1733 = scalar_select %p820, 0, 7
        %s1734 = smul.u32 %s1733, 8
        %s1735 = sshra.s32 %s1734, 3
        %s1736 = sand.u32 %s1734, 7
        %s1737 = smul.u32 %s1735, 3
        %s1738 = smul.addr %s1737, 8
        %s1739 = scalar_lea.vmem [#allocation2], %s1738
        %v1740 = vld [vmem:[%s1739] sm:$0xff]
        %v1741 = vld [vmem:[%s1739 + $0x8] sm:$0xff]
        %v1742 = vld [vmem:[%s1739 + $0x10] sm:$0xff]
        %s1743 = scalar_lea.vmem %s452, %s1734
        %v1744 = vld [vmem:[%s1743] sm:$0xff]
        %v1745 = vld [vmem:[#allocation4] sm:$0xff]
        %v1746 = vpack.c.bf16 %v1745, %v1745
        %1747 = vmatpush.bf16.msra.mxu0 %v943
        %1748 = vmatpush.bf16.msra.mxu0 %v940
        %1749 = vmatpush.bf16.msra.mxu0 %v937
        %1750 = vmatpush.bf16.msra.mxu0 %v934
        %1751 = vmatpush.bf16.msra.mxu0 %v931
        %1752 = vmatpush.bf16.msra.mxu0 %v928
        %1753 = vmatpush.bf16.msra.mxu0 %v925
        %1754 = vmatpush.bf16.msra.mxu0 %v922
        %1755 = vmatmul.bf16.gmra.mxu0 %v1746
        %v1756 = vpop.f32.mrf.mxu0
        %v1757 = vadd.f32 %v836, %v1756
        %v1758 = vpop.f32.mrf.mxu0
        %1759 = vdwg.mxu0
        %1760 = vmatpush.bf16.msra.mxu0 %v944
        %1761 = vmatpush.bf16.msra.mxu0 %v941
        %1762 = vmatpush.bf16.msra.mxu0 %v938
        %1763 = vmatpush.bf16.msra.mxu0 %v935
        %1764 = vmatpush.bf16.msra.mxu0 %v932
        %1765 = vmatpush.bf16.msra.mxu0 %v929
        %1766 = vmatpush.bf16.msra.mxu0 %v926
        %1767 = vmatpush.bf16.msra.mxu0 %v923
        %1768 = vmatmul.bf16.gmra.mxu0 %v1746
        %v1769 = vpop.f32.mrf.mxu0
        %v1770 = vadd.f32 %v837, %v1769
        %v1771 = vpop.f32.mrf.mxu0
        %1772 = vdwg.mxu0
        %1773 = vmatpush.bf16.msra.mxu0 %v945
        %1774 = vmatpush.bf16.msra.mxu0 %v942
        %1775 = vmatpush.bf16.msra.mxu0 %v939
        %1776 = vmatpush.bf16.msra.mxu0 %v936
        %1777 = vmatpush.bf16.msra.mxu0 %v933
        %1778 = vmatpush.bf16.msra.mxu0 %v930
        %1779 = vmatpush.bf16.msra.mxu0 %v927
        %1780 = vmatpush.bf16.msra.mxu0 %v924
        %1781 = vmatmul.bf16.gmra.mxu0 %v1746
        %v1782 = vpop.f32.mrf.mxu0
        %v1783 = vadd.f32 %v838, %v1782
        %v1784 = vpop.f32.mrf.mxu0
        %1785 = vdwg.mxu0
        %v1786 = vadd.f32 %v1740, %v1757
        %v1787 = vxor.u32 %v1786, 2147483648
        %v1788 = vmul.f32 %v1787, 1.442695
        %v1789 = vpow.pop %v1788
        %v1790 = vadd.f32 %v1789, 1.0
        %v1791 = vrcp.pop %v1790
        %v1792 = vmul.f32 %v1790, %v1791
        %v1793 = vsub.f32 1.0, %v1792
        %v1794 = vmul.f32 %v1791, %v1793
        %v1795 = vadd.f32 %v1791, %v1794
        %vm1796 = vweird.f32 %v1790
        %vm1797 = vweird.f32 %v1791
        %vm1798 = vmor %vm1796, %vm1797
        %v1799 = vsel %vm1798, %v1791, %v1795
        %v1800 = vand.u32 2147483647, %v1790
        %vm1801 = vcmp.eq.f32.partialorder %v1800, 8.507059e+37
        %v1802 = vand.u32 %v1790, 2147483648
        %v1803 = vor.u32 1.1754944e-38, %v1802
        %v1804 = vsel %vm1801, %v1803, %v1799
        %v1805 = vmul.f32 1.0, %v1804
        %v1806 = vadd.f32 %v1741, %v1770
        %v1807 = vxor.u32 %v1806, 2147483648
        %v1808 = vmul.f32 %v1807, 1.442695
        %v1809 = vpow.pop %v1808
        %v1810 = vadd.f32 %v1809, 1.0
        %v1811 = vrcp.pop %v1810
        %v1812 = vmul.f32 %v1810, %v1811
        %v1813 = vsub.f32 1.0, %v1812
        %v1814 = vmul.f32 %v1811, %v1813
        %v1815 = vadd.f32 %v1811, %v1814
        %vm1816 = vweird.f32 %v1810
        %vm1817 = vweird.f32 %v1811
        %vm1818 = vmor %vm1816, %vm1817
        %v1819 = vsel %vm1818, %v1811, %v1815
        %v1820 = vand.u32 2147483647, %v1810
        %vm1821 = vcmp.eq.f32.partialorder %v1820, 8.507059e+37
        %v1822 = vand.u32 %v1810, 2147483648
        %v1823 = vor.u32 1.1754944e-38, %v1822
        %v1824 = vsel %vm1821, %v1823, %v1819
        %v1825 = vmul.f32 1.0, %v1824
        %v1826 = vmul.f32 %v1805, %v1783
        %v1827 = vadd.f32 %v1742, %v1826
        %v1828 = vtanh.pop %v1827
        %v1829 = vsub.f32 %v1745, %v1828
        %v1830 = vmul.f32 %v1825, %v1829
        %v1831 = vadd.f32 %v1828, %v1830
        %v1832 = vsub.f32 %v1831, %v1745
        %1834 = vset.pattern.permute.xlu0 0
        %1835 = vperm.xlu0 %1834, %v1744
        %v1836 = vpop.permute.xlu0 %1835
        %v1838 = vmul.f32 %v1836, %v1832
        %v1839 = vadd.f32 %v1745, %v1838
        %1840 = vst [vmem:[#allocation4] sm:$0xff] %v1839
        %v1841 = vmul.f32 %v1836, %v1831
        %s1842 = scalar_lea.vmem [#allocation3], %s1734
        %1843 = vst [vmem:[%s1842] sm:$0xff] %v1841
        %v1844 = vld [vmem:[#allocation3] sm:$0xff]
        %v1845 = vld [vmem:[#allocation3 + $0x8] sm:$0xff]
        %v1846 = vld [vmem:[#allocation3 + $0x10] sm:$0xff]
        %v1847 = vld [vmem:[#allocation3 + $0x18] sm:$0xff]
        %v1848 = vld [vmem:[#allocation3 + $0x20] sm:$0xff]
        %v1849 = vld [vmem:[#allocation3 + $0x28] sm:$0xff]
        %v1850 = vld [vmem:[#allocation3 + $0x30] sm:$0xff]
        %v1851 = vld [vmem:[#allocation3 + $0x38] sm:$0xff]
        %v1852 = vpack.c.bf16 %v1844, %v1844
        %v1853 = vpack.c.bf16 %v1845, %v1845
        %v1854 = vpack.c.bf16 %v1846, %v1846
        %v1855 = vpack.c.bf16 %v1847, %v1847
        %v1856 = vpack.c.bf16 %v1848, %v1848
        %v1857 = vpack.c.bf16 %v1849, %v1849
        %v1858 = vpack.c.bf16 %v1850, %v1850
        %v1859 = vpack.c.bf16 %v1851, %v1851
        %1860 = vst [vmem:[%s429] sm:$0xf] %v1852
        %1861 = vst [vmem:[%s429 + $0x4] sm:$0xf] %v1853
        %1862 = vst [vmem:[%s429 + $0x8] sm:$0xf] %v1854
        %1863 = vst [vmem:[%s429 + $0xc] sm:$0xf] %v1855
        %1864 = vst [vmem:[%s429 + $0x10] sm:$0xf] %v1856
        %1865 = vst [vmem:[%s429 + $0x14] sm:$0xf] %v1857
        %1866 = vst [vmem:[%s429 + $0x18] sm:$0xf] %v1858
        %1867 = vst [vmem:[%s429 + $0x1c] sm:$0xf] %v1859
        %s1868 = sand.u32 %s225, 1
        %s1869 = sand.u32 %s225, 1
        %s1870 = smul.addr %s1869, 32
        %s1871 = scalar_lea.vmem [#allocation9], %s1870
        // Predicated region
        $region57: #{_bigru_core.3} parent=43 // pred_check
          %p1872 = pneg %p235
        $region58: #{_bigru_core.3} parent=43 // pred_check_branch
          %1874 = sbr.rel (%p1872) target = $region60
        $region59: #{_bigru_core.3} parent=43 // pred_region
          %s1875 = smul.u32 %s28, 2
          %s1876 = ssub.s32 0, %s1875
          %s1877 = smul.u32 %s27, %s1876
          %s1878 = sadd.s32 %s28, %s1877
          %s1879 = smul.u32 8, %s1878
          %s1880 = smul.addr %s1879, 2
          %s1881 = sadd.s32 %s27, %s1880
          %s1882 = smul.addr %s1881, 4
          %s1883 = scalar_lea.vmem %s6, %s1882
          // Predicated region
          $region61: #{_bigru_core.3} parent=59 // pred_check
            _
          $region62: #{_bigru_core.3} parent=59 // pred_check_branch
            %1885 = sbr.rel (0) target = $region64
          $region63: #{_bigru_core.3} parent=59 // pred_region
            // Predicated region
            $region65: #{_bigru_core.3} parent=63 // pred_check
              _
            $region66: #{_bigru_core.3} parent=63 // pred_check_branch
              %1887 = sbr.rel target = $region68
            $region67: #{_bigru_core.3} parent=63 // pred_region
              // Predicated region
              $region80: #{_bigru_core.3} parent=67 // pred_check
                _
              $region81: #{_bigru_core.3} parent=67 // pred_check_branch
                %1917 = sbr.rel (0) target = $region83
              $region82: #{_bigru_core.3} parent=67 // pred_region
                loop: start=0, step=1, limit=1
                $region84: #{_bigru_core.3} parent=82 // loop_pre_header
                  _
                $region85: #{_bigru_core.3} parent=82 // loop_header
                  %s1919 = sphi 0, %s1923
                  %p1920 = scmp.ge.s32.totalorder %s1919, 1
                  %s1924 = sphi %s1871, %s1871
                  %s1925 = sphi %s1883, %s1883
                $region86: #{_bigru_core.3} parent=82 // loop_header_branch
                  %1922 = sbr.rel (%p1920) target = $region90
                $region87: #{_bigru_core.3} parent=82 // loop_body
                  _
                $region88: #{_bigru_core.3} parent=82 // loop_footer
                  %s1923 = sadd.s32 1, %s1919
                $region89: #{_bigru_core.3} parent=82 // loop_footer_branch
                  %1918 = sbr.rel target = $region85
                $region90: #{_bigru_core.3} parent=82 // loop_exit
                  _
                %s1927 = ssub.s32 16, 1
                loop: start=0, step=1, limit=1
                $region91: #{_bigru_core.3} parent=82 // loop_pre_header
                  _
                $region92: #{_bigru_core.3} parent=82 // loop_header
                  %s1929 = sphi 0, %s1933
                  %p1930 = scmp.ge.s32.totalorder %s1929, 1
                  %s1934 = sphi %s1871, %s1871
                  %s1935 = sphi %s1883, %s1883
                $region93: #{_bigru_core.3} parent=82 // loop_header_branch
                  %1932 = sbr.rel (%p1930) target = $region97
                $region94: #{_bigru_core.3} parent=82 // loop_body
                  %v1936 = vld [vmem:[%s1934] sm:%s1927]
                  %1937 = vst [vmem:[%s1935] sm:%s1927] %v1936
                  %v1938 = vld [vmem:[%s1934 + $0x4] sm:%s1927]
                  %1939 = vst [vmem:[%s1935 + $0x8] sm:%s1927] %v1938
                  %v1940 = vld [vmem:[%s1934 + $0x8] sm:%s1927]
                  %1941 = vst [vmem:[%s1935 + $0x10] sm:%s1927] %v1940
                  %v1942 = vld [vmem:[%s1934 + $0xc] sm:%s1927]
                  %1943 = vst [vmem:[%s1935 + $0x18] sm:%s1927] %v1942
                  %v1944 = vld [vmem:[%s1934 + $0x10] sm:%s1927]
                  %1945 = vst [vmem:[%s1935 + $0x20] sm:%s1927] %v1944
                  %v1946 = vld [vmem:[%s1934 + $0x14] sm:%s1927]
                  %1947 = vst [vmem:[%s1935 + $0x28] sm:%s1927] %v1946
                  %v1948 = vld [vmem:[%s1934 + $0x18] sm:%s1927]
                  %1949 = vst [vmem:[%s1935 + $0x30] sm:%s1927] %v1948
                  %v1950 = vld [vmem:[%s1934 + $0x1c] sm:%s1927]
                  %1951 = vst [vmem:[%s1935 + $0x38] sm:%s1927] %v1950
                $region95: #{_bigru_core.3} parent=82 // loop_footer
                  %s1933 = sadd.s32 1, %s1929
                $region96: #{_bigru_core.3} parent=82 // loop_footer_branch
                  %1928 = sbr.rel target = $region92
                $region97: #{_bigru_core.3} parent=82 // loop_exit
                  _
              $region83: #{_bigru_core.3} parent=67 // pred_fallthru
                _
            $region68: #{_bigru_core.3} parent=63 // pred_fallthru
              _
            // Predicated region
            $region69: #{_bigru_core.3} parent=63 // pred_check
              _
            $region70: #{_bigru_core.3} parent=63 // pred_check_branch
              %1889 = sbr.rel (0) target = $region72
            $region71: #{_bigru_core.3} parent=63 // pred_region
              %s1891 = ssub.s32 16, 1
              loop: start=0, step=1, limit=1
              $region73: #{_bigru_core.3} parent=71 // loop_pre_header
                _
              $region74: #{_bigru_core.3} parent=71 // loop_header
                %s1893 = sphi 0, %s1897
                %p1894 = scmp.ge.s32.totalorder %s1893, 1
                %s1898 = sphi %s1871, %s1871
                %s1899 = sphi %s1883, %s1883
              $region75: #{_bigru_core.3} parent=71 // loop_header_branch
                %1896 = sbr.rel (%p1894) target = $region79
              $region76: #{_bigru_core.3} parent=71 // loop_body
                %v1900 = vld [vmem:[%s1898] sm:%s1891]
                %1901 = vst [vmem:[%s1899] sm:%s1891] %v1900
                %v1902 = vld [vmem:[%s1898 + $0x4] sm:%s1891]
                %1903 = vst [vmem:[%s1899 + $0x8] sm:%s1891] %v1902
                %v1904 = vld [vmem:[%s1898 + $0x8] sm:%s1891]
                %1905 = vst [vmem:[%s1899 + $0x10] sm:%s1891] %v1904
                %v1906 = vld [vmem:[%s1898 + $0xc] sm:%s1891]
                %1907 = vst [vmem:[%s1899 + $0x18] sm:%s1891] %v1906
                %v1908 = vld [vmem:[%s1898 + $0x10] sm:%s1891]
                %1909 = vst [vmem:[%s1899 + $0x20] sm:%s1891] %v1908
                %v1910 = vld [vmem:[%s1898 + $0x14] sm:%s1891]
                %1911 = vst [vmem:[%s1899 + $0x28] sm:%s1891] %v1910
                %v1912 = vld [vmem:[%s1898 + $0x18] sm:%s1891]
                %1913 = vst [vmem:[%s1899 + $0x30] sm:%s1891] %v1912
                %v1914 = vld [vmem:[%s1898 + $0x1c] sm:%s1891]
                %1915 = vst [vmem:[%s1899 + $0x38] sm:%s1891] %v1914
              $region77: #{_bigru_core.3} parent=71 // loop_footer
                %s1897 = sadd.s32 1, %s1893
              $region78: #{_bigru_core.3} parent=71 // loop_footer_branch
                %1892 = sbr.rel target = $region74
              $region79: #{_bigru_core.3} parent=71 // loop_exit
                _
            $region72: #{_bigru_core.3} parent=63 // pred_fallthru
              _
          $region64: #{_bigru_core.3} parent=59 // pred_fallthru
            _
          %1952 = vnop
        $region60: #{_bigru_core.3} parent=43 // pred_fallthru
          _
      $region44: #{_bigru_core.3} parent=5 // pred_fallthru
        _
      %p1953 = scmp.le.s32.totalorder 2, %s18
      // Predicated region
      $region98: #{_bigru_core.3} parent=5 // pred_check
        %p1954 = pneg %p1953
      $region99: #{_bigru_core.3} parent=5 // pred_check_branch
        %1956 = sbr.rel (%p1954) target = $region101
      $region100: #{_bigru_core.3} parent=5 // pred_region
        %s1957 = ssub.s32 %s18, 2
        // Predicated region
        $region102: #{_bigru_core.3} parent=100 // pred_check
          %p1958 = pneg %p241
        $region103: #{_bigru_core.3} parent=100 // pred_check_branch
          %1960 = sbr.rel (%p1958) target = $region105
        $region104: #{_bigru_core.3} parent=100 // pred_region
          %s1961 = sand.u32 %s226, 1
          %s1962 = sand.u32 %s226, 1
          %s1963 = smul.addr %s1962, 32
          %s1964 = scalar_lea.vmem [#allocation9], %s1963
        $region105: #{_bigru_core.3} parent=100 // pred_fallthru
          _
      $region101: #{_bigru_core.3} parent=5 // pred_fallthru
        _
    $region6: #{_bigru_core.3} parent=1 // loop_footer
      %s22 = sadd.s32 1, %s18
    $region7: #{_bigru_core.3} parent=1 // loop_footer_branch
      %17 = sbr.rel target = $region3
    $region8: #{_bigru_core.3} parent=1 // loop_exit
      _
    %1965 = vsyncpa [#allocation6], 1
    %s1966 = scalar_lea.sflag [#allocation6], 1
    %1967 = vsyncpa %s1966, 1
    %1968 = vsyncpa [#allocation8], 1
    %s1969 = scalar_lea.sflag [#allocation8], 1
    %1970 = vsyncpa %s1969, 1

// kernel: _bigru_core.4
$region0: #{_bigru_core.4}
  #allocation0 [shape = 'u32[]', space=smem, size = 0x4, offset = 0x4, fixed_abs, tag = 'smem constant byte address 0x4 - core index']
  #allocation1 [shape = 'u32[72,128]{1,0:T(1,128)}', space=vmem, size = 0x9000, scoped, tag = 'internal scratch']
  #allocation2 [shape = 'f32[64,384]{1,0:T(8,128)}', space=vmem, size = 0x18000, scoped, tag = 'scratch operand']
  #allocation3 [shape = 'f32[64,128]{1,0:T(8,128)}', space=vmem, size = 0x8000, scoped, tag = 'scratch operand']
  #allocation4 [shape = 'f32[8,128]{1,0:T(8,128)}', space=vmem, size = 0x1000, scoped, tag = 'scratch operand']
  %s0 = inlined_call_operand.vmem [shape: bf16[64,256], index: 0, kind: input, shape index: {}]
  %s1 = inlined_call_operand.vmem [shape: f32[64,1], index: 1, kind: input, shape index: {}]
  %s2 = inlined_call_operand.hbm [shape: bf16[2,256,384], index: 2, kind: input, shape index: {}]
  %s3 = inlined_call_operand.hbm [shape: bf16[2,128,384], index: 3, kind: input, shape index: {}]
  %s4 = inlined_call_operand.vmem [shape: f32[2,1,384], index: 4, kind: input, shape index: {}]
  %s5 = inlined_call_operand.vmem [shape: f32[2,1,384], index: 5, kind: input, shape index: {}]
  %s6 = inlined_call_operand.vmem [shape: bf16[64,256], index: 6, kind: output, shape index: {}]
  %s7 = sld [smem:[#allocation0]]
  $region106: #{_bigru_core.4} parent=0
    _
  %s9 = ssub.s32 1, %s7
  %s10 = scalar_select 0, %s9, %s7
  $region1: #{_bigru_core.4} parent=0
    #allocation5 [shape = 'u8[393216]{0}', space=vmem, size = 0x60000, scoped, tag = 'input window, operand 2']
    #allocation6 [shape = 's32[2]{0}', space=sflag, size = 0x8, scoped, tag = 'scoped memory for _bigru_core.4']
    #allocation7 [shape = 'u8[196608]{0}', space=vmem, size = 0x30000, scoped, tag = 'input window, operand 3']
    #allocation8 [shape = 's32[2]{0}', space=sflag, size = 0x8, scoped, tag = 'scoped memory for _bigru_core.4']
    #allocation9 [shape = 'u8[32768]{0}', space=vmem, size = 0x8000, scoped, tag = 'output window, operand 0']
    %11 = vsyncpa [#allocation6], 0
    %s12 = scalar_lea.sflag [#allocation6], 1
    %13 = vsyncpa %s12, 0
    %14 = vsyncpa [#allocation8], 0
    %s15 = scalar_lea.sflag [#allocation8], 1
    %16 = vsyncpa %s15, 0
    loop: start=0, step=1, limit=4
    $region2: #{_bigru_core.4} parent=1 // loop_pre_header
      _
    $region3: #{_bigru_core.4} parent=1 // loop_header
      %s18 = sphi 0, %s22
      %p19 = scmp.ge.s32.totalorder %s18, 4
      %s25 = sphi 0, %s37
      %s26 = sphi 0, %s33
      %s27 = sphi 0, %s25
      %s28 = sphi 0, %s26
      %s29 = sphi 0, %s27
      %s30 = sphi 0, %s28
      %s48 = sphi 0, %s50
      %s51 = sphi 0, %s48
      %s52 = sphi 0, %s51
      %s68 = sphi 0, %s52
      %s82 = sphi 0, %s84
      %s85 = sphi 0, %s82
      %s86 = sphi 0, %s85
      %s102 = sphi 0, %s86
      %s108 = sphi 0, %s110
      %s111 = sphi 0, %s108
      %s112 = sphi 0, %s111
      %s128 = sphi 0, %s112
      %s134 = sphi 0, %s136
      %s137 = sphi 0, %s134
      %s138 = sphi 0, %s137
      %s154 = sphi 0, %s138
      %s160 = sphi 0, %s162
      %s163 = sphi 0, %s160
      %s164 = sphi 0, %s163
      %s180 = sphi 0, %s164
      %s186 = sphi 0, %s188
      %s189 = sphi 0, %s186
      %s190 = sphi 0, %s189
      %s206 = sphi 0, %s190
      %s222 = sphi 0, %s224
      %s225 = sphi 0, %s222
      %s226 = sphi 0, %s225
      %s242 = sphi 0, %s226
    $region4: #{_bigru_core.4} parent=1 // loop_header_branch
      %21 = sbr.rel (%p19) target = $region8
    $region5: #{_bigru_core.4} parent=1 // loop_body
      %s23 = ssub.s32 %s18, 1
      %s24 = ssub.s32 %s18, 2
      %s31 = sadd.s32 1, %s26
      %p32 = scmp.ge.s32.totalorder %s31, 1
      %s33 = scalar_select %p32, 0, %s31
      %s34 = sadd.s32 1, %s25
      %s35 = scalar_select %p32, %s34, %s25
      %p36 = scmp.ge.s32.totalorder %s35, 2
      %s37 = scalar_select %p36, 0, %s35
      %s38 = smul.u32 %s26, 2
      %s39 = ssub.s32 0, %s38
      %s40 = smul.u32 %s25, %s39
      %s41 = sadd.s32 %s26, %s40
      %s42 = smul.u32 %s33, 2
      %s43 = ssub.s32 0, %s42
      %s44 = smul.u32 %s37, %s43
      %s45 = sadd.s32 %s33, %s44
      %s46 = ssub.s32 %s41, %s45
      %p47 = scmp.eq.s32.totalorder %s46, 0
      %s49 = sadd.s32 %s48, 1
      %s50 = scalar_select %p47, %s48, %s49
      %p53 = pneg %p47
      %p54 = scmp.eq.s32.totalorder %s18, 1
      %p55 = por %p53, %p54
      %p56 = scmp.ne.s32.totalorder %s48, %s51
      %p57 = scmp.eq.s32.totalorder %s18, 0
      %p58 = por %p56, %p57
      %p59 = scmp.ne.s32.totalorder %s48, %s51
      %p60 = scmp.eq.s32.totalorder %s23, 1
      %p61 = por %p59, %p60
      %p62 = scmp.ne.s32.totalorder %s51, %s52
      %p63 = scmp.eq.s32.totalorder %s23, 0
      %p64 = por %p62, %p63
      %p65 = scmp.ne.s32.totalorder %s51, %s52
      %p66 = scmp.eq.s32.totalorder %s24, 1
      %p67 = por %p65, %p66
      %p69 = scmp.ne.s32.totalorder %s52, %s68
      %p70 = scmp.eq.s32.totalorder %s24, 0
      %p71 = por %p69, %p70
      %s72 = smul.u32 %s26, 2
      %s73 = ssub.s32 0, %s72
      %s74 = smul.u32 %s25, %s73
      %s75 = sadd.s32 %s26, %s74
      %s76 = smul.u32 %s33, 2
      %s77 = ssub.s32 0, %s76
      %s78 = smul.u32 %s37, %s77
      %s79 = sadd.s32 %s33, %s78
      %s80 = ssub.s32 %s75, %s79
      %p81 = scmp.eq.s32.totalorder %s80, 0
      %s83 = sadd.s32 %s82, 1
      %s84 = scalar_select %p81, %s82, %s83
      %p87 = pneg %p81
      %p88 = scmp.eq.s32.totalorder %s18, 1
      %p89 = por %p87, %p88
      %p90 = scmp.ne.s32.totalorder %s82, %s85
      %p91 = scmp.eq.s32.totalorder %s18, 0
      %p92 = por %p90, %p91
      %p93 = scmp.ne.s32.totalorder %s82, %s85
      %p94 = scmp.eq.s32.totalorder %s23, 1
      %p95 = por %p93, %p94
      %p96 = scmp.ne.s32.totalorder %s85, %s86
      %p97 = scmp.eq.s32.totalorder %s23, 0
      %p98 = por %p96, %p97
      %p99 = scmp.ne.s32.totalorder %s85, %s86
      %p100 = scmp.eq.s32.totalorder %s24, 1
      %p101 = por %p99, %p100
      %p103 = scmp.ne.s32.totalorder %s86, %s102
      %p104 = scmp.eq.s32.totalorder %s24, 0
      %p105 = por %p103, %p104
      %s106 = ssub.s32 %s25, %s37
      %p107 = scmp.eq.s32.totalorder %s106, 0
      %s109 = sadd.s32 %s108, 1
      %s110 = scalar_select %p107, %s108, %s109
      %p113 = pneg %p107
      %p114 = scmp.eq.s32.totalorder %s18, 1
      %p115 = por %p113, %p114
      %p116 = scmp.ne.s32.totalorder %s108, %s111
      %p117 = scmp.eq.s32.totalorder %s18, 0
      %p118 = por %p116, %p117
      %p119 = scmp.ne.s32.totalorder %s108, %s111
      %p120 = scmp.eq.s32.totalorder %s23, 1
      %p121 = por %p119, %p120
      %p122 = scmp.ne.s32.totalorder %s111, %s112
      %p123 = scmp.eq.s32.totalorder %s23, 0
      %p124 = por %p122, %p123
      %p125 = scmp.ne.s32.totalorder %s111, %s112
      %p126 = scmp.eq.s32.totalorder %s24, 1
      %p127 = por %p125, %p126
      %p129 = scmp.ne.s32.totalorder %s112, %s128
      %p130 = scmp.eq.s32.totalorder %s24, 0
      %p131 = por %p129, %p130
      %s132 = ssub.s32 %s25, %s37
      %p133 = scmp.eq.s32.totalorder %s132, 0
      %s135 = sadd.s32 %s134, 1
      %s136 = scalar_select %p133, %s134, %s135
      %p139 = pneg %p133
      %p140 = scmp.eq.s32.totalorder %s18, 1
      %p141 = por %p139, %p140
      %p142 = scmp.ne.s32.totalorder %s134, %s137
      %p143 = scmp.eq.s32.totalorder %s18, 0
      %p144 = por %p142, %p143
      %p145 = scmp.ne.s32.totalorder %s134, %s137
      %p146 = scmp.eq.s32.totalorder %s23, 1
      %p147 = por %p145, %p146
      %p148 = scmp.ne.s32.totalorder %s137, %s138
      %p149 = scmp.eq.s32.totalorder %s23, 0
      %p150 = por %p148, %p149
      %p151 = scmp.ne.s32.totalorder %s137, %s138
      %p152 = scmp.eq.s32.totalorder %s24, 1
      %p153 = por %p151, %p152
      %p155 = scmp.ne.s32.totalorder %s138, %s154
      %p156 = scmp.eq.s32.totalorder %s24, 0
      %p157 = por %p155, %p156
      %s158 = ssub.s32 %s25, %s37
      %p159 = scmp.eq.s32.totalorder %s158, 0
      %s161 = sadd.s32 %s160, 1
      %s162 = scalar_select %p159, %s160, %s161
      %p165 = pneg %p159
      %p166 = scmp.eq.s32.totalorder %s18, 1
      %p167 = por %p165, %p166
      %p168 = scmp.ne.s32.totalorder %s160, %s163
      %p169 = scmp.eq.s32.totalorder %s18, 0
      %p170 = por %p168, %p169
      %p171 = scmp.ne.s32.totalorder %s160, %s163
      %p172 = scmp.eq.s32.totalorder %s23, 1
      %p173 = por %p171, %p172
      %p174 = scmp.ne.s32.totalorder %s163, %s164
      %p175 = scmp.eq.s32.totalorder %s23, 0
      %p176 = por %p174, %p175
      %p177 = scmp.ne.s32.totalorder %s163, %s164
      %p178 = scmp.eq.s32.totalorder %s24, 1
      %p179 = por %p177, %p178
      %p181 = scmp.ne.s32.totalorder %s164, %s180
      %p182 = scmp.eq.s32.totalorder %s24, 0
      %p183 = por %p181, %p182
      %s184 = ssub.s32 %s25, %s37
      %p185 = scmp.eq.s32.totalorder %s184, 0
      %s187 = sadd.s32 %s186, 1
      %s188 = scalar_select %p185, %s186, %s187
      %p191 = pneg %p185
      %p192 = scmp.eq.s32.totalorder %s18, 1
      %p193 = por %p191, %p192
      %p194 = scmp.ne.s32.totalorder %s186, %s189
      %p195 = scmp.eq.s32.totalorder %s18, 0
      %p196 = por %p194, %p195
      %p197 = scmp.ne.s32.totalorder %s186, %s189
      %p198 = scmp.eq.s32.totalorder %s23, 1
      %p199 = por %p197, %p198
      %p200 = scmp.ne.s32.totalorder %s189, %s190
      %p201 = scmp.eq.s32.totalorder %s23, 0
      %p202 = por %p200, %p201
      %p203 = scmp.ne.s32.totalorder %s189, %s190
      %p204 = scmp.eq.s32.totalorder %s24, 1
      %p205 = por %p203, %p204
      %p207 = scmp.ne.s32.totalorder %s190, %s206
      %p208 = scmp.eq.s32.totalorder %s24, 0
      %p209 = por %p207, %p208
      %s210 = smul.u32 %s26, 2
      %s211 = ssub.s32 0, %s210
      %s212 = smul.u32 %s25, %s211
      %s213 = sadd.s32 %s26, %s212
      %s214 = smul.u32 %s33, 2
      %s215 = ssub.s32 0, %s214
      %s216 = smul.u32 %s37, %s215
      %s217 = sadd.s32 %s33, %s216
      %s218 = ssub.s32 %s213, %s217
      %s219 = ssub.s32 %s25, %s37
      %s220 = sor.u32 %s218, %s219
      %p221 = scmp.eq.s32.totalorder %s220, 0
      %s223 = sadd.s32 %s222, 1
      %s224 = scalar_select %p221, %s222, %s223
      %p227 = pneg %p221
      %p228 = scmp.eq.s32.totalorder %s18, 1
      %p229 = por %p227, %p228
      %p230 = scmp.ne.s32.totalorder %s222, %s225
      %p231 = scmp.eq.s32.totalorder %s18, 0
      %p232 = por %p230, %p231
      %p233 = scmp.ne.s32.totalorder %s222, %s225
      %p234 = scmp.eq.s32.totalorder %s23, 1
      %p235 = por %p233, %p234
      %p236 = scmp.ne.s32.totalorder %s225, %s226
      %p237 = scmp.eq.s32.totalorder %s23, 0
      %p238 = por %p236, %p237
      %p239 = scmp.ne.s32.totalorder %s225, %s226
      %p240 = scmp.eq.s32.totalorder %s24, 1
      %p241 = por %p239, %p240
      %p243 = scmp.ne.s32.totalorder %s226, %s242
      %p244 = scmp.eq.s32.totalorder %s24, 0
      %p245 = por %p243, %p244
      %p246 = scmp.le.s32.totalorder 1, %s18
      %p247 = scmp.lt.s32.totalorder %s18, 3
      %p248 = pnand %p246, %p247
      %p249 = pneg %p248
      // Predicated region
      $region9: #{_bigru_core.4} parent=5 // pred_check
        _
      $region10: #{_bigru_core.4} parent=5 // pred_check_branch
        %251 = sbr.rel (%p248) target = $region12
      $region11: #{_bigru_core.4} parent=5 // pred_region
        %s252 = ssub.s32 %s18, 1
      $region12: #{_bigru_core.4} parent=5 // pred_fallthru
        _
      %p253 = scmp.lt.s32.totalorder %s18, 2
      // Predicated region
      $region13: #{_bigru_core.4} parent=5 // pred_check
        %p254 = pneg %p253
      $region14: #{_bigru_core.4} parent=5 // pred_check_branch
        %256 = sbr.rel (%p254) target = $region16
      $region15: #{_bigru_core.4} parent=5 // pred_region
        // Predicated region
        $region17: #{_bigru_core.4} parent=15 // pred_check
          %p257 = pneg %p58
        $region18: #{_bigru_core.4} parent=15 // pred_check_branch
          %259 = sbr.rel (%p257) target = $region20
        $region19: #{_bigru_core.4} parent=15 // pred_region
          %s260 = smul.u32 %s26, 2
          %s261 = ssub.s32 0, %s260
          %s262 = smul.u32 %s25, %s261
          %s263 = sadd.s32 %s26, %s262
          %s264 = smul.u32 8, %s263
          %p265 = scmp.lt.s32.totalorder %s264, 7
          %s266 = scalar_select %p265, %s264, 7
          %s267 = smul.addr %s266, 2
          %s268 = smul.addr %s267, 4
          %s269 = scalar_lea.vmem %s0, %s268
          %s270 = smul.u32 %s26, 2
          %s271 = ssub.s32 0, %s270
          %s272 = smul.u32 %s25, %s271
          %s273 = sadd.s32 %s26, %s272
          %s274 = smul.u32 8, %s273
        $region20: #{_bigru_core.4} parent=15 // pred_fallthru
          _
        // Predicated region
        $region21: #{_bigru_core.4} parent=15 // pred_check
          %p275 = pneg %p92
        $region22: #{_bigru_core.4} parent=15 // pred_check_branch
          %277 = sbr.rel (%p275) target = $region24
        $region23: #{_bigru_core.4} parent=15 // pred_region
          %s278 = smul.u32 %s26, 2
          %s279 = ssub.s32 0, %s278
          %s280 = smul.u32 %s25, %s279
          %s281 = sadd.s32 %s26, %s280
          %s282 = smul.u32 8, %s281
          %p283 = scmp.lt.s32.totalorder %s282, 7
          %s284 = scalar_select %p283, %s282, 7
          %s285 = smul.addr %s284, 8
          %s286 = scalar_lea.vmem %s1, %s285
          %s287 = smul.u32 %s26, 2
          %s288 = ssub.s32 0, %s287
          %s289 = smul.u32 %s25, %s288
          %s290 = sadd.s32 %s26, %s289
          %s291 = smul.u32 8, %s290
        $region24: #{_bigru_core.4} parent=15 // pred_fallthru
          _
        // Predicated region
        $region25: #{_bigru_core.4} parent=15 // pred_check
          %p292 = pneg %p118
        $region26: #{_bigru_core.4} parent=15 // pred_check_branch
          %294 = sbr.rel (%p292) target = $region28
        $region27: #{_bigru_core.4} parent=15 // pred_region
          %s295 = sand.u32 %s108, 1
          %s296 = scalar_lea.sflag [#allocation6], %s295
          %s297 = sand.u32 %s108, 1
          %s298 = smul.addr %s297, 384
          %s299 = scalar_lea.vmem [#allocation5], %s298
          %301 = vsyncadd %s296, 0
          %s302 = smul.addr %s25, 96
          %s303 = smul.addr %s302, 4
          %s304 = scalar_lea.hbm %s2, %s303
          %s305 = sshll.u32 %s304, 4
          %s306 = int_to_ptr.hbm [resolvable:$true] %s305
          %s307 = sshll.u32 %s299, 4
          %s308 = int_to_ptr.vmem [resolvable:$true] %s307
          %313 = dma.hbm_to_vmem [thread:$0]  %s306, 6144, %s308, %s296, 192, 192, 12
        $region28: #{_bigru_core.4} parent=15 // pred_fallthru
          _
        // Predicated region
        $region29: #{_bigru_core.4} parent=15 // pred_check
          %p314 = pneg %p144
        $region30: #{_bigru_core.4} parent=15 // pred_check_branch
          %316 = sbr.rel (%p314) target = $region32
        $region31: #{_bigru_core.4} parent=15 // pred_region
          %s317 = sand.u32 %s134, 1
          %s318 = scalar_lea.sflag [#allocation8], %s317
          %s319 = sand.u32 %s134, 1
          %s320 = smul.addr %s319, 192
          %s321 = scalar_lea.vmem [#allocation7], %s320
          %323 = vsyncadd %s318, 0
          %s324 = smul.addr %s25, 48
          %s325 = smul.addr %s324, 4
          %s326 = scalar_lea.hbm %s3, %s325
          %s327 = sshll.u32 %s326, 4
          %s328 = int_to_ptr.hbm [resolvable:$true] %s327
          %s329 = sshll.u32 %s321, 4
          %s330 = int_to_ptr.vmem [resolvable:$true] %s329
          %335 = dma.hbm_to_vmem [thread:$0]  %s328, 3072, %s330, %s318, 192, 192, 12
        $region32: #{_bigru_core.4} parent=15 // pred_fallthru
          _
        // Predicated region
        $region33: #{_bigru_core.4} parent=15 // pred_check
          %p336 = pneg %p170
        $region34: #{_bigru_core.4} parent=15 // pred_check_branch
          %338 = sbr.rel (%p336) target = $region36
        $region35: #{_bigru_core.4} parent=15 // pred_region
          %p339 = scmp.lt.s32.totalorder %s25, 1
          %s340 = scalar_select %p339, %s25, 1
          %s341 = smul.addr %s340, 3
          %s342 = scalar_lea.vmem %s4, %s341
        $region36: #{_bigru_core.4} parent=15 // pred_fallthru
          _
        // Predicated region
        $region37: #{_bigru_core.4} parent=15 // pred_check
          %p343 = pneg %p196
        $region38: #{_bigru_core.4} parent=15 // pred_check_branch
          %345 = sbr.rel (%p343) target = $region40
        $region39: #{_bigru_core.4} parent=15 // pred_region
          %p346 = scmp.lt.s32.totalorder %s25, 1
          %s347 = scalar_select %p346, %s25, 1
          %s348 = smul.addr %s347, 3
          %s349 = scalar_lea.vmem %s5, %s348
        $region40: #{_bigru_core.4} parent=15 // pred_fallthru
          _
      $region16: #{_bigru_core.4} parent=5 // pred_fallthru
        _
      %p350 = scmp.le.s32.totalorder 1, %s18
      %p351 = scmp.lt.s32.totalorder %s18, 3
      %p352 = pnand %p350, %p351
      %p353 = pneg %p352
      // Predicated region
      $region41: #{_bigru_core.4} parent=5 // pred_check
        _
      $region42: #{_bigru_core.4} parent=5 // pred_check_branch
        %355 = sbr.rel (%p352) target = $region44
      $region43: #{_bigru_core.4} parent=5 // pred_region
        %s356 = ssub.s32 %s18, 1
        %s357 = sand.u32 %s111, 1
        %s358 = scalar_lea.sflag [#allocation6], %s357
        %s359 = sand.u32 %s111, 1
        %s360 = smul.addr %s359, 384
        %s361 = scalar_lea.vmem [#allocation5], %s360
        // Predicated region
        $region45: #{_bigru_core.4} parent=43 // pred_check
          %p362 = pneg %p124
        $region46: #{_bigru_core.4} parent=43 // pred_check_branch
          %364 = sbr.rel (%p362) target = $region48
        $region47: #{_bigru_core.4} parent=43 // pred_region
          %366 = dma.done %s358, 6144
        $region48: #{_bigru_core.4} parent=43 // pred_fallthru
          _
        %s367 = sand.u32 %s137, 1
        %s368 = scalar_lea.sflag [#allocation8], %s367
        %s369 = sand.u32 %s137, 1
        %s370 = smul.addr %s369, 192
        %s371 = scalar_lea.vmem [#allocation7], %s370
        // Predicated region
        $region49: #{_bigru_core.4} parent=43 // pred_check
          %p372 = pneg %p150
        $region50: #{_bigru_core.4} parent=43 // pred_check_branch
          %374 = sbr.rel (%p372) target = $region52
        $region51: #{_bigru_core.4} parent=43 // pred_region
          %376 = dma.done %s368, 3072
        $region52: #{_bigru_core.4} parent=43 // pred_fallthru
          _
        %s377 = smul.u32 %s28, 2
        %s378 = ssub.s32 0, %s377
        %s379 = smul.u32 %s27, %s378
        %s380 = sadd.s32 %s28, %s379
        %s381 = smul.u32 8, %s380
        %p382 = scmp.lt.s32.totalorder %s381, 7
        %s383 = scalar_select %p382, %s381, 7
        %s384 = smul.addr %s383, 2
        %s385 = smul.addr %s384, 4
        %s386 = scalar_lea.vmem %s0, %s385
        %p387 = pneg %p64
        %p388 = pneg %p61
        %s389 = smul.u32 %s28, 2
        %s390 = ssub.s32 0, %s389
        %s391 = smul.u32 %s27, %s390
        %s392 = sadd.s32 %s28, %s391
        %s393 = smul.u32 8, %s392
        %p394 = scmp.lt.s32.totalorder %s393, 7
        %s395 = scalar_select %p394, %s393, 7
        %s396 = smul.addr %s395, 8
        %s397 = scalar_lea.vmem %s1, %s396
        %p398 = pneg %p98
        %p399 = pneg %p95
        %s400 = sand.u32 %s111, 1
        %s401 = scalar_lea.sflag [#allocation6], %s400
        %s402 = sand.u32 %s111, 1
        %s403 = smul.addr %s402, 384
        %s404 = scalar_lea.vmem [#allocation5], %s403
        %p405 = pneg %p124
        %p406 = pneg %p121
        %s407 = sand.u32 %s137, 1
        %s408 = scalar_lea.sflag [#allocation8], %s407
        %s409 = sand.u32 %s137, 1
        %s410 = smul.addr %s409, 192
        %s411 = scalar_lea.vmem [#allocation7], %s410
        %p412 = pneg %p150
        %p413 = pneg %p147
        %p414 = scmp.lt.s32.totalorder %s27, 1
        %s415 = scalar_select %p414, %s27, 1
        %s416 = smul.addr %s415, 3
        %s417 = scalar_lea.vmem %s4, %s416
        %p418 = pneg %p176
        %p419 = pneg %p173
        %p420 = scmp.lt.s32.totalorder %s27, 1
        %s421 = scalar_select %p420, %s27, 1
        %s422 = smul.addr %s421, 3
        %s423 = scalar_lea.vmem %s5, %s422
        %p424 = pneg %p202
        %p425 = pneg %p199
        %p426 = pneg %p238
        %p427 = pneg %p235
        %s428 = sand.u32 %s225, 1
        %s429 = sand.u32 %s225, 1
        %s430 = smul.addr %s429, 32
        %s431 = scalar_lea.vmem [#allocation9], %s430
        %s432 = smul.u32 %s28, 2
        %s433 = ssub.s32 0, %s432
        %s434 = smul.u32 %s27, %s433
        %s435 = sadd.s32 %s28, %s434
        %s436 = smul.u32 8, %s435
        %p437 = scmp.lt.s32.totalorder %s436, 7
        %s438 = scalar_select %p437, %s436, 7
        %s439 = smul.addr %s438, 2
        %s440 = smul.addr %s439, 4
        %s441 = scalar_lea.vmem %s0, %s440
        %s442 = smul.u32 %s28, 2
        %s443 = ssub.s32 0, %s442
        %s444 = smul.u32 %s27, %s443
        %s445 = sadd.s32 %s28, %s444
        %s446 = smul.u32 8, %s445
        %s447 = smul.u32 %s28, 2
        %s448 = ssub.s32 0, %s447
        %s449 = smul.u32 %s27, %s448
        %s450 = sadd.s32 %s28, %s449
        %s451 = smul.u32 8, %s450
        %p452 = scmp.lt.s32.totalorder %s451, 7
        %s453 = scalar_select %p452, %s451, 7
        %s454 = smul.addr %s453, 8
        %s455 = scalar_lea.vmem %s1, %s454
        %s456 = smul.u32 %s28, 2
        %s457 = ssub.s32 0, %s456
        %s458 = smul.u32 %s27, %s457
        %s459 = sadd.s32 %s28, %s458
        %s460 = smul.u32 8, %s459
        %p461 = scmp.lt.s32.totalorder %s27, 1
        %s462 = scalar_select %p461, %s27, 1
        %s463 = smul.addr %s462, 3
        %s464 = scalar_lea.vmem %s4, %s463
        %p465 = scmp.lt.s32.totalorder %s27, 1
        %s466 = scalar_select %p465, %s27, 1
        %s467 = smul.addr %s466, 3
        %s468 = scalar_lea.vmem %s5, %s467
        %s469 = smul.u32 %s28, 2
        %s470 = ssub.s32 0, %s469
        %s471 = smul.u32 %s27, %s470
        %s472 = sadd.s32 %s28, %s471
        %s473 = smul.u32 8, %s472
        %p474 = scmp.eq.s32.totalorder %s28, 0
        // Predicated region
        $region53: #{_bigru_core.4} parent=43 // pred_check
          %p475 = pneg %p474
        $region54: #{_bigru_core.4} parent=43 // pred_check_branch
          %477 = sbr.rel (%p475) target = $region56
        $region55: #{_bigru_core.4} parent=43 // pred_region
          %478 = vst [vmem:[#allocation4] sm:$0xff] 0.0
        $region56: #{_bigru_core.4} parent=43 // pred_fallthru
          _
        %v479 = vld [vmem:[%s441] sm:$0xff]
        %v480 = vld [vmem:[%s441 + $0x8] sm:$0xff]
        %v481 = vld [vmem:[%s441 + $0x10] sm:$0xff]
        %v482 = vld [vmem:[%s441 + $0x18] sm:$0xff]
        %v483 = vld [vmem:[%s441 + $0x20] sm:$0xff]
        %v484 = vld [vmem:[%s441 + $0x28] sm:$0xff]
        %v485 = vld [vmem:[%s441 + $0x30] sm:$0xff]
        %v486 = vld [vmem:[%s441 + $0x38] sm:$0xff]
        %v487 = vld [vmem:[%s361] sm:$0xff]
        %v488 = vld [vmem:[%s361 + $0x8] sm:$0xf]
        %v489 = vld [vmem:[%s361 + $0xc] sm:$0xff]
        %v490 = vld [vmem:[%s361 + $0x14] sm:$0xf]
        %v491 = vld [vmem:[%s361 + $0x18] sm:$0xff]
        %v492 = vld [vmem:[%s361 + $0x20] sm:$0xf]
        %v493 = vld [vmem:[%s361 + $0x24] sm:$0xff]
        %v494 = vld [vmem:[%s361 + $0x2c] sm:$0xf]
        %v495 = vld [vmem:[%s361 + $0x30] sm:$0xff]
        %v496 = vld [vmem:[%s361 + $0x38] sm:$0xf]
        %v497 = vld [vmem:[%s361 + $0x3c] sm:$0xff]
        %v498 = vld [vmem:[%s361 + $0x44] sm:$0xf]
        %v499 = vld [vmem:[%s361 + $0x48] sm:$0xff]
        %v500 = vld [vmem:[%s361 + $0x50] sm:$0xf]
        %v501 = vld [vmem:[%s361 + $0x54] sm:$0xff]
        %v502 = vld [vmem:[%s361 + $0x5c] sm:$0xf]
        %v503 = vld [vmem:[%s361 + $0x60] sm:$0xff]
        %v504 = vld [vmem:[%s361 + $0x68] sm:$0xf]
        %v505 = vld [vmem:[%s361 + $0x6c] sm:$0xff]
        %v506 = vld [vmem:[%s361 + $0x74] sm:$0xf]
        %v507 = vld [vmem:[%s361 + $0x78] sm:$0xff]
        %v508 = vld [vmem:[%s361 + $0x80] sm:$0xf]
        %v509 = vld [vmem:[%s361 + $0x84] sm:$0xff]
        %v510 = vld [vmem:[%s361 + $0x8c] sm:$0xf]
        %v511 = vld [vmem:[%s361 + $0x90] sm:$0xff]
        %v512 = vld [vmem:[%s361 + $0x98] sm:$0xf]
        %v513 = vld [vmem:[%s361 + $0x9c] sm:$0xff]
        %v514 = vld [vmem:[%s361 + $0xa4] sm:$0xf]
        %v515 = vld [vmem:[%s361 + $0xa8] sm:$0xff]
        %v516 = vld [vmem:[%s361 + $0xb0] sm:$0xf]
        %v517 = vld [vmem:[%s361 + $0xb4] sm:$0xff]
        %v518 = vld [vmem:[%s361 + $0xbc] sm:$0xf]
        %v519 = vld [vmem:[%s361 + $0xc0] sm:$0xff]
        %v520 = vld [vmem:[%s361 + $0xc8] sm:$0xf]
        %v521 = vld [vmem:[%s361 + $0xcc] sm:$0xff]
        %v522 = vld [vmem:[%s361 + $0xd4] sm:$0xf]
        %v523 = vld [vmem:[%s361 + $0xd8] sm:$0xff]
        %v524 = vld [vmem:[%s361 + $0xe0] sm:$0xf]
        %v525 = vld [vmem:[%s361 + $0xe4] sm:$0xff]
        %v526 = vld [vmem:[%s361 + $0xec] sm:$0xf]
        %v527 = vld [vmem:[%s361 + $0xf0] sm:$0xff]
        %v528 = vld [vmem:[%s361 + $0xf8] sm:$0xf]
        %v529 = vld [vmem:[%s361 + $0xfc] sm:$0xff]
        %v530 = vld [vmem:[%s361 + $0x104] sm:$0xf]
        %v531 = vld [vmem:[%s361 + $0x108] sm:$0xff]
        %v532 = vld [vmem:[%s361 + $0x110] sm:$0xf]
        %v533 = vld [vmem:[%s361 + $0x114] sm:$0xff]
        %v534 = vld [vmem:[%s361 + $0x11c] sm:$0xf]
        %v535 = vld [vmem:[%s361 + $0x120] sm:$0xff]
        %v536 = vld [vmem:[%s361 + $0x128] sm:$0xf]
        %v537 = vld [vmem:[%s361 + $0x12c] sm:$0xff]
        %v538 = vld [vmem:[%s361 + $0x134] sm:$0xf]
        %v539 = vld [vmem:[%s361 + $0x138] sm:$0xff]
        %v540 = vld [vmem:[%s361 + $0x140] sm:$0xf]
        %v541 = vld [vmem:[%s361 + $0x144] sm:$0xff]
        %v542 = vld [vmem:[%s361 + $0x14c] sm:$0xf]
        %v543 = vld [vmem:[%s361 + $0x150] sm:$0xff]
        %v544 = vld [vmem:[%s361 + $0x158] sm:$0xf]
        %v545 = vld [vmem:[%s361 + $0x15c] sm:$0xff]
        %v546 = vld [vmem:[%s361 + $0x164] sm:$0xf]
        %v547 = vld [vmem:[%s361 + $0x168] sm:$0xff]
        %v548 = vld [vmem:[%s361 + $0x170] sm:$0xf]
        %v549 = vld [vmem:[%s361 + $0x174] sm:$0xff]
        %v550 = vld [vmem:[%s361 + $0x17c] sm:$0xf]
        %v551 = vld [vmem:[%s464] sm:$0x7]
        %v553 = vperm.slane %v551, 0
        %v554 = vperm.slane %v551, 1
        %v555 = vperm.slane %v551, 2
        %v567 = vunpack.c.l.b16 %v479
        %v568 = vunpack.c.h.b16 %v479
        %v569 = vunpack.c.l.b16 %v480
        %v570 = vunpack.c.h.b16 %v480
        %v571 = vunpack.c.l.b16 %v481
        %v572 = vunpack.c.h.b16 %v481
        %v573 = vunpack.c.l.b16 %v482
        %v574 = vunpack.c.h.b16 %v482
        %v575 = vunpack.c.l.b16 %v483
        %v576 = vunpack.c.h.b16 %v483
        %v577 = vunpack.c.l.b16 %v484
        %v578 = vunpack.c.h.b16 %v484
        %v579 = vunpack.c.l.b16 %v485
        %v580 = vunpack.c.h.b16 %v485
        %v581 = vunpack.c.l.b16 %v486
        %v582 = vunpack.c.h.b16 %v486
        %v583 = vpack.c.b16 %v569, %v567
        %v584 = vpack.c.b16 %v570, %v568
        %v585 = vpack.c.b16 %v573, %v571
        %v586 = vpack.c.b16 %v574, %v572
        %v587 = vpack.c.b16 %v577, %v575
        %v588 = vpack.c.b16 %v578, %v576
        %v589 = vpack.c.b16 %v581, %v579
        %v590 = vpack.c.b16 %v582, %v580
        %v663 = vunpack.c.l.b16 %v487
        %v664 = vunpack.c.h.b16 %v487
        %v665 = vunpack.c.l.b16 %v488
        %v666 = vunpack.c.l.b16 %v489
        %v667 = vunpack.c.h.b16 %v489
        %v668 = vunpack.c.l.b16 %v490
        %v669 = vunpack.c.l.b16 %v491
        %v670 = vunpack.c.h.b16 %v491
        %v671 = vunpack.c.l.b16 %v492
        %v672 = vunpack.c.l.b16 %v493
        %v673 = vunpack.c.h.b16 %v493
        %v674 = vunpack.c.l.b16 %v494
        %v675 = vunpack.c.l.b16 %v495
        %v676 = vunpack.c.h.b16 %v495
        %v677 = vunpack.c.l.b16 %v496
        %v678 = vunpack.c.l.b16 %v497
        %v679 = vunpack.c.h.b16 %v497
        %v680 = vunpack.c.l.b16 %v498
        %v681 = vunpack.c.l.b16 %v499
        %v682 = vunpack.c.h.b16 %v499
        %v683 = vunpack.c.l.b16 %v500
        %v684 = vunpack.c.l.b16 %v501
        %v685 = vunpack.c.h.b16 %v501
        %v686 = vunpack.c.l.b16 %v502
        %v687 = vunpack.c.l.b16 %v503
        %v688 = vunpack.c.h.b16 %v503
        %v689 = vunpack.c.l.b16 %v504
        %v690 = vunpack.c.l.b16 %v505
        %v691 = vunpack.c.h.b16 %v505
        %v692 = vunpack.c.l.b16 %v506
        %v693 = vunpack.c.l.b16 %v507
        %v694 = vunpack.c.h.b16 %v507
        %v695 = vunpack.c.l.b16 %v508
        %v696 = vunpack.c.l.b16 %v509
        %v697 = vunpack.c.h.b16 %v509
        %v698 = vunpack.c.l.b16 %v510
        %v699 = vunpack.c.l.b16 %v511
        %v700 = vunpack.c.h.b16 %v511
        %v701 = vunpack.c.l.b16 %v512
        %v702 = vunpack.c.l.b16 %v513
        %v703 = vunpack.c.h.b16 %v513
        %v704 = vunpack.c.l.b16 %v514
        %v705 = vunpack.c.l.b16 %v515
        %v706 = vunpack.c.h.b16 %v515
        %v707 = vunpack.c.l.b16 %v516
        %v708 = vunpack.c.l.b16 %v517
        %v709 = vunpack.c.h.b16 %v517
        %v710 = vunpack.c.l.b16 %v518
        %v711 = vunpack.c.l.b16 %v519
        %v712 = vunpack.c.h.b16 %v519
        %v713 = vunpack.c.l.b16 %v520
        %v714 = vunpack.c.l.b16 %v521
        %v715 = vunpack.c.h.b16 %v521
        %v716 = vunpack.c.l.b16 %v522
        %v717 = vunpack.c.l.b16 %v523
        %v718 = vunpack.c.h.b16 %v523
        %v719 = vunpack.c.l.b16 %v524
        %v720 = vunpack.c.l.b16 %v525
        %v721 = vunpack.c.h.b16 %v525
        %v722 = vunpack.c.l.b16 %v526
        %v723 = vunpack.c.l.b16 %v527
        %v724 = vunpack.c.h.b16 %v527
        %v725 = vunpack.c.l.b16 %v528
        %v726 = vunpack.c.l.b16 %v529
        %v727 = vunpack.c.h.b16 %v529
        %v728 = vunpack.c.l.b16 %v530
        %v729 = vunpack.c.l.b16 %v531
        %v730 = vunpack.c.h.b16 %v531
        %v731 = vunpack.c.l.b16 %v532
        %v732 = vunpack.c.l.b16 %v533
        %v733 = vunpack.c.h.b16 %v533
        %v734 = vunpack.c.l.b16 %v534
        %v735 = vunpack.c.l.b16 %v535
        %v736 = vunpack.c.h.b16 %v535
        %v737 = vunpack.c.l.b16 %v536
        %v738 = vunpack.c.l.b16 %v537
        %v739 = vunpack.c.h.b16 %v537
        %v740 = vunpack.c.l.b16 %v538
        %v741 = vunpack.c.l.b16 %v539
        %v742 = vunpack.c.h.b16 %v539
        %v743 = vunpack.c.l.b16 %v540
        %v744 = vunpack.c.l.b16 %v541
        %v745 = vunpack.c.h.b16 %v541
        %v746 = vunpack.c.l.b16 %v542
        %v747 = vunpack.c.l.b16 %v543
        %v748 = vunpack.c.h.b16 %v543
        %v749 = vunpack.c.l.b16 %v544
        %v750 = vunpack.c.l.b16 %v545
        %v751 = vunpack.c.h.b16 %v545
        %v752 = vunpack.c.l.b16 %v546
        %v753 = vunpack.c.l.b16 %v547
        %v754 = vunpack.c.h.b16 %v547
        %v755 = vunpack.c.l.b16 %v548
        %v756 = vunpack.c.l.b16 %v549
        %v757 = vunpack.c.h.b16 %v549
        %v758 = vunpack.c.l.b16 %v550
        %v759 = vpack.c.b16 %v666, %v663
        %v760 = vpack.c.b16 %v667, %v664
        %v761 = vpack.c.b16 %v668, %v665
        %v762 = vpack.c.b16 %v672, %v669
        %v763 = vpack.c.b16 %v673, %v670
        %v764 = vpack.c.b16 %v674, %v671
        %v765 = vpack.c.b16 %v678, %v675
        %v766 = vpack.c.b16 %v679, %v676
        %v767 = vpack.c.b16 %v680, %v677
        %v768 = vpack.c.b16 %v684, %v681
        %v769 = vpack.c.b16 %v685, %v682
        %v770 = vpack.c.b16 %v686, %v683
        %v771 = vpack.c.b16 %v690, %v687
        %v772 = vpack.c.b16 %v691, %v688
        %v773 = vpack.c.b16 %v692, %v689
        %v774 = vpack.c.b16 %v696, %v693
        %v775 = vpack.c.b16 %v697, %v694
        %v776 = vpack.c.b16 %v698, %v695
        %v777 = vpack.c.b16 %v702, %v699
        %v778 = vpack.c.b16 %v703, %v700
        %v779 = vpack.c.b16 %v704, %v701
        %v780 = vpack.c.b16 %v708, %v705
        %v781 = vpack.c.b16 %v709, %v706
        %v782 = vpack.c.b16 %v710, %v707
        %v783 = vpack.c.b16 %v714, %v711
        %v784 = vpack.c.b16 %v715, %v712
        %v785 = vpack.c.b16 %v716, %v713
        %v786 = vpack.c.b16 %v720, %v717
        %v787 = vpack.c.b16 %v721, %v718
        %v788 = vpack.c.b16 %v722, %v719
        %v789 = vpack.c.b16 %v726, %v723
        %v790 = vpack.c.b16 %v727, %v724
        %v791 = vpack.c.b16 %v728, %v725
        %v792 = vpack.c.b16 %v732, %v729
        %v793 = vpack.c.b16 %v733, %v730
        %v794 = vpack.c.b16 %v734, %v731
        %v795 = vpack.c.b16 %v738, %v735
        %v796 = vpack.c.b16 %v739, %v736
        %v797 = vpack.c.b16 %v740, %v737
        %v798 = vpack.c.b16 %v744, %v741
        %v799 = vpack.c.b16 %v745, %v742
        %v800 = vpack.c.b16 %v746, %v743
        %v801 = vpack.c.b16 %v750, %v747
        %v802 = vpack.c.b16 %v751, %v748
        %v803 = vpack.c.b16 %v752, %v749
        %v804 = vpack.c.b16 %v756, %v753
        %v805 = vpack.c.b16 %v757, %v754
        %v806 = vpack.c.b16 %v758, %v755
        %855 = vmatpush.bf16.msra.mxu0 %v780
        %856 = vmatpush.bf16.msra.mxu0 %v777
        %857 = vmatpush.bf16.msra.mxu0 %v774
        %858 = vmatpush.bf16.msra.mxu0 %v771
        %859 = vmatpush.bf16.msra.mxu0 %v768
        %860 = vmatpush.bf16.msra.mxu0 %v765
        %861 = vmatpush.bf16.msra.mxu0 %v762
        %862 = vmatpush.bf16.msra.mxu0 %v759
        %863 = vmatmul.bf16.gmra.mxu0 %v583
        %v864 = vpop.f32.mrf.mxu0
        %v865 = vadd.f32 %v553, %v864
        %v866 = vpop.f32.mrf.mxu0
        %v867 = vadd.f32 %v553, %v866
        %868 = vmatmul.bf16.gmra.mxu0 %v585
        %v869 = vpop.f32.mrf.mxu0
        %v870 = vadd.f32 %v553, %v869
        %v871 = vpop.f32.mrf.mxu0
        %v872 = vadd.f32 %v553, %v871
        %873 = vmatmul.bf16.gmra.mxu0 %v587
        %v874 = vpop.f32.mrf.mxu0
        %v875 = vadd.f32 %v553, %v874
        %v876 = vpop.f32.mrf.mxu0
        %v877 = vadd.f32 %v553, %v876
        %878 = vmatmul.bf16.gmra.mxu0 %v589
        %v879 = vpop.f32.mrf.mxu0
        %v880 = vadd.f32 %v553, %v879
        %v881 = vpop.f32.mrf.mxu0
        %v882 = vadd.f32 %v553, %v881
        %883 = vdwg.mxu0
        %884 = vmatpush.bf16.msra.mxu0 %v804
        %885 = vmatpush.bf16.msra.mxu0 %v801
        %886 = vmatpush.bf16.msra.mxu0 %v798
        %887 = vmatpush.bf16.msra.mxu0 %v795
        %888 = vmatpush.bf16.msra.mxu0 %v792
        %889 = vmatpush.bf16.msra.mxu0 %v789
        %890 = vmatpush.bf16.msra.mxu0 %v786
        %891 = vmatpush.bf16.msra.mxu0 %v783
        %892 = vmatmul.bf16.gmra.mxu0 %v584
        %v893 = vpop.f32.mrf.mxu0
        %v894 = vadd.f32 %v865, %v893
        %v895 = vpop.f32.mrf.mxu0
        %v896 = vadd.f32 %v867, %v895
        %897 = vmatmul.bf16.gmra.mxu0 %v586
        %v898 = vpop.f32.mrf.mxu0
        %v899 = vadd.f32 %v870, %v898
        %v900 = vpop.f32.mrf.mxu0
        %v901 = vadd.f32 %v872, %v900
        %902 = vmatmul.bf16.gmra.mxu0 %v588
        %v903 = vpop.f32.mrf.mxu0
        %v904 = vadd.f32 %v875, %v903
        %v905 = vpop.f32.mrf.mxu0
        %v906 = vadd.f32 %v877, %v905
        %907 = vmatmul.bf16.gmra.mxu0 %v590
        %v908 = vpop.f32.mrf.mxu0
        %v909 = vadd.f32 %v880, %v908
        %v910 = vpop.f32.mrf.mxu0
        %v911 = vadd.f32 %v882, %v910
        %912 = vdwg.mxu0
        %913 = vmatpush.bf16.msra.mxu0 %v781
        %914 = vmatpush.bf16.msra.mxu0 %v778
        %915 = vmatpush.bf16.msra.mxu0 %v775
        %916 = vmatpush.bf16.msra.mxu0 %v772
        %917 = vmatpush.bf16.msra.mxu0 %v769
        %918 = vmatpush.bf16.msra.mxu0 %v766
        %919 = vmatpush.bf16.msra.mxu0 %v763
        %920 = vmatpush.bf16.msra.mxu0 %v760
        %921 = vmatmul.bf16.gmra.mxu0 %v583
        %v922 = vpop.f32.mrf.mxu0
        %v923 = vadd.f32 %v554, %v922
        %v924 = vpop.f32.mrf.mxu0
        %v925 = vadd.f32 %v554, %v924
        %926 = vmatmul.bf16.gmra.mxu0 %v585
        %v927 = vpop.f32.mrf.mxu0
        %v928 = vadd.f32 %v554, %v927
        %v929 = vpop.f32.mrf.mxu0
        %v930 = vadd.f32 %v554, %v929
        %931 = vmatmul.bf16.gmra.mxu0 %v587
        %v932 = vpop.f32.mrf.mxu0
        %v933 = vadd.f32 %v554, %v932
        %v934 = vpop.f32.mrf.mxu0
        %v935 = vadd.f32 %v554, %v934
        %936 = vmatmul.bf16.gmra.mxu0 %v589
        %v937 = vpop.f32.mrf.mxu0
        %v938 = vadd.f32 %v554, %v937
        %v939 = vpop.f32.mrf.mxu0
        %v940 = vadd.f32 %v554, %v939
        %941 = vdwg.mxu0
        %942 = vmatpush.bf16.msra.mxu0 %v805
        %943 = vmatpush.bf16.msra.mxu0 %v802
        %944 = vmatpush.bf16.msra.mxu0 %v799
        %945 = vmatpush.bf16.msra.mxu0 %v796
        %946 = vmatpush.bf16.msra.mxu0 %v793
        %947 = vmatpush.bf16.msra.mxu0 %v790
        %948 = vmatpush.bf16.msra.mxu0 %v787
        %949 = vmatpush.bf16.msra.mxu0 %v784
        %950 = vmatmul.bf16.gmra.mxu0 %v584
        %v951 = vpop.f32.mrf.mxu0
        %v952 = vadd.f32 %v923, %v951
        %v953 = vpop.f32.mrf.mxu0
        %v954 = vadd.f32 %v925, %v953
        %955 = vmatmul.bf16.gmra.mxu0 %v586
        %v956 = vpop.f32.mrf.mxu0
        %v957 = vadd.f32 %v928, %v956
        %v958 = vpop.f32.mrf.mxu0
        %v959 = vadd.f32 %v930, %v958
        %960 = vmatmul.bf16.gmra.mxu0 %v588
        %v961 = vpop.f32.mrf.mxu0
        %v962 = vadd.f32 %v933, %v961
        %v963 = vpop.f32.mrf.mxu0
        %v964 = vadd.f32 %v935, %v963
        %965 = vmatmul.bf16.gmra.mxu0 %v590
        %v966 = vpop.f32.mrf.mxu0
        %v967 = vadd.f32 %v938, %v966
        %v968 = vpop.f32.mrf.mxu0
        %v969 = vadd.f32 %v940, %v968
        %970 = vdwg.mxu0
        %971 = vmatpush.bf16.msra.mxu0 %v782
        %972 = vmatpush.bf16.msra.mxu0 %v779
        %973 = vmatpush.bf16.msra.mxu0 %v776
        %974 = vmatpush.bf16.msra.mxu0 %v773
        %975 = vmatpush.bf16.msra.mxu0 %v770
        %976 = vmatpush.bf16.msra.mxu0 %v767
        %977 = vmatpush.bf16.msra.mxu0 %v764
        %978 = vmatpush.bf16.msra.mxu0 %v761
        %979 = vmatmul.bf16.gmra.mxu0 %v583
        %v980 = vpop.f32.mrf.mxu0
        %v981 = vadd.f32 %v555, %v980
        %v982 = vpop.f32.mrf.mxu0
        %v983 = vadd.f32 %v555, %v982
        %984 = vmatmul.bf16.gmra.mxu0 %v585
        %v985 = vpop.f32.mrf.mxu0
        %v986 = vadd.f32 %v555, %v985
        %v987 = vpop.f32.mrf.mxu0
        %v988 = vadd.f32 %v555, %v987
        %989 = vmatmul.bf16.gmra.mxu0 %v587
        %v990 = vpop.f32.mrf.mxu0
        %v991 = vadd.f32 %v555, %v990
        %v992 = vpop.f32.mrf.mxu0
        %v993 = vadd.f32 %v555, %v992
        %994 = vmatmul.bf16.gmra.mxu0 %v589
        %v995 = vpop.f32.mrf.mxu0
        %v996 = vadd.f32 %v555, %v995
        %v997 = vpop.f32.mrf.mxu0
        %v998 = vadd.f32 %v555, %v997
        %999 = vdwg.mxu0
        %1000 = vmatpush.bf16.msra.mxu0 %v806
        %1001 = vmatpush.bf16.msra.mxu0 %v803
        %1002 = vmatpush.bf16.msra.mxu0 %v800
        %1003 = vmatpush.bf16.msra.mxu0 %v797
        %1004 = vmatpush.bf16.msra.mxu0 %v794
        %1005 = vmatpush.bf16.msra.mxu0 %v791
        %1006 = vmatpush.bf16.msra.mxu0 %v788
        %1007 = vmatpush.bf16.msra.mxu0 %v785
        %1008 = vmatmul.bf16.gmra.mxu0 %v584
        %v1009 = vpop.f32.mrf.mxu0
        %v1010 = vadd.f32 %v981, %v1009
        %v1011 = vpop.f32.mrf.mxu0
        %v1012 = vadd.f32 %v983, %v1011
        %1013 = vmatmul.bf16.gmra.mxu0 %v586
        %v1014 = vpop.f32.mrf.mxu0
        %v1015 = vadd.f32 %v986, %v1014
        %v1016 = vpop.f32.mrf.mxu0
        %v1017 = vadd.f32 %v988, %v1016
        %1018 = vmatmul.bf16.gmra.mxu0 %v588
        %v1019 = vpop.f32.mrf.mxu0
        %v1020 = vadd.f32 %v991, %v1019
        %v1021 = vpop.f32.mrf.mxu0
        %v1022 = vadd.f32 %v993, %v1021
        %1023 = vmatmul.bf16.gmra.mxu0 %v590
        %v1024 = vpop.f32.mrf.mxu0
        %v1025 = vadd.f32 %v996, %v1024
        %v1026 = vpop.f32.mrf.mxu0
        %v1027 = vadd.f32 %v998, %v1026
        %1028 = vdwg.mxu0
        %1029 = vst [vmem:[#allocation2] sm:$0xff] %v894
        %1030 = vst [vmem:[#allocation2 + $0x8] sm:$0xff] %v952
        %1031 = vst [vmem:[#allocation2 + $0x10] sm:$0xff] %v1010
        %1032 = vst [vmem:[#allocation2 + $0x18] sm:$0xff] %v896
        %1033 = vst [vmem:[#allocation2 + $0x20] sm:$0xff] %v954
        %1034 = vst [vmem:[#allocation2 + $0x28] sm:$0xff] %v1012
        %1035 = vst [vmem:[#allocation2 + $0x30] sm:$0xff] %v899
        %1036 = vst [vmem:[#allocation2 + $0x38] sm:$0xff] %v957
        %1037 = vst [vmem:[#allocation2 + $0x40] sm:$0xff] %v1015
        %1038 = vst [vmem:[#allocation2 + $0x48] sm:$0xff] %v901
        %1039 = vst [vmem:[#allocation2 + $0x50] sm:$0xff] %v959
        %1040 = vst [vmem:[#allocation2 + $0x58] sm:$0xff] %v1017
        %1041 = vst [vmem:[#allocation2 + $0x60] sm:$0xff] %v904
        %1042 = vst [vmem:[#allocation2 + $0x68] sm:$0xff] %v962
        %1043 = vst [vmem:[#allocation2 + $0x70] sm:$0xff] %v1020
        %1044 = vst [vmem:[#allocation2 + $0x78] sm:$0xff] %v906
        %1045 = vst [vmem:[#allocation2 + $0x80] sm:$0xff] %v964
        %1046 = vst [vmem:[#allocation2 + $0x88] sm:$0xff] %v1022
        %1047 = vst [vmem:[#allocation2 + $0x90] sm:$0xff] %v909
        %1048 = vst [vmem:[#allocation2 + $0x98] sm:$0xff] %v967
        %1049 = vst [vmem:[#allocation2 + $0xa0] sm:$0xff] %v1025
        %1050 = vst [vmem:[#allocation2 + $0xa8] sm:$0xff] %v911
        %1051 = vst [vmem:[#allocation2 + $0xb0] sm:$0xff] %v969
        %1052 = vst [vmem:[#allocation2 + $0xb8] sm:$0xff] %v1027
        %v1053 = vld [vmem:[%s371] sm:$0xff]
        %v1054 = vld [vmem:[%s371 + $0x8] sm:$0xf]
        %v1055 = vld [vmem:[%s371 + $0xc] sm:$0xff]
        %v1056 = vld [vmem:[%s371 + $0x14] sm:$0xf]
        %v1057 = vld [vmem:[%s371 + $0x18] sm:$0xff]
        %v1058 = vld [vmem:[%s371 + $0x20] sm:$0xf]
        %v1059 = vld [vmem:[%s371 + $0x24] sm:$0xff]
        %v1060 = vld [vmem:[%s371 + $0x2c] sm:$0xf]
        %v1061 = vld [vmem:[%s371 + $0x30] sm:$0xff]
        %v1062 = vld [vmem:[%s371 + $0x38] sm:$0xf]
        %v1063 = vld [vmem:[%s371 + $0x3c] sm:$0xff]
        %v1064 = vld [vmem:[%s371 + $0x44] sm:$0xf]
        %v1065 = vld [vmem:[%s371 + $0x48] sm:$0xff]
        %v1066 = vld [vmem:[%s371 + $0x50] sm:$0xf]
        %v1067 = vld [vmem:[%s371 + $0x54] sm:$0xff]
        %v1068 = vld [vmem:[%s371 + $0x5c] sm:$0xf]
        %v1069 = vld [vmem:[%s371 + $0x60] sm:$0xff]
        %v1070 = vld [vmem:[%s371 + $0x68] sm:$0xf]
        %v1071 = vld [vmem:[%s371 + $0x6c] sm:$0xff]
        %v1072 = vld [vmem:[%s371 + $0x74] sm:$0xf]
        %v1073 = vld [vmem:[%s371 + $0x78] sm:$0xff]
        %v1074 = vld [vmem:[%s371 + $0x80] sm:$0xf]
        %v1075 = vld [vmem:[%s371 + $0x84] sm:$0xff]
        %v1076 = vld [vmem:[%s371 + $0x8c] sm:$0xf]
        %v1077 = vld [vmem:[%s371 + $0x90] sm:$0xff]
        %v1078 = vld [vmem:[%s371 + $0x98] sm:$0xf]
        %v1079 = vld [vmem:[%s371 + $0x9c] sm:$0xff]
        %v1080 = vld [vmem:[%s371 + $0xa4] sm:$0xf]
        %v1081 = vld [vmem:[%s371 + $0xa8] sm:$0xff]
        %v1082 = vld [vmem:[%s371 + $0xb0] sm:$0xf]
        %v1083 = vld [vmem:[%s371 + $0xb4] sm:$0xff]
        %v1084 = vld [vmem:[%s371 + $0xbc] sm:$0xf]
        %v1085 = vld [vmem:[%s468] sm:$0x7]
        %p1086 = scmp.eq.s32.totalorder %s27, 1
        %s1087 = scalar_select %p1086, 7, 0
        %s1088 = smul.u32 %s1087, 8
        %s1089 = sshra.s32 %s1088, 3
        %s1090 = sand.u32 %s1088, 7
        %s1091 = smul.u32 %s1089, 3
        %s1092 = smul.addr %s1091, 8
        %s1093 = scalar_lea.vmem [#allocation2], %s1092
        %v1094 = vld [vmem:[%s1093] sm:$0xff]
        %v1095 = vld [vmem:[%s1093 + $0x8] sm:$0xff]
        %v1096 = vld [vmem:[%s1093 + $0x10] sm:$0xff]
        %s1097 = scalar_lea.vmem %s455, %s1088
        %v1098 = vld [vmem:[%s1097] sm:$0xff]
        %v1099 = vld [vmem:[#allocation4] sm:$0xff]
        %v1100 = vpack.c.bf16 %v1099, %v1099
        %v1102 = vperm.slane %v1085, 0
        %v1103 = vperm.slane %v1085, 1
        %v1104 = vperm.slane %v1085, 2
        %v1140 = vunpack.c.l.b16 %v1053
        %v1141 = vunpack.c.h.b16 %v1053
        %v1142 = vunpack.c.l.b16 %v1054
        %v1143 = vunpack.c.l.b16 %v1055
        %v1144 = vunpack.c.h.b16 %v1055
        %v1145 = vunpack.c.l.b16 %v1056
        %v1146 = vunpack.c.l.b16 %v1057
        %v1147 = vunpack.c.h.b16 %v1057
        %v1148 = vunpack.c.l.b16 %v1058
        %v1149 = vunpack.c.l.b16 %v1059
        %v1150 = vunpack.c.h.b16 %v1059
        %v1151 = vunpack.c.l.b16 %v1060
        %v1152 = vunpack.c.l.b16 %v1061
        %v1153 = vunpack.c.h.b16 %v1061
        %v1154 = vunpack.c.l.b16 %v1062
        %v1155 = vunpack.c.l.b16 %v1063
        %v1156 = vunpack.c.h.b16 %v1063
        %v1157 = vunpack.c.l.b16 %v1064
        %v1158 = vunpack.c.l.b16 %v1065
        %v1159 = vunpack.c.h.b16 %v1065
        %v1160 = vunpack.c.l.b16 %v1066
        %v1161 = vunpack.c.l.b16 %v1067
        %v1162 = vunpack.c.h.b16 %v1067
        %v1163 = vunpack.c.l.b16 %v1068
        %v1164 = vunpack.c.l.b16 %v1069
        %v1165 = vunpack.c.h.b16 %v1069
        %v1166 = vunpack.c.l.b16 %v1070
        %v1167 = vunpack.c.l.b16 %v1071
        %v1168 = vunpack.c.h.b16 %v1071
        %v1169 = vunpack.c.l.b16 %v1072
        %v1170 = vunpack.c.l.b16 %v1073
        %v1171 = vunpack.c.h.b16 %v1073
        %v1172 = vunpack.c.l.b16 %v1074
        %v1173 = vunpack.c.l.b16 %v1075
        %v1174 = vunpack.c.h.b16 %v1075
        %v1175 = vunpack.c.l.b16 %v1076
        %v1176 = vunpack.c.l.b16 %v1077
        %v1177 = vunpack.c.h.b16 %v1077
        %v1178 = vunpack.c.l.b16 %v1078
        %v1179 = vunpack.c.l.b16 %v1079
        %v1180 = vunpack.c.h.b16 %v1079
        %v1181 = vunpack.c.l.b16 %v1080
        %v1182 = vunpack.c.l.b16 %v1081
        %v1183 = vunpack.c.h.b16 %v1081
        %v1184 = vunpack.c.l.b16 %v1082
        %v1185 = vunpack.c.l.b16 %v1083
        %v1186 = vunpack.c.h.b16 %v1083
        %v1187 = vunpack.c.l.b16 %v1084
        %v1188 = vpack.c.b16 %v1143, %v1140
        %v1189 = vpack.c.b16 %v1144, %v1141
        %v1190 = vpack.c.b16 %v1145, %v1142
        %v1191 = vpack.c.b16 %v1149, %v1146
        %v1192 = vpack.c.b16 %v1150, %v1147
        %v1193 = vpack.c.b16 %v1151, %v1148
        %v1194 = vpack.c.b16 %v1155, %v1152
        %v1195 = vpack.c.b16 %v1156, %v1153
        %v1196 = vpack.c.b16 %v1157, %v1154
        %v1197 = vpack.c.b16 %v1161, %v1158
        %v1198 = vpack.c.b16 %v1162, %v1159
        %v1199 = vpack.c.b16 %v1163, %v1160
        %v1200 = vpack.c.b16 %v1167, %v1164
        %v1201 = vpack.c.b16 %v1168, %v1165
        %v1202 = vpack.c.b16 %v1169, %v1166
        %v1203 = vpack.c.b16 %v1173, %v1170
        %v1204 = vpack.c.b16 %v1174, %v1171
        %v1205 = vpack.c.b16 %v1175, %v1172
        %v1206 = vpack.c.b16 %v1179, %v1176
        %v1207 = vpack.c.b16 %v1180, %v1177
        %v1208 = vpack.c.b16 %v1181, %v1178
        %v1209 = vpack.c.b16 %v1185, %v1182
        %v1210 = vpack.c.b16 %v1186, %v1183
        %v1211 = vpack.c.b16 %v1187, %v1184
        %1236 = vmatpush.bf16.msra.mxu0 %v1209
        %1237 = vmatpush.bf16.msra.mxu0 %v1206
        %1238 = vmatpush.bf16.msra.mxu0 %v1203
        %1239 = vmatpush.bf16.msra.mxu0 %v1200
        %1240 = vmatpush.bf16.msra.mxu0 %v1197
        %1241 = vmatpush.bf16.msra.mxu0 %v1194
        %1242 = vmatpush.bf16.msra.mxu0 %v1191
        %1243 = vmatpush.bf16.msra.mxu0 %v1188
        %1244 = vmatmul.bf16.gmra.mxu0 %v1100
        %v1245 = vpop.f32.mrf.mxu0
        %v1246 = vadd.f32 %v1102, %v1245
        %v1247 = vpop.f32.mrf.mxu0
        %1248 = vdwg.mxu0
        %1249 = vmatpush.bf16.msra.mxu0 %v1210
        %1250 = vmatpush.bf16.msra.mxu0 %v1207
        %1251 = vmatpush.bf16.msra.mxu0 %v1204
        %1252 = vmatpush.bf16.msra.mxu0 %v1201
        %1253 = vmatpush.bf16.msra.mxu0 %v1198
        %1254 = vmatpush.bf16.msra.mxu0 %v1195
        %1255 = vmatpush.bf16.msra.mxu0 %v1192
        %1256 = vmatpush.bf16.msra.mxu0 %v1189
        %1257 = vmatmul.bf16.gmra.mxu0 %v1100
        %v1258 = vpop.f32.mrf.mxu0
        %v1259 = vadd.f32 %v1103, %v1258
        %v1260 = vpop.f32.mrf.mxu0
        %1261 = vdwg.mxu0
        %1262 = vmatpush.bf16.msra.mxu0 %v1211
        %1263 = vmatpush.bf16.msra.mxu0 %v1208
        %1264 = vmatpush.bf16.msra.mxu0 %v1205
        %1265 = vmatpush.bf16.msra.mxu0 %v1202
        %1266 = vmatpush.bf16.msra.mxu0 %v1199
        %1267 = vmatpush.bf16.msra.mxu0 %v1196
        %1268 = vmatpush.bf16.msra.mxu0 %v1193
        %1269 = vmatpush.bf16.msra.mxu0 %v1190
        %1270 = vmatmul.bf16.gmra.mxu0 %v1100
        %v1271 = vpop.f32.mrf.mxu0
        %v1272 = vadd.f32 %v1104, %v1271
        %v1273 = vpop.f32.mrf.mxu0
        %1274 = vdwg.mxu0
        %v1275 = vadd.f32 %v1094, %v1246
        %v1276 = vxor.u32 %v1275, 2147483648
        %v1277 = vmul.f32 %v1276, 1.442695
        %v1278 = vpow.pop %v1277
        %v1279 = vadd.f32 %v1278, 1.0
        %v1280 = vrcp.pop %v1279
        %v1281 = vmul.f32 %v1279, %v1280
        %v1282 = vsub.f32 1.0, %v1281
        %v1283 = vmul.f32 %v1280, %v1282
        %v1284 = vadd.f32 %v1280, %v1283
        %vm1285 = vweird.f32 %v1279
        %vm1286 = vweird.f32 %v1280
        %vm1287 = vmor %vm1285, %vm1286
        %v1288 = vsel %vm1287, %v1280, %v1284
        %v1289 = vand.u32 2147483647, %v1279
        %vm1290 = vcmp.eq.f32.partialorder %v1289, 8.507059e+37
        %v1291 = vand.u32 %v1279, 2147483648
        %v1292 = vor.u32 1.1754944e-38, %v1291
        %v1293 = vsel %vm1290, %v1292, %v1288
        %v1294 = vmul.f32 1.0, %v1293
        %v1295 = vadd.f32 %v1095, %v1259
        %v1296 = vxor.u32 %v1295, 2147483648
        %v1297 = vmul.f32 %v1296, 1.442695
        %v1298 = vpow.pop %v1297
        %v1299 = vadd.f32 %v1298, 1.0
        %v1300 = vrcp.pop %v1299
        %v1301 = vmul.f32 %v1299, %v1300
        %v1302 = vsub.f32 1.0, %v1301
        %v1303 = vmul.f32 %v1300, %v1302
        %v1304 = vadd.f32 %v1300, %v1303
        %vm1305 = vweird.f32 %v1299
        %vm1306 = vweird.f32 %v1300
        %vm1307 = vmor %vm1305, %vm1306
        %v1308 = vsel %vm1307, %v1300, %v1304
        %v1309 = vand.u32 2147483647, %v1299
        %vm1310 = vcmp.eq.f32.partialorder %v1309, 8.507059e+37
        %v1311 = vand.u32 %v1299, 2147483648
        %v1312 = vor.u32 1.1754944e-38, %v1311
        %v1313 = vsel %vm1310, %v1312, %v1308
        %v1314 = vmul.f32 1.0, %v1313
        %v1315 = vmul.f32 %v1294, %v1272
        %v1316 = vadd.f32 %v1096, %v1315
        %v1317 = vtanh.pop %v1316
        %v1318 = vsub.f32 %v1099, %v1317
        %v1319 = vmul.f32 %v1314, %v1318
        %v1320 = vadd.f32 %v1317, %v1319
        %v1321 = vsub.f32 %v1320, %v1099
        %1323 = vset.pattern.permute.xlu0 0
        %1324 = vperm.xlu0 %1323, %v1098
        %v1325 = vpop.permute.xlu0 %1324
        %v1327 = vmul.f32 %v1325, %v1321
        %v1328 = vadd.f32 %v1099, %v1327
        %1329 = vst [vmem:[#allocation4] sm:$0xff] %v1328
        %v1330 = vmul.f32 %v1325, %v1320
        %s1331 = scalar_lea.vmem [#allocation3], %s1088
        %1332 = vst [vmem:[%s1331] sm:$0xff] %v1330
        %s1333 = scalar_select %p1086, 6, 1
        %s1334 = smul.u32 %s1333, 8
        %s1335 = sshra.s32 %s1334, 3
        %s1336 = sand.u32 %s1334, 7
        %s1337 = smul.u32 %s1335, 3
        %s1338 = smul.addr %s1337, 8
        %s1339 = scalar_lea.vmem [#allocation2], %s1338
        %v1340 = vld [vmem:[%s1339] sm:$0xff]
        %v1341 = vld [vmem:[%s1339 + $0x8] sm:$0xff]
        %v1342 = vld [vmem:[%s1339 + $0x10] sm:$0xff]
        %s1343 = scalar_lea.vmem %s455, %s1334
        %v1344 = vld [vmem:[%s1343] sm:$0xff]
        %v1345 = vld [vmem:[#allocation4] sm:$0xff]
        %v1346 = vpack.c.bf16 %v1345, %v1345
        %1347 = vmatpush.bf16.msra.mxu0 %v1209
        %1348 = vmatpush.bf16.msra.mxu0 %v1206
        %1349 = vmatpush.bf16.msra.mxu0 %v1203
        %1350 = vmatpush.bf16.msra.mxu0 %v1200
        %1351 = vmatpush.bf16.msra.mxu0 %v1197
        %1352 = vmatpush.bf16.msra.mxu0 %v1194
        %1353 = vmatpush.bf16.msra.mxu0 %v1191
        %1354 = vmatpush.bf16.msra.mxu0 %v1188
        %1355 = vmatmul.bf16.gmra.mxu0 %v1346
        %v1356 = vpop.f32.mrf.mxu0
        %v1357 = vadd.f32 %v1102, %v1356
        %v1358 = vpop.f32.mrf.mxu0
        %1359 = vdwg.mxu0
        %1360 = vmatpush.bf16.msra.mxu0 %v1210
        %1361 = vmatpush.bf16.msra.mxu0 %v1207
        %1362 = vmatpush.bf16.msra.mxu0 %v1204
        %1363 = vmatpush.bf16.msra.mxu0 %v1201
        %1364 = vmatpush.bf16.msra.mxu0 %v1198
        %1365 = vmatpush.bf16.msra.mxu0 %v1195
        %1366 = vmatpush.bf16.msra.mxu0 %v1192
        %1367 = vmatpush.bf16.msra.mxu0 %v1189
        %1368 = vmatmul.bf16.gmra.mxu0 %v1346
        %v1369 = vpop.f32.mrf.mxu0
        %v1370 = vadd.f32 %v1103, %v1369
        %v1371 = vpop.f32.mrf.mxu0
        %1372 = vdwg.mxu0
        %1373 = vmatpush.bf16.msra.mxu0 %v1211
        %1374 = vmatpush.bf16.msra.mxu0 %v1208
        %1375 = vmatpush.bf16.msra.mxu0 %v1205
        %1376 = vmatpush.bf16.msra.mxu0 %v1202
        %1377 = vmatpush.bf16.msra.mxu0 %v1199
        %1378 = vmatpush.bf16.msra.mxu0 %v1196
        %1379 = vmatpush.bf16.msra.mxu0 %v1193
        %1380 = vmatpush.bf16.msra.mxu0 %v1190
        %1381 = vmatmul.bf16.gmra.mxu0 %v1346
        %v1382 = vpop.f32.mrf.mxu0
        %v1383 = vadd.f32 %v1104, %v1382
        %v1384 = vpop.f32.mrf.mxu0
        %1385 = vdwg.mxu0
        %v1386 = vadd.f32 %v1340, %v1357
        %v1387 = vxor.u32 %v1386, 2147483648
        %v1388 = vmul.f32 %v1387, 1.442695
        %v1389 = vpow.pop %v1388
        %v1390 = vadd.f32 %v1389, 1.0
        %v1391 = vrcp.pop %v1390
        %v1392 = vmul.f32 %v1390, %v1391
        %v1393 = vsub.f32 1.0, %v1392
        %v1394 = vmul.f32 %v1391, %v1393
        %v1395 = vadd.f32 %v1391, %v1394
        %vm1396 = vweird.f32 %v1390
        %vm1397 = vweird.f32 %v1391
        %vm1398 = vmor %vm1396, %vm1397
        %v1399 = vsel %vm1398, %v1391, %v1395
        %v1400 = vand.u32 2147483647, %v1390
        %vm1401 = vcmp.eq.f32.partialorder %v1400, 8.507059e+37
        %v1402 = vand.u32 %v1390, 2147483648
        %v1403 = vor.u32 1.1754944e-38, %v1402
        %v1404 = vsel %vm1401, %v1403, %v1399
        %v1405 = vmul.f32 1.0, %v1404
        %v1406 = vadd.f32 %v1341, %v1370
        %v1407 = vxor.u32 %v1406, 2147483648
        %v1408 = vmul.f32 %v1407, 1.442695
        %v1409 = vpow.pop %v1408
        %v1410 = vadd.f32 %v1409, 1.0
        %v1411 = vrcp.pop %v1410
        %v1412 = vmul.f32 %v1410, %v1411
        %v1413 = vsub.f32 1.0, %v1412
        %v1414 = vmul.f32 %v1411, %v1413
        %v1415 = vadd.f32 %v1411, %v1414
        %vm1416 = vweird.f32 %v1410
        %vm1417 = vweird.f32 %v1411
        %vm1418 = vmor %vm1416, %vm1417
        %v1419 = vsel %vm1418, %v1411, %v1415
        %v1420 = vand.u32 2147483647, %v1410
        %vm1421 = vcmp.eq.f32.partialorder %v1420, 8.507059e+37
        %v1422 = vand.u32 %v1410, 2147483648
        %v1423 = vor.u32 1.1754944e-38, %v1422
        %v1424 = vsel %vm1421, %v1423, %v1419
        %v1425 = vmul.f32 1.0, %v1424
        %v1426 = vmul.f32 %v1405, %v1383
        %v1427 = vadd.f32 %v1342, %v1426
        %v1428 = vtanh.pop %v1427
        %v1429 = vsub.f32 %v1345, %v1428
        %v1430 = vmul.f32 %v1425, %v1429
        %v1431 = vadd.f32 %v1428, %v1430
        %v1432 = vsub.f32 %v1431, %v1345
        %1434 = vset.pattern.permute.xlu0 0
        %1435 = vperm.xlu0 %1434, %v1344
        %v1436 = vpop.permute.xlu0 %1435
        %v1438 = vmul.f32 %v1436, %v1432
        %v1439 = vadd.f32 %v1345, %v1438
        %1440 = vst [vmem:[#allocation4] sm:$0xff] %v1439
        %v1441 = vmul.f32 %v1436, %v1431
        %s1442 = scalar_lea.vmem [#allocation3], %s1334
        %1443 = vst [vmem:[%s1442] sm:$0xff] %v1441
        %s1444 = scalar_select %p1086, 5, 2
        %s1445 = smul.u32 %s1444, 8
        %s1446 = sshra.s32 %s1445, 3
        %s1447 = sand.u32 %s1445, 7
        %s1448 = smul.u32 %s1446, 3
        %s1449 = smul.addr %s1448, 8
        %s1450 = scalar_lea.vmem [#allocation2], %s1449
        %v1451 = vld [vmem:[%s1450] sm:$0xff]
        %v1452 = vld [vmem:[%s1450 + $0x8] sm:$0xff]
        %v1453 = vld [vmem:[%s1450 + $0x10] sm:$0xff]
        %s1454 = scalar_lea.vmem %s455, %s1445
        %v1455 = vld [vmem:[%s1454] sm:$0xff]
        %v1456 = vld [vmem:[#allocation4] sm:$0xff]
        %v1457 = vpack.c.bf16 %v1456, %v1456
        %1458 = vmatpush.bf16.msra.mxu0 %v1209
        %1459 = vmatpush.bf16.msra.mxu0 %v1206
        %1460 = vmatpush.bf16.msra.mxu0 %v1203
        %1461 = vmatpush.bf16.msra.mxu0 %v1200
        %1462 = vmatpush.bf16.msra.mxu0 %v1197
        %1463 = vmatpush.bf16.msra.mxu0 %v1194
        %1464 = vmatpush.bf16.msra.mxu0 %v1191
        %1465 = vmatpush.bf16.msra.mxu0 %v1188
        %1466 = vmatmul.bf16.gmra.mxu0 %v1457
        %v1467 = vpop.f32.mrf.mxu0
        %v1468 = vadd.f32 %v1102, %v1467
        %v1469 = vpop.f32.mrf.mxu0
        %1470 = vdwg.mxu0
        %1471 = vmatpush.bf16.msra.mxu0 %v1210
        %1472 = vmatpush.bf16.msra.mxu0 %v1207
        %1473 = vmatpush.bf16.msra.mxu0 %v1204
        %1474 = vmatpush.bf16.msra.mxu0 %v1201
        %1475 = vmatpush.bf16.msra.mxu0 %v1198
        %1476 = vmatpush.bf16.msra.mxu0 %v1195
        %1477 = vmatpush.bf16.msra.mxu0 %v1192
        %1478 = vmatpush.bf16.msra.mxu0 %v1189
        %1479 = vmatmul.bf16.gmra.mxu0 %v1457
        %v1480 = vpop.f32.mrf.mxu0
        %v1481 = vadd.f32 %v1103, %v1480
        %v1482 = vpop.f32.mrf.mxu0
        %1483 = vdwg.mxu0
        %1484 = vmatpush.bf16.msra.mxu0 %v1211
        %1485 = vmatpush.bf16.msra.mxu0 %v1208
        %1486 = vmatpush.bf16.msra.mxu0 %v1205
        %1487 = vmatpush.bf16.msra.mxu0 %v1202
        %1488 = vmatpush.bf16.msra.mxu0 %v1199
        %1489 = vmatpush.bf16.msra.mxu0 %v1196
        %1490 = vmatpush.bf16.msra.mxu0 %v1193
        %1491 = vmatpush.bf16.msra.mxu0 %v1190
        %1492 = vmatmul.bf16.gmra.mxu0 %v1457
        %v1493 = vpop.f32.mrf.mxu0
        %v1494 = vadd.f32 %v1104, %v1493
        %v1495 = vpop.f32.mrf.mxu0
        %1496 = vdwg.mxu0
        %v1497 = vadd.f32 %v1451, %v1468
        %v1498 = vxor.u32 %v1497, 2147483648
        %v1499 = vmul.f32 %v1498, 1.442695
        %v1500 = vpow.pop %v1499
        %v1501 = vadd.f32 %v1500, 1.0
        %v1502 = vrcp.pop %v1501
        %v1503 = vmul.f32 %v1501, %v1502
        %v1504 = vsub.f32 1.0, %v1503
        %v1505 = vmul.f32 %v1502, %v1504
        %v1506 = vadd.f32 %v1502, %v1505
        %vm1507 = vweird.f32 %v1501
        %vm1508 = vweird.f32 %v1502
        %vm1509 = vmor %vm1507, %vm1508
        %v1510 = vsel %vm1509, %v1502, %v1506
        %v1511 = vand.u32 2147483647, %v1501
        %vm1512 = vcmp.eq.f32.partialorder %v1511, 8.507059e+37
        %v1513 = vand.u32 %v1501, 2147483648
        %v1514 = vor.u32 1.1754944e-38, %v1513
        %v1515 = vsel %vm1512, %v1514, %v1510
        %v1516 = vmul.f32 1.0, %v1515
        %v1517 = vadd.f32 %v1452, %v1481
        %v1518 = vxor.u32 %v1517, 2147483648
        %v1519 = vmul.f32 %v1518, 1.442695
        %v1520 = vpow.pop %v1519
        %v1521 = vadd.f32 %v1520, 1.0
        %v1522 = vrcp.pop %v1521
        %v1523 = vmul.f32 %v1521, %v1522
        %v1524 = vsub.f32 1.0, %v1523
        %v1525 = vmul.f32 %v1522, %v1524
        %v1526 = vadd.f32 %v1522, %v1525
        %vm1527 = vweird.f32 %v1521
        %vm1528 = vweird.f32 %v1522
        %vm1529 = vmor %vm1527, %vm1528
        %v1530 = vsel %vm1529, %v1522, %v1526
        %v1531 = vand.u32 2147483647, %v1521
        %vm1532 = vcmp.eq.f32.partialorder %v1531, 8.507059e+37
        %v1533 = vand.u32 %v1521, 2147483648
        %v1534 = vor.u32 1.1754944e-38, %v1533
        %v1535 = vsel %vm1532, %v1534, %v1530
        %v1536 = vmul.f32 1.0, %v1535
        %v1537 = vmul.f32 %v1516, %v1494
        %v1538 = vadd.f32 %v1453, %v1537
        %v1539 = vtanh.pop %v1538
        %v1540 = vsub.f32 %v1456, %v1539
        %v1541 = vmul.f32 %v1536, %v1540
        %v1542 = vadd.f32 %v1539, %v1541
        %v1543 = vsub.f32 %v1542, %v1456
        %1545 = vset.pattern.permute.xlu0 0
        %1546 = vperm.xlu0 %1545, %v1455
        %v1547 = vpop.permute.xlu0 %1546
        %v1549 = vmul.f32 %v1547, %v1543
        %v1550 = vadd.f32 %v1456, %v1549
        %1551 = vst [vmem:[#allocation4] sm:$0xff] %v1550
        %v1552 = vmul.f32 %v1547, %v1542
        %s1553 = scalar_lea.vmem [#allocation3], %s1445
        %1554 = vst [vmem:[%s1553] sm:$0xff] %v1552
        %s1555 = scalar_select %p1086, 4, 3
        %s1556 = smul.u32 %s1555, 8
        %s1557 = sshra.s32 %s1556, 3
        %s1558 = sand.u32 %s1556, 7
        %s1559 = smul.u32 %s1557, 3
        %s1560 = smul.addr %s1559, 8
        %s1561 = scalar_lea.vmem [#allocation2], %s1560
        %v1562 = vld [vmem:[%s1561] sm:$0xff]
        %v1563 = vld [vmem:[%s1561 + $0x8] sm:$0xff]
        %v1564 = vld [vmem:[%s1561 + $0x10] sm:$0xff]
        %s1565 = scalar_lea.vmem %s455, %s1556
        %v1566 = vld [vmem:[%s1565] sm:$0xff]
        %v1567 = vld [vmem:[#allocation4] sm:$0xff]
        %v1568 = vpack.c.bf16 %v1567, %v1567
        %1569 = vmatpush.bf16.msra.mxu0 %v1209
        %1570 = vmatpush.bf16.msra.mxu0 %v1206
        %1571 = vmatpush.bf16.msra.mxu0 %v1203
        %1572 = vmatpush.bf16.msra.mxu0 %v1200
        %1573 = vmatpush.bf16.msra.mxu0 %v1197
        %1574 = vmatpush.bf16.msra.mxu0 %v1194
        %1575 = vmatpush.bf16.msra.mxu0 %v1191
        %1576 = vmatpush.bf16.msra.mxu0 %v1188
        %1577 = vmatmul.bf16.gmra.mxu0 %v1568
        %v1578 = vpop.f32.mrf.mxu0
        %v1579 = vadd.f32 %v1102, %v1578
        %v1580 = vpop.f32.mrf.mxu0
        %1581 = vdwg.mxu0
        %1582 = vmatpush.bf16.msra.mxu0 %v1210
        %1583 = vmatpush.bf16.msra.mxu0 %v1207
        %1584 = vmatpush.bf16.msra.mxu0 %v1204
        %1585 = vmatpush.bf16.msra.mxu0 %v1201
        %1586 = vmatpush.bf16.msra.mxu0 %v1198
        %1587 = vmatpush.bf16.msra.mxu0 %v1195
        %1588 = vmatpush.bf16.msra.mxu0 %v1192
        %1589 = vmatpush.bf16.msra.mxu0 %v1189
        %1590 = vmatmul.bf16.gmra.mxu0 %v1568
        %v1591 = vpop.f32.mrf.mxu0
        %v1592 = vadd.f32 %v1103, %v1591
        %v1593 = vpop.f32.mrf.mxu0
        %1594 = vdwg.mxu0
        %1595 = vmatpush.bf16.msra.mxu0 %v1211
        %1596 = vmatpush.bf16.msra.mxu0 %v1208
        %1597 = vmatpush.bf16.msra.mxu0 %v1205
        %1598 = vmatpush.bf16.msra.mxu0 %v1202
        %1599 = vmatpush.bf16.msra.mxu0 %v1199
        %1600 = vmatpush.bf16.msra.mxu0 %v1196
        %1601 = vmatpush.bf16.msra.mxu0 %v1193
        %1602 = vmatpush.bf16.msra.mxu0 %v1190
        %1603 = vmatmul.bf16.gmra.mxu0 %v1568
        %v1604 = vpop.f32.mrf.mxu0
        %v1605 = vadd.f32 %v1104, %v1604
        %v1606 = vpop.f32.mrf.mxu0
        %1607 = vdwg.mxu0
        %v1608 = vadd.f32 %v1562, %v1579
        %v1609 = vxor.u32 %v1608, 2147483648
        %v1610 = vmul.f32 %v1609, 1.442695
        %v1611 = vpow.pop %v1610
        %v1612 = vadd.f32 %v1611, 1.0
        %v1613 = vrcp.pop %v1612
        %v1614 = vmul.f32 %v1612, %v1613
        %v1615 = vsub.f32 1.0, %v1614
        %v1616 = vmul.f32 %v1613, %v1615
        %v1617 = vadd.f32 %v1613, %v1616
        %vm1618 = vweird.f32 %v1612
        %vm1619 = vweird.f32 %v1613
        %vm1620 = vmor %vm1618, %vm1619
        %v1621 = vsel %vm1620, %v1613, %v1617
        %v1622 = vand.u32 2147483647, %v1612
        %vm1623 = vcmp.eq.f32.partialorder %v1622, 8.507059e+37
        %v1624 = vand.u32 %v1612, 2147483648
        %v1625 = vor.u32 1.1754944e-38, %v1624
        %v1626 = vsel %vm1623, %v1625, %v1621
        %v1627 = vmul.f32 1.0, %v1626
        %v1628 = vadd.f32 %v1563, %v1592
        %v1629 = vxor.u32 %v1628, 2147483648
        %v1630 = vmul.f32 %v1629, 1.442695
        %v1631 = vpow.pop %v1630
        %v1632 = vadd.f32 %v1631, 1.0
        %v1633 = vrcp.pop %v1632
        %v1634 = vmul.f32 %v1632, %v1633
        %v1635 = vsub.f32 1.0, %v1634
        %v1636 = vmul.f32 %v1633, %v1635
        %v1637 = vadd.f32 %v1633, %v1636
        %vm1638 = vweird.f32 %v1632
        %vm1639 = vweird.f32 %v1633
        %vm1640 = vmor %vm1638, %vm1639
        %v1641 = vsel %vm1640, %v1633, %v1637
        %v1642 = vand.u32 2147483647, %v1632
        %vm1643 = vcmp.eq.f32.partialorder %v1642, 8.507059e+37
        %v1644 = vand.u32 %v1632, 2147483648
        %v1645 = vor.u32 1.1754944e-38, %v1644
        %v1646 = vsel %vm1643, %v1645, %v1641
        %v1647 = vmul.f32 1.0, %v1646
        %v1648 = vmul.f32 %v1627, %v1605
        %v1649 = vadd.f32 %v1564, %v1648
        %v1650 = vtanh.pop %v1649
        %v1651 = vsub.f32 %v1567, %v1650
        %v1652 = vmul.f32 %v1647, %v1651
        %v1653 = vadd.f32 %v1650, %v1652
        %v1654 = vsub.f32 %v1653, %v1567
        %1656 = vset.pattern.permute.xlu0 0
        %1657 = vperm.xlu0 %1656, %v1566
        %v1658 = vpop.permute.xlu0 %1657
        %v1660 = vmul.f32 %v1658, %v1654
        %v1661 = vadd.f32 %v1567, %v1660
        %1662 = vst [vmem:[#allocation4] sm:$0xff] %v1661
        %v1663 = vmul.f32 %v1658, %v1653
        %s1664 = scalar_lea.vmem [#allocation3], %s1556
        %1665 = vst [vmem:[%s1664] sm:$0xff] %v1663
        %s1666 = scalar_select %p1086, 3, 4
        %s1667 = smul.u32 %s1666, 8
        %s1668 = sshra.s32 %s1667, 3
        %s1669 = sand.u32 %s1667, 7
        %s1670 = smul.u32 %s1668, 3
        %s1671 = smul.addr %s1670, 8
        %s1672 = scalar_lea.vmem [#allocation2], %s1671
        %v1673 = vld [vmem:[%s1672] sm:$0xff]
        %v1674 = vld [vmem:[%s1672 + $0x8] sm:$0xff]
        %v1675 = vld [vmem:[%s1672 + $0x10] sm:$0xff]
        %s1676 = scalar_lea.vmem %s455, %s1667
        %v1677 = vld [vmem:[%s1676] sm:$0xff]
        %v1678 = vld [vmem:[#allocation4] sm:$0xff]
        %v1679 = vpack.c.bf16 %v1678, %v1678
        %1680 = vmatpush.bf16.msra.mxu0 %v1209
        %1681 = vmatpush.bf16.msra.mxu0 %v1206
        %1682 = vmatpush.bf16.msra.mxu0 %v1203
        %1683 = vmatpush.bf16.msra.mxu0 %v1200
        %1684 = vmatpush.bf16.msra.mxu0 %v1197
        %1685 = vmatpush.bf16.msra.mxu0 %v1194
        %1686 = vmatpush.bf16.msra.mxu0 %v1191
        %1687 = vmatpush.bf16.msra.mxu0 %v1188
        %1688 = vmatmul.bf16.gmra.mxu0 %v1679
        %v1689 = vpop.f32.mrf.mxu0
        %v1690 = vadd.f32 %v1102, %v1689
        %v1691 = vpop.f32.mrf.mxu0
        %1692 = vdwg.mxu0
        %1693 = vmatpush.bf16.msra.mxu0 %v1210
        %1694 = vmatpush.bf16.msra.mxu0 %v1207
        %1695 = vmatpush.bf16.msra.mxu0 %v1204
        %1696 = vmatpush.bf16.msra.mxu0 %v1201
        %1697 = vmatpush.bf16.msra.mxu0 %v1198
        %1698 = vmatpush.bf16.msra.mxu0 %v1195
        %1699 = vmatpush.bf16.msra.mxu0 %v1192
        %1700 = vmatpush.bf16.msra.mxu0 %v1189
        %1701 = vmatmul.bf16.gmra.mxu0 %v1679
        %v1702 = vpop.f32.mrf.mxu0
        %v1703 = vadd.f32 %v1103, %v1702
        %v1704 = vpop.f32.mrf.mxu0
        %1705 = vdwg.mxu0
        %1706 = vmatpush.bf16.msra.mxu0 %v1211
        %1707 = vmatpush.bf16.msra.mxu0 %v1208
        %1708 = vmatpush.bf16.msra.mxu0 %v1205
        %1709 = vmatpush.bf16.msra.mxu0 %v1202
        %1710 = vmatpush.bf16.msra.mxu0 %v1199
        %1711 = vmatpush.bf16.msra.mxu0 %v1196
        %1712 = vmatpush.bf16.msra.mxu0 %v1193
        %1713 = vmatpush.bf16.msra.mxu0 %v1190
        %1714 = vmatmul.bf16.gmra.mxu0 %v1679
        %v1715 = vpop.f32.mrf.mxu0
        %v1716 = vadd.f32 %v1104, %v1715
        %v1717 = vpop.f32.mrf.mxu0
        %1718 = vdwg.mxu0
        %v1719 = vadd.f32 %v1673, %v1690
        %v1720 = vxor.u32 %v1719, 2147483648
        %v1721 = vmul.f32 %v1720, 1.442695
        %v1722 = vpow.pop %v1721
        %v1723 = vadd.f32 %v1722, 1.0
        %v1724 = vrcp.pop %v1723
        %v1725 = vmul.f32 %v1723, %v1724
        %v1726 = vsub.f32 1.0, %v1725
        %v1727 = vmul.f32 %v1724, %v1726
        %v1728 = vadd.f32 %v1724, %v1727
        %vm1729 = vweird.f32 %v1723
        %vm1730 = vweird.f32 %v1724
        %vm1731 = vmor %vm1729, %vm1730
        %v1732 = vsel %vm1731, %v1724, %v1728
        %v1733 = vand.u32 2147483647, %v1723
        %vm1734 = vcmp.eq.f32.partialorder %v1733, 8.507059e+37
        %v1735 = vand.u32 %v1723, 2147483648
        %v1736 = vor.u32 1.1754944e-38, %v1735
        %v1737 = vsel %vm1734, %v1736, %v1732
        %v1738 = vmul.f32 1.0, %v1737
        %v1739 = vadd.f32 %v1674, %v1703
        %v1740 = vxor.u32 %v1739, 2147483648
        %v1741 = vmul.f32 %v1740, 1.442695
        %v1742 = vpow.pop %v1741
        %v1743 = vadd.f32 %v1742, 1.0
        %v1744 = vrcp.pop %v1743
        %v1745 = vmul.f32 %v1743, %v1744
        %v1746 = vsub.f32 1.0, %v1745
        %v1747 = vmul.f32 %v1744, %v1746
        %v1748 = vadd.f32 %v1744, %v1747
        %vm1749 = vweird.f32 %v1743
        %vm1750 = vweird.f32 %v1744
        %vm1751 = vmor %vm1749, %vm1750
        %v1752 = vsel %vm1751, %v1744, %v1748
        %v1753 = vand.u32 2147483647, %v1743
        %vm1754 = vcmp.eq.f32.partialorder %v1753, 8.507059e+37
        %v1755 = vand.u32 %v1743, 2147483648
        %v1756 = vor.u32 1.1754944e-38, %v1755
        %v1757 = vsel %vm1754, %v1756, %v1752
        %v1758 = vmul.f32 1.0, %v1757
        %v1759 = vmul.f32 %v1738, %v1716
        %v1760 = vadd.f32 %v1675, %v1759
        %v1761 = vtanh.pop %v1760
        %v1762 = vsub.f32 %v1678, %v1761
        %v1763 = vmul.f32 %v1758, %v1762
        %v1764 = vadd.f32 %v1761, %v1763
        %v1765 = vsub.f32 %v1764, %v1678
        %1767 = vset.pattern.permute.xlu0 0
        %1768 = vperm.xlu0 %1767, %v1677
        %v1769 = vpop.permute.xlu0 %1768
        %v1771 = vmul.f32 %v1769, %v1765
        %v1772 = vadd.f32 %v1678, %v1771
        %1773 = vst [vmem:[#allocation4] sm:$0xff] %v1772
        %v1774 = vmul.f32 %v1769, %v1764
        %s1775 = scalar_lea.vmem [#allocation3], %s1667
        %1776 = vst [vmem:[%s1775] sm:$0xff] %v1774
        %s1777 = scalar_select %p1086, 2, 5
        %s1778 = smul.u32 %s1777, 8
        %s1779 = sshra.s32 %s1778, 3
        %s1780 = sand.u32 %s1778, 7
        %s1781 = smul.u32 %s1779, 3
        %s1782 = smul.addr %s1781, 8
        %s1783 = scalar_lea.vmem [#allocation2], %s1782
        %v1784 = vld [vmem:[%s1783] sm:$0xff]
        %v1785 = vld [vmem:[%s1783 + $0x8] sm:$0xff]
        %v1786 = vld [vmem:[%s1783 + $0x10] sm:$0xff]
        %s1787 = scalar_lea.vmem %s455, %s1778
        %v1788 = vld [vmem:[%s1787] sm:$0xff]
        %v1789 = vld [vmem:[#allocation4] sm:$0xff]
        %v1790 = vpack.c.bf16 %v1789, %v1789
        %1791 = vmatpush.bf16.msra.mxu0 %v1209
        %1792 = vmatpush.bf16.msra.mxu0 %v1206
        %1793 = vmatpush.bf16.msra.mxu0 %v1203
        %1794 = vmatpush.bf16.msra.mxu0 %v1200
        %1795 = vmatpush.bf16.msra.mxu0 %v1197
        %1796 = vmatpush.bf16.msra.mxu0 %v1194
        %1797 = vmatpush.bf16.msra.mxu0 %v1191
        %1798 = vmatpush.bf16.msra.mxu0 %v1188
        %1799 = vmatmul.bf16.gmra.mxu0 %v1790
        %v1800 = vpop.f32.mrf.mxu0
        %v1801 = vadd.f32 %v1102, %v1800
        %v1802 = vpop.f32.mrf.mxu0
        %1803 = vdwg.mxu0
        %1804 = vmatpush.bf16.msra.mxu0 %v1210
        %1805 = vmatpush.bf16.msra.mxu0 %v1207
        %1806 = vmatpush.bf16.msra.mxu0 %v1204
        %1807 = vmatpush.bf16.msra.mxu0 %v1201
        %1808 = vmatpush.bf16.msra.mxu0 %v1198
        %1809 = vmatpush.bf16.msra.mxu0 %v1195
        %1810 = vmatpush.bf16.msra.mxu0 %v1192
        %1811 = vmatpush.bf16.msra.mxu0 %v1189
        %1812 = vmatmul.bf16.gmra.mxu0 %v1790
        %v1813 = vpop.f32.mrf.mxu0
        %v1814 = vadd.f32 %v1103, %v1813
        %v1815 = vpop.f32.mrf.mxu0
        %1816 = vdwg.mxu0
        %1817 = vmatpush.bf16.msra.mxu0 %v1211
        %1818 = vmatpush.bf16.msra.mxu0 %v1208
        %1819 = vmatpush.bf16.msra.mxu0 %v1205
        %1820 = vmatpush.bf16.msra.mxu0 %v1202
        %1821 = vmatpush.bf16.msra.mxu0 %v1199
        %1822 = vmatpush.bf16.msra.mxu0 %v1196
        %1823 = vmatpush.bf16.msra.mxu0 %v1193
        %1824 = vmatpush.bf16.msra.mxu0 %v1190
        %1825 = vmatmul.bf16.gmra.mxu0 %v1790
        %v1826 = vpop.f32.mrf.mxu0
        %v1827 = vadd.f32 %v1104, %v1826
        %v1828 = vpop.f32.mrf.mxu0
        %1829 = vdwg.mxu0
        %v1830 = vadd.f32 %v1784, %v1801
        %v1831 = vxor.u32 %v1830, 2147483648
        %v1832 = vmul.f32 %v1831, 1.442695
        %v1833 = vpow.pop %v1832
        %v1834 = vadd.f32 %v1833, 1.0
        %v1835 = vrcp.pop %v1834
        %v1836 = vmul.f32 %v1834, %v1835
        %v1837 = vsub.f32 1.0, %v1836
        %v1838 = vmul.f32 %v1835, %v1837
        %v1839 = vadd.f32 %v1835, %v1838
        %vm1840 = vweird.f32 %v1834
        %vm1841 = vweird.f32 %v1835
        %vm1842 = vmor %vm1840, %vm1841
        %v1843 = vsel %vm1842, %v1835, %v1839
        %v1844 = vand.u32 2147483647, %v1834
        %vm1845 = vcmp.eq.f32.partialorder %v1844, 8.507059e+37
        %v1846 = vand.u32 %v1834, 2147483648
        %v1847 = vor.u32 1.1754944e-38, %v1846
        %v1848 = vsel %vm1845, %v1847, %v1843
        %v1849 = vmul.f32 1.0, %v1848
        %v1850 = vadd.f32 %v1785, %v1814
        %v1851 = vxor.u32 %v1850, 2147483648
        %v1852 = vmul.f32 %v1851, 1.442695
        %v1853 = vpow.pop %v1852
        %v1854 = vadd.f32 %v1853, 1.0
        %v1855 = vrcp.pop %v1854
        %v1856 = vmul.f32 %v1854, %v1855
        %v1857 = vsub.f32 1.0, %v1856
        %v1858 = vmul.f32 %v1855, %v1857
        %v1859 = vadd.f32 %v1855, %v1858
        %vm1860 = vweird.f32 %v1854
        %vm1861 = vweird.f32 %v1855
        %vm1862 = vmor %vm1860, %vm1861
        %v1863 = vsel %vm1862, %v1855, %v1859
        %v1864 = vand.u32 2147483647, %v1854
        %vm1865 = vcmp.eq.f32.partialorder %v1864, 8.507059e+37
        %v1866 = vand.u32 %v1854, 2147483648
        %v1867 = vor.u32 1.1754944e-38, %v1866
        %v1868 = vsel %vm1865, %v1867, %v1863
        %v1869 = vmul.f32 1.0, %v1868
        %v1870 = vmul.f32 %v1849, %v1827
        %v1871 = vadd.f32 %v1786, %v1870
        %v1872 = vtanh.pop %v1871
        %v1873 = vsub.f32 %v1789, %v1872
        %v1874 = vmul.f32 %v1869, %v1873
        %v1875 = vadd.f32 %v1872, %v1874
        %v1876 = vsub.f32 %v1875, %v1789
        %1878 = vset.pattern.permute.xlu0 0
        %1879 = vperm.xlu0 %1878, %v1788
        %v1880 = vpop.permute.xlu0 %1879
        %v1882 = vmul.f32 %v1880, %v1876
        %v1883 = vadd.f32 %v1789, %v1882
        %1884 = vst [vmem:[#allocation4] sm:$0xff] %v1883
        %v1885 = vmul.f32 %v1880, %v1875
        %s1886 = scalar_lea.vmem [#allocation3], %s1778
        %1887 = vst [vmem:[%s1886] sm:$0xff] %v1885
        %s1888 = scalar_select %p1086, 1, 6
        %s1889 = smul.u32 %s1888, 8
        %s1890 = sshra.s32 %s1889, 3
        %s1891 = sand.u32 %s1889, 7
        %s1892 = smul.u32 %s1890, 3
        %s1893 = smul.addr %s1892, 8
        %s1894 = scalar_lea.vmem [#allocation2], %s1893
        %v1895 = vld [vmem:[%s1894] sm:$0xff]
        %v1896 = vld [vmem:[%s1894 + $0x8] sm:$0xff]
        %v1897 = vld [vmem:[%s1894 + $0x10] sm:$0xff]
        %s1898 = scalar_lea.vmem %s455, %s1889
        %v1899 = vld [vmem:[%s1898] sm:$0xff]
        %v1900 = vld [vmem:[#allocation4] sm:$0xff]
        %v1901 = vpack.c.bf16 %v1900, %v1900
        %1902 = vmatpush.bf16.msra.mxu0 %v1209
        %1903 = vmatpush.bf16.msra.mxu0 %v1206
        %1904 = vmatpush.bf16.msra.mxu0 %v1203
        %1905 = vmatpush.bf16.msra.mxu0 %v1200
        %1906 = vmatpush.bf16.msra.mxu0 %v1197
        %1907 = vmatpush.bf16.msra.mxu0 %v1194
        %1908 = vmatpush.bf16.msra.mxu0 %v1191
        %1909 = vmatpush.bf16.msra.mxu0 %v1188
        %1910 = vmatmul.bf16.gmra.mxu0 %v1901
        %v1911 = vpop.f32.mrf.mxu0
        %v1912 = vadd.f32 %v1102, %v1911
        %v1913 = vpop.f32.mrf.mxu0
        %1914 = vdwg.mxu0
        %1915 = vmatpush.bf16.msra.mxu0 %v1210
        %1916 = vmatpush.bf16.msra.mxu0 %v1207
        %1917 = vmatpush.bf16.msra.mxu0 %v1204
        %1918 = vmatpush.bf16.msra.mxu0 %v1201
        %1919 = vmatpush.bf16.msra.mxu0 %v1198
        %1920 = vmatpush.bf16.msra.mxu0 %v1195
        %1921 = vmatpush.bf16.msra.mxu0 %v1192
        %1922 = vmatpush.bf16.msra.mxu0 %v1189
        %1923 = vmatmul.bf16.gmra.mxu0 %v1901
        %v1924 = vpop.f32.mrf.mxu0
        %v1925 = vadd.f32 %v1103, %v1924
        %v1926 = vpop.f32.mrf.mxu0
        %1927 = vdwg.mxu0
        %1928 = vmatpush.bf16.msra.mxu0 %v1211
        %1929 = vmatpush.bf16.msra.mxu0 %v1208
        %1930 = vmatpush.bf16.msra.mxu0 %v1205
        %1931 = vmatpush.bf16.msra.mxu0 %v1202
        %1932 = vmatpush.bf16.msra.mxu0 %v1199
        %1933 = vmatpush.bf16.msra.mxu0 %v1196
        %1934 = vmatpush.bf16.msra.mxu0 %v1193
        %1935 = vmatpush.bf16.msra.mxu0 %v1190
        %1936 = vmatmul.bf16.gmra.mxu0 %v1901
        %v1937 = vpop.f32.mrf.mxu0
        %v1938 = vadd.f32 %v1104, %v1937
        %v1939 = vpop.f32.mrf.mxu0
        %1940 = vdwg.mxu0
        %v1941 = vadd.f32 %v1895, %v1912
        %v1942 = vxor.u32 %v1941, 2147483648
        %v1943 = vmul.f32 %v1942, 1.442695
        %v1944 = vpow.pop %v1943
        %v1945 = vadd.f32 %v1944, 1.0
        %v1946 = vrcp.pop %v1945
        %v1947 = vmul.f32 %v1945, %v1946
        %v1948 = vsub.f32 1.0, %v1947
        %v1949 = vmul.f32 %v1946, %v1948
        %v1950 = vadd.f32 %v1946, %v1949
        %vm1951 = vweird.f32 %v1945
        %vm1952 = vweird.f32 %v1946
        %vm1953 = vmor %vm1951, %vm1952
        %v1954 = vsel %vm1953, %v1946, %v1950
        %v1955 = vand.u32 2147483647, %v1945
        %vm1956 = vcmp.eq.f32.partialorder %v1955, 8.507059e+37
        %v1957 = vand.u32 %v1945, 2147483648
        %v1958 = vor.u32 1.1754944e-38, %v1957
        %v1959 = vsel %vm1956, %v1958, %v1954
        %v1960 = vmul.f32 1.0, %v1959
        %v1961 = vadd.f32 %v1896, %v1925
        %v1962 = vxor.u32 %v1961, 2147483648
        %v1963 = vmul.f32 %v1962, 1.442695
        %v1964 = vpow.pop %v1963
        %v1965 = vadd.f32 %v1964, 1.0
        %v1966 = vrcp.pop %v1965
        %v1967 = vmul.f32 %v1965, %v1966
        %v1968 = vsub.f32 1.0, %v1967
        %v1969 = vmul.f32 %v1966, %v1968
        %v1970 = vadd.f32 %v1966, %v1969
        %vm1971 = vweird.f32 %v1965
        %vm1972 = vweird.f32 %v1966
        %vm1973 = vmor %vm1971, %vm1972
        %v1974 = vsel %vm1973, %v1966, %v1970
        %v1975 = vand.u32 2147483647, %v1965
        %vm1976 = vcmp.eq.f32.partialorder %v1975, 8.507059e+37
        %v1977 = vand.u32 %v1965, 2147483648
        %v1978 = vor.u32 1.1754944e-38, %v1977
        %v1979 = vsel %vm1976, %v1978, %v1974
        %v1980 = vmul.f32 1.0, %v1979
        %v1981 = vmul.f32 %v1960, %v1938
        %v1982 = vadd.f32 %v1897, %v1981
        %v1983 = vtanh.pop %v1982
        %v1984 = vsub.f32 %v1900, %v1983
        %v1985 = vmul.f32 %v1980, %v1984
        %v1986 = vadd.f32 %v1983, %v1985
        %v1987 = vsub.f32 %v1986, %v1900
        %1989 = vset.pattern.permute.xlu0 0
        %1990 = vperm.xlu0 %1989, %v1899
        %v1991 = vpop.permute.xlu0 %1990
        %v1993 = vmul.f32 %v1991, %v1987
        %v1994 = vadd.f32 %v1900, %v1993
        %1995 = vst [vmem:[#allocation4] sm:$0xff] %v1994
        %v1996 = vmul.f32 %v1991, %v1986
        %s1997 = scalar_lea.vmem [#allocation3], %s1889
        %1998 = vst [vmem:[%s1997] sm:$0xff] %v1996
        %s1999 = scalar_select %p1086, 0, 7
        %s2000 = smul.u32 %s1999, 8
        %s2001 = sshra.s32 %s2000, 3
        %s2002 = sand.u32 %s2000, 7
        %s2003 = smul.u32 %s2001, 3
        %s2004 = smul.addr %s2003, 8
        %s2005 = scalar_lea.vmem [#allocation2], %s2004
        %v2006 = vld [vmem:[%s2005] sm:$0xff]
        %v2007 = vld [vmem:[%s2005 + $0x8] sm:$0xff]
        %v2008 = vld [vmem:[%s2005 + $0x10] sm:$0xff]
        %s2009 = scalar_lea.vmem %s455, %s2000
        %v2010 = vld [vmem:[%s2009] sm:$0xff]
        %v2011 = vld [vmem:[#allocation4] sm:$0xff]
        %v2012 = vpack.c.bf16 %v2011, %v2011
        %2013 = vmatpush.bf16.msra.mxu0 %v1209
        %2014 = vmatpush.bf16.msra.mxu0 %v1206
        %2015 = vmatpush.bf16.msra.mxu0 %v1203
        %2016 = vmatpush.bf16.msra.mxu0 %v1200
        %2017 = vmatpush.bf16.msra.mxu0 %v1197
        %2018 = vmatpush.bf16.msra.mxu0 %v1194
        %2019 = vmatpush.bf16.msra.mxu0 %v1191
        %2020 = vmatpush.bf16.msra.mxu0 %v1188
        %2021 = vmatmul.bf16.gmra.mxu0 %v2012
        %v2022 = vpop.f32.mrf.mxu0
        %v2023 = vadd.f32 %v1102, %v2022
        %v2024 = vpop.f32.mrf.mxu0
        %2025 = vdwg.mxu0
        %2026 = vmatpush.bf16.msra.mxu0 %v1210
        %2027 = vmatpush.bf16.msra.mxu0 %v1207
        %2028 = vmatpush.bf16.msra.mxu0 %v1204
        %2029 = vmatpush.bf16.msra.mxu0 %v1201
        %2030 = vmatpush.bf16.msra.mxu0 %v1198
        %2031 = vmatpush.bf16.msra.mxu0 %v1195
        %2032 = vmatpush.bf16.msra.mxu0 %v1192
        %2033 = vmatpush.bf16.msra.mxu0 %v1189
        %2034 = vmatmul.bf16.gmra.mxu0 %v2012
        %v2035 = vpop.f32.mrf.mxu0
        %v2036 = vadd.f32 %v1103, %v2035
        %v2037 = vpop.f32.mrf.mxu0
        %2038 = vdwg.mxu0
        %2039 = vmatpush.bf16.msra.mxu0 %v1211
        %2040 = vmatpush.bf16.msra.mxu0 %v1208
        %2041 = vmatpush.bf16.msra.mxu0 %v1205
        %2042 = vmatpush.bf16.msra.mxu0 %v1202
        %2043 = vmatpush.bf16.msra.mxu0 %v1199
        %2044 = vmatpush.bf16.msra.mxu0 %v1196
        %2045 = vmatpush.bf16.msra.mxu0 %v1193
        %2046 = vmatpush.bf16.msra.mxu0 %v1190
        %2047 = vmatmul.bf16.gmra.mxu0 %v2012
        %v2048 = vpop.f32.mrf.mxu0
        %v2049 = vadd.f32 %v1104, %v2048
        %v2050 = vpop.f32.mrf.mxu0
        %2051 = vdwg.mxu0
        %v2052 = vadd.f32 %v2006, %v2023
        %v2053 = vxor.u32 %v2052, 2147483648
        %v2054 = vmul.f32 %v2053, 1.442695
        %v2055 = vpow.pop %v2054
        %v2056 = vadd.f32 %v2055, 1.0
        %v2057 = vrcp.pop %v2056
        %v2058 = vmul.f32 %v2056, %v2057
        %v2059 = vsub.f32 1.0, %v2058
        %v2060 = vmul.f32 %v2057, %v2059
        %v2061 = vadd.f32 %v2057, %v2060
        %vm2062 = vweird.f32 %v2056
        %vm2063 = vweird.f32 %v2057
        %vm2064 = vmor %vm2062, %vm2063
        %v2065 = vsel %vm2064, %v2057, %v2061
        %v2066 = vand.u32 2147483647, %v2056
        %vm2067 = vcmp.eq.f32.partialorder %v2066, 8.507059e+37
        %v2068 = vand.u32 %v2056, 2147483648
        %v2069 = vor.u32 1.1754944e-38, %v2068
        %v2070 = vsel %vm2067, %v2069, %v2065
        %v2071 = vmul.f32 1.0, %v2070
        %v2072 = vadd.f32 %v2007, %v2036
        %v2073 = vxor.u32 %v2072, 2147483648
        %v2074 = vmul.f32 %v2073, 1.442695
        %v2075 = vpow.pop %v2074
        %v2076 = vadd.f32 %v2075, 1.0
        %v2077 = vrcp.pop %v2076
        %v2078 = vmul.f32 %v2076, %v2077
        %v2079 = vsub.f32 1.0, %v2078
        %v2080 = vmul.f32 %v2077, %v2079
        %v2081 = vadd.f32 %v2077, %v2080
        %vm2082 = vweird.f32 %v2076
        %vm2083 = vweird.f32 %v2077
        %vm2084 = vmor %vm2082, %vm2083
        %v2085 = vsel %vm2084, %v2077, %v2081
        %v2086 = vand.u32 2147483647, %v2076
        %vm2087 = vcmp.eq.f32.partialorder %v2086, 8.507059e+37
        %v2088 = vand.u32 %v2076, 2147483648
        %v2089 = vor.u32 1.1754944e-38, %v2088
        %v2090 = vsel %vm2087, %v2089, %v2085
        %v2091 = vmul.f32 1.0, %v2090
        %v2092 = vmul.f32 %v2071, %v2049
        %v2093 = vadd.f32 %v2008, %v2092
        %v2094 = vtanh.pop %v2093
        %v2095 = vsub.f32 %v2011, %v2094
        %v2096 = vmul.f32 %v2091, %v2095
        %v2097 = vadd.f32 %v2094, %v2096
        %v2098 = vsub.f32 %v2097, %v2011
        %2100 = vset.pattern.permute.xlu0 0
        %2101 = vperm.xlu0 %2100, %v2010
        %v2102 = vpop.permute.xlu0 %2101
        %v2104 = vmul.f32 %v2102, %v2098
        %v2105 = vadd.f32 %v2011, %v2104
        %2106 = vst [vmem:[#allocation4] sm:$0xff] %v2105
        %v2107 = vmul.f32 %v2102, %v2097
        %s2108 = scalar_lea.vmem [#allocation3], %s2000
        %2109 = vst [vmem:[%s2108] sm:$0xff] %v2107
        %v2110 = vld [vmem:[#allocation3] sm:$0xff]
        %v2111 = vld [vmem:[#allocation3 + $0x8] sm:$0xff]
        %v2112 = vld [vmem:[#allocation3 + $0x10] sm:$0xff]
        %v2113 = vld [vmem:[#allocation3 + $0x18] sm:$0xff]
        %v2114 = vld [vmem:[#allocation3 + $0x20] sm:$0xff]
        %v2115 = vld [vmem:[#allocation3 + $0x28] sm:$0xff]
        %v2116 = vld [vmem:[#allocation3 + $0x30] sm:$0xff]
        %v2117 = vld [vmem:[#allocation3 + $0x38] sm:$0xff]
        %v2118 = vpack.c.bf16 %v2110, %v2110
        %v2119 = vpack.c.bf16 %v2111, %v2111
        %v2120 = vpack.c.bf16 %v2112, %v2112
        %v2121 = vpack.c.bf16 %v2113, %v2113
        %v2122 = vpack.c.bf16 %v2114, %v2114
        %v2123 = vpack.c.bf16 %v2115, %v2115
        %v2124 = vpack.c.bf16 %v2116, %v2116
        %v2125 = vpack.c.bf16 %v2117, %v2117
        %2126 = vst [vmem:[%s431] sm:$0xf] %v2118
        %2127 = vst [vmem:[%s431 + $0x4] sm:$0xf] %v2119
        %2128 = vst [vmem:[%s431 + $0x8] sm:$0xf] %v2120
        %2129 = vst [vmem:[%s431 + $0xc] sm:$0xf] %v2121
        %2130 = vst [vmem:[%s431 + $0x10] sm:$0xf] %v2122
        %2131 = vst [vmem:[%s431 + $0x14] sm:$0xf] %v2123
        %2132 = vst [vmem:[%s431 + $0x18] sm:$0xf] %v2124
        %2133 = vst [vmem:[%s431 + $0x1c] sm:$0xf] %v2125
        %s2134 = sand.u32 %s225, 1
        %s2135 = sand.u32 %s225, 1
        %s2136 = smul.addr %s2135, 32
        %s2137 = scalar_lea.vmem [#allocation9], %s2136
        // Predicated region
        $region57: #{_bigru_core.4} parent=43 // pred_check
          %p2138 = pneg %p235
        $region58: #{_bigru_core.4} parent=43 // pred_check_branch
          %2140 = sbr.rel (%p2138) target = $region60
        $region59: #{_bigru_core.4} parent=43 // pred_region
          %s2141 = smul.u32 %s28, 2
          %s2142 = ssub.s32 0, %s2141
          %s2143 = smul.u32 %s27, %s2142
          %s2144 = sadd.s32 %s28, %s2143
          %s2145 = smul.u32 8, %s2144
          %s2146 = smul.addr %s2145, 2
          %s2147 = sadd.s32 %s27, %s2146
          %s2148 = smul.addr %s2147, 4
          %s2149 = scalar_lea.vmem %s6, %s2148
          // Predicated region
          $region61: #{_bigru_core.4} parent=59 // pred_check
            _
          $region62: #{_bigru_core.4} parent=59 // pred_check_branch
            %2151 = sbr.rel (0) target = $region64
          $region63: #{_bigru_core.4} parent=59 // pred_region
            // Predicated region
            $region65: #{_bigru_core.4} parent=63 // pred_check
              _
            $region66: #{_bigru_core.4} parent=63 // pred_check_branch
              %2153 = sbr.rel target = $region68
            $region67: #{_bigru_core.4} parent=63 // pred_region
              // Predicated region
              $region80: #{_bigru_core.4} parent=67 // pred_check
                _
              $region81: #{_bigru_core.4} parent=67 // pred_check_branch
                %2183 = sbr.rel (0) target = $region83
              $region82: #{_bigru_core.4} parent=67 // pred_region
                loop: start=0, step=1, limit=1
                $region84: #{_bigru_core.4} parent=82 // loop_pre_header
                  _
                $region85: #{_bigru_core.4} parent=82 // loop_header
                  %s2185 = sphi 0, %s2189
                  %p2186 = scmp.ge.s32.totalorder %s2185, 1
                  %s2190 = sphi %s2137, %s2137
                  %s2191 = sphi %s2149, %s2149
                $region86: #{_bigru_core.4} parent=82 // loop_header_branch
                  %2188 = sbr.rel (%p2186) target = $region90
                $region87: #{_bigru_core.4} parent=82 // loop_body
                  _
                $region88: #{_bigru_core.4} parent=82 // loop_footer
                  %s2189 = sadd.s32 1, %s2185
                $region89: #{_bigru_core.4} parent=82 // loop_footer_branch
                  %2184 = sbr.rel target = $region85
                $region90: #{_bigru_core.4} parent=82 // loop_exit
                  _
                %s2193 = ssub.s32 16, 1
                loop: start=0, step=1, limit=1
                $region91: #{_bigru_core.4} parent=82 // loop_pre_header
                  _
                $region92: #{_bigru_core.4} parent=82 // loop_header
                  %s2195 = sphi 0, %s2199
                  %p2196 = scmp.ge.s32.totalorder %s2195, 1
                  %s2200 = sphi %s2137, %s2137
                  %s2201 = sphi %s2149, %s2149
                $region93: #{_bigru_core.4} parent=82 // loop_header_branch
                  %2198 = sbr.rel (%p2196) target = $region97
                $region94: #{_bigru_core.4} parent=82 // loop_body
                  %v2202 = vld [vmem:[%s2200] sm:%s2193]
                  %2203 = vst [vmem:[%s2201] sm:%s2193] %v2202
                  %v2204 = vld [vmem:[%s2200 + $0x4] sm:%s2193]
                  %2205 = vst [vmem:[%s2201 + $0x8] sm:%s2193] %v2204
                  %v2206 = vld [vmem:[%s2200 + $0x8] sm:%s2193]
                  %2207 = vst [vmem:[%s2201 + $0x10] sm:%s2193] %v2206
                  %v2208 = vld [vmem:[%s2200 + $0xc] sm:%s2193]
                  %2209 = vst [vmem:[%s2201 + $0x18] sm:%s2193] %v2208
                  %v2210 = vld [vmem:[%s2200 + $0x10] sm:%s2193]
                  %2211 = vst [vmem:[%s2201 + $0x20] sm:%s2193] %v2210
                  %v2212 = vld [vmem:[%s2200 + $0x14] sm:%s2193]
                  %2213 = vst [vmem:[%s2201 + $0x28] sm:%s2193] %v2212
                  %v2214 = vld [vmem:[%s2200 + $0x18] sm:%s2193]
                  %2215 = vst [vmem:[%s2201 + $0x30] sm:%s2193] %v2214
                  %v2216 = vld [vmem:[%s2200 + $0x1c] sm:%s2193]
                  %2217 = vst [vmem:[%s2201 + $0x38] sm:%s2193] %v2216
                $region95: #{_bigru_core.4} parent=82 // loop_footer
                  %s2199 = sadd.s32 1, %s2195
                $region96: #{_bigru_core.4} parent=82 // loop_footer_branch
                  %2194 = sbr.rel target = $region92
                $region97: #{_bigru_core.4} parent=82 // loop_exit
                  _
              $region83: #{_bigru_core.4} parent=67 // pred_fallthru
                _
            $region68: #{_bigru_core.4} parent=63 // pred_fallthru
              _
            // Predicated region
            $region69: #{_bigru_core.4} parent=63 // pred_check
              _
            $region70: #{_bigru_core.4} parent=63 // pred_check_branch
              %2155 = sbr.rel (0) target = $region72
            $region71: #{_bigru_core.4} parent=63 // pred_region
              %s2157 = ssub.s32 16, 1
              loop: start=0, step=1, limit=1
              $region73: #{_bigru_core.4} parent=71 // loop_pre_header
                _
              $region74: #{_bigru_core.4} parent=71 // loop_header
                %s2159 = sphi 0, %s2163
                %p2160 = scmp.ge.s32.totalorder %s2159, 1
                %s2164 = sphi %s2137, %s2137
                %s2165 = sphi %s2149, %s2149
              $region75: #{_bigru_core.4} parent=71 // loop_header_branch
                %2162 = sbr.rel (%p2160) target = $region79
              $region76: #{_bigru_core.4} parent=71 // loop_body
                %v2166 = vld [vmem:[%s2164] sm:%s2157]
                %2167 = vst [vmem:[%s2165] sm:%s2157] %v2166
                %v2168 = vld [vmem:[%s2164 + $0x4] sm:%s2157]
                %2169 = vst [vmem:[%s2165 + $0x8] sm:%s2157] %v2168
                %v2170 = vld [vmem:[%s2164 + $0x8] sm:%s2157]
                %2171 = vst [vmem:[%s2165 + $0x10] sm:%s2157] %v2170
                %v2172 = vld [vmem:[%s2164 + $0xc] sm:%s2157]
                %2173 = vst [vmem:[%s2165 + $0x18] sm:%s2157] %v2172
                %v2174 = vld [vmem:[%s2164 + $0x10] sm:%s2157]
                %2175 = vst [vmem:[%s2165 + $0x20] sm:%s2157] %v2174
                %v2176 = vld [vmem:[%s2164 + $0x14] sm:%s2157]
                %2177 = vst [vmem:[%s2165 + $0x28] sm:%s2157] %v2176
                %v2178 = vld [vmem:[%s2164 + $0x18] sm:%s2157]
                %2179 = vst [vmem:[%s2165 + $0x30] sm:%s2157] %v2178
                %v2180 = vld [vmem:[%s2164 + $0x1c] sm:%s2157]
                %2181 = vst [vmem:[%s2165 + $0x38] sm:%s2157] %v2180
              $region77: #{_bigru_core.4} parent=71 // loop_footer
                %s2163 = sadd.s32 1, %s2159
              $region78: #{_bigru_core.4} parent=71 // loop_footer_branch
                %2158 = sbr.rel target = $region74
              $region79: #{_bigru_core.4} parent=71 // loop_exit
                _
            $region72: #{_bigru_core.4} parent=63 // pred_fallthru
              _
          $region64: #{_bigru_core.4} parent=59 // pred_fallthru
            _
          %2218 = vnop
        $region60: #{_bigru_core.4} parent=43 // pred_fallthru
          _
      $region44: #{_bigru_core.4} parent=5 // pred_fallthru
        _
      %p2219 = scmp.le.s32.totalorder 2, %s18
      // Predicated region
      $region98: #{_bigru_core.4} parent=5 // pred_check
        %p2220 = pneg %p2219
      $region99: #{_bigru_core.4} parent=5 // pred_check_branch
        %2222 = sbr.rel (%p2220) target = $region101
      $region100: #{_bigru_core.4} parent=5 // pred_region
        %s2223 = ssub.s32 %s18, 2
        // Predicated region
        $region102: #{_bigru_core.4} parent=100 // pred_check
          %p2224 = pneg %p241
        $region103: #{_bigru_core.4} parent=100 // pred_check_branch
          %2226 = sbr.rel (%p2224) target = $region105
        $region104: #{_bigru_core.4} parent=100 // pred_region
          %s2227 = sand.u32 %s226, 1
          %s2228 = sand.u32 %s226, 1
          %s2229 = smul.addr %s2228, 32
          %s2230 = scalar_lea.vmem [#allocation9], %s2229
        $region105: #{_bigru_core.4} parent=100 // pred_fallthru
          _
      $region101: #{_bigru_core.4} parent=5 // pred_fallthru
        _
    $region6: #{_bigru_core.4} parent=1 // loop_footer
      %s22 = sadd.s32 1, %s18
    $region7: #{_bigru_core.4} parent=1 // loop_footer_branch
      %17 = sbr.rel target = $region3
    $region8: #{_bigru_core.4} parent=1 // loop_exit
      _
    %2231 = vsyncpa [#allocation6], 1
    %s2232 = scalar_lea.sflag [#allocation6], 1
    %2233 = vsyncpa %s2232, 1
    %2234 = vsyncpa [#allocation8], 1
    %s2235 = scalar_lea.sflag [#allocation8], 1
    %2236 = vsyncpa %s2235, 1

</llo_original>
